<compile_context>
chip_gen: v7x
topology: tpu7x:2x2x1
jax: 0.10.0
libtpu: 0.0.40
codegen_flags: <defaults>
</compile_context>

<pallas_src>
import jax
import jax.numpy as jnp
import numpy as np
from jax.experimental import pallas as pl
from jax.experimental.pallas import tpu as pltpu

# ----------------------------- model config (scaled-down) --------------------
B = 2                        # batch
IN_C, IN_H, IN_W = 3, 32, 32
FC_DIM = 64                  # analog of 2048
FV_DIM = 8                   # analog of 128
FPN_DIM = 8                  # analog of 32
NUM_CLASSES = 300            # analog of 8999 (deliberately not lane-aligned)
BASE_DIM = FC_DIM - 4 * FV_DIM           # 32

STAGE_PATCH = [4, 2, 2, 2]               # spatial reductions (/4,/8,/16,/32 analog)
STAGE_IN = [IN_C, 16, 32, 48]
STAGE_OUT = [16, 32, 48, 64]             # feat1..feat4 channels (feat4 == FC_DIM)
FEAT_HW = [8, 4, 2, 1]                   # spatial sizes of FPN levels 0..3

FPN_D = [FPN_DIM * s * s for s in FEAT_HW]       # NHWC-flat widths: 512,128,32,8
BASE_K = FC_DIM * FEAT_HW[3] * FEAT_HW[3]        # 64

CLS_TN = 128                                      # classifier N tile (lane multiple)
NC_PAD = ((NUM_CLASSES + CLS_TN - 1) // CLS_TN) * CLS_TN   # 384

# static map: column of z -> coeff index (z = [base | fv1 | fv2 | fv3 | fv4])
SCALE_IDX = np.concatenate(
    [np.zeros(BASE_DIM, np.int32)]
    + [np.full(FV_DIM, i + 1, np.int32) for i in range(4)])

_VMEM_SPEC = pl.BlockSpec(memory_space=pltpu.MemorySpace.VMEM)


def _whole_spec(a):
    """Full-array block (block == array shape, exempt from (8,128) tiling)."""
    nd = a.ndim
    return pl.BlockSpec(a.shape, lambda *_: (0,) * nd)


# ----------------------------- Pallas kernels ---------------------------------
def _stage_lateral_kernel(x_ref, w1_ref, b1_ref, w2_ref, b2_ref,
                          feat_ref, lat_ref):
    """feat = relu(x @ w1 + b1);  lat = feat @ w2 + b2  (FPN 1x1 lateral, f32 out)."""
    h = jnp.dot(x_ref[...], w1_ref[...], preferred_element_type=jnp.float32)
    h = jnp.maximum(h + b1_ref[...], 0.0)                       # f32 epilogue
    feat_ref[...] = h.astype(feat_ref.dtype)
    lat_ref[...] = jnp.dot(h.astype(w2_ref.dtype), w2_ref[...],
                           preferred_element_type=jnp.float32) + b2_ref[...]


def stage_lateral(cols, w1, b1, w2, b2):
    m = cols.shape[0]
    return pl.pallas_call(
        _stage_lateral_kernel,
        out_shape=(jax.ShapeDtypeStruct((m, w1.shape[1]), jnp.bfloat16),
                   jax.ShapeDtypeStruct((m, w2.shape[1]), jnp.float32)),
        in_specs=[_VMEM_SPEC] * 5,
        out_specs=(_VMEM_SPEC, _VMEM_SPEC),
    )(cols, w1, b1, w2, b2)


def _fpn_kernel(lat0_ref, lat1_ref, lat2_ref, lat3_ref,
                up0_ref, up1_ref, up2_ref,
                m0_ref, m1_ref, m2_ref, m3_ref,
                cb0_ref, cb1_ref, cb2_ref, cb3_ref,
                out0_ref, out1_ref, out2_ref, out3_ref):
    """All 4 FPN levels fused: top-down nearest-upsample (exact f32 0/1-matrix
    gather) + lateral add (f32 chain) + 3x3 smoothing (dense per-level matrix
    on NHWC-flat layout)."""
    def smooth(inner_f32, m_ref, cb_ref, o_ref):
        o_ref[...] = jnp.dot(inner_f32.astype(m_ref.dtype), m_ref[...],
                             preferred_element_type=jnp.float32) + cb_ref[...]

    inner3 = lat3_ref[...]                                       # f32
    smooth(inner3, m3_ref, cb3_ref, out3_ref)
    inner2 = lat2_ref[...] + jnp.dot(inner3, up2_ref[...],
                                     preferred_element_type=jnp.float32)
    smooth(inner2, m2_ref, cb2_ref, out2_ref)
    inner1 = lat1_ref[...] + jnp.dot(inner2, up1_ref[...],
                                     preferred_element_type=jnp.float32)
    smooth(inner1, m1_ref, cb1_ref, out1_ref)
    inner0 = lat0_ref[...] + jnp.dot(inner1, up0_ref[...],
                                     preferred_element_type=jnp.float32)
    smooth(inner0, m0_ref, cb0_ref, out0_ref)


def fpn_fused(lats, up_mats, conv_mats, conv_bs):
    m = lats[0].shape[0]
    return pl.pallas_call(
        _fpn_kernel,
        out_shape=tuple(jax.ShapeDtypeStruct((m, FPN_D[i]), jnp.float32)
                        for i in range(4)),
        in_specs=[_VMEM_SPEC] * 15,
        out_specs=tuple([_VMEM_SPEC] * 4),
    )(lats[0], lats[1], lats[2], lats[3],
      up_mats[0], up_mats[1], up_mats[2],
      conv_mats[0], conv_mats[1], conv_mats[2], conv_mats[3],
      conv_bs[0], conv_bs[1], conv_bs[2], conv_bs[3])


def _head_cls_kernel(xb_ref, x0_ref, x1_ref, x2_ref, x3_ref,
                     wb_ref, w0_ref, w1_ref, w2_ref, w3_ref,
                     bb_ref, b0_ref, b1_ref, b2_ref, b3_ref,
                     s_ref, wc_ref, o_ref, z_ref):
    """5 segmented head matmuls -> z scratch -> coeff scale -> classifier tile.

    z is recomputed per classifier N-tile (inputs are VMEM-resident via
    constant index maps), keeping the grid axis safe for "parallel" sharding
    across v7x's two TensorCores; the recompute is negligible at M=batch."""
    segs = ((xb_ref, wb_ref, bb_ref, 0, BASE_DIM),
            (x0_ref, w0_ref, b0_ref, BASE_DIM, FV_DIM),
            (x1_ref, w1_ref, b1_ref, BASE_DIM + FV_DIM, FV_DIM),
            (x2_ref, w2_ref, b2_ref, BASE_DIM + 2 * FV_DIM, FV_DIM),
            (x3_ref, w3_ref, b3_ref, BASE_DIM + 3 * FV_DIM, FV_DIM))
    for x_ref, w_ref, b_ref, c0, width in segs:
        z_ref[:, c0:c0 + width] = (
            jnp.dot(x_ref[...].astype(w_ref.dtype), w_ref[...],
                    preferred_element_type=jnp.float32) + b_ref[...])
    z = (z_ref[...] * s_ref[...]).astype(wc_ref.dtype)           # coeff scale, f32
    o_ref[...] = jnp.dot(z, wc_ref[...], preferred_element_type=jnp.float32)


def head_classifier(xb, outs, wb, bb, wf, bf, scale, wc):
    m = xb.shape[0]
    n_tiles = NC_PAD // CLS_TN
    whole_args = [xb, outs[0], outs[1], outs[2], outs[3],
                  wb, wf[0], wf[1], wf[2], wf[3],
                  bb, bf[0], bf[1], bf[2], bf[3], scale]
    in_specs = ([_whole_spec(a) for a in whole_args]
                + [pl.BlockSpec((FC_DIM, CLS_TN), lambda n: (0, n))])
    grid_spec = pltpu.PrefetchScalarGridSpec(
        num_scalar_prefetch=0,
        grid=(n_tiles,),
        in_specs=in_specs,
        out_specs=pl.BlockSpec((m, CLS_TN), lambda n: (0, n)),
        scratch_shapes=[pltpu.VMEM((m, FC_DIM), jnp.float32)],
    )
    return pl.pallas_call(
        _head_cls_kernel,
        out_shape=jax.ShapeDtypeStruct((m, NC_PAD), jnp.float32),
        grid_spec=grid_spec,
        compiler_params=pltpu.CompilerParams(
            dimension_semantics=("parallel",)),
    )(*whole_args, wc)


# ----------------------------- glue helpers (plain JAX) -----------------------
def patchify(x, p):
    """Non-overlapping p x p patches: (B,H,W,C) -> (B*(H//p)*(W//p), p*p*C)."""
    b, h, w, c = x.shape
    x = x.reshape(b, h // p, p, w // p, p, c)
    x = x.transpose(0, 1, 3, 2, 4, 5)
    return x.reshape(b * (h // p) * (w // p), p * p * c)


# ----------------------------- structured FPN matrices ------------------------
def _conv3x3_as_matrix(w9, h, w_, c):
    """Dense M with flatten_nhwc(conv3x3_pad1(x)) == flatten_nhwc(x) @ M."""
    m = np.zeros((h * w_ * c, h * w_ * c), np.float32)
    for y in range(h):
        for x in range(w_):
            dst = (y * w_ + x) * c
            for ky in range(3):
                for kx in range(3):
                    yy, xx = y + ky - 1, x + kx - 1
                    if 0 <= yy < h and 0 <= xx < w_:
                        src = (yy * w_ + xx) * c
                        m[src:src + c, dst:dst + c] += w9[ky, kx]
    return m


def _upsample2x_as_matrix(h2, w2, c):
    """Exact 0/1 matrix for 2x nearest upsample on NHWC-flat vectors."""
    h, w_ = 2 * h2, 2 * w2
    m = np.zeros((h2 * w2 * c, h * w_ * c), np.float32)
    eye = np.eye(c, dtype=np.float32)
    for y in range(h):
        for x in range(w_):
            src = ((y // 2) * w2 + (x // 2)) * c
            dst = (y * w_ + x) * c
            m[src:src + c, dst:dst + c] = eye
    return m


# ----------------------------- parameters (deterministic) --------------------
def _dense(key, fan_in, fan_out):
    kw, kb = jax.random.split(key)
    w = jax.random.normal(kw, (fan_in, fan_out), jnp.float32) / jnp.sqrt(float(fan_in))
    b = 0.01 * jax.random.normal(kb, (fan_out,), jnp.float32)
    return w, b


def init_params(key):
    keys = jax.random.split(key, 24)
    ki = iter(keys)
    p = {}

    # backbone stand-in stages + FPN 1x1 lateral weights (fused per stage)
    p["stage_w"], p["stage_b"], p["lat_w"], p["lat_b"] = [], [], [], []
    for i in range(4):
        w, bb = _dense(next(ki), STAGE_IN[i] * STAGE_PATCH[i] ** 2, STAGE_OUT[i])
        p["stage_w"].append(w.astype(jnp.bfloat16))
        p["stage_b"].append(bb.reshape(1, -1))
    for i in range(4):
        w, bb = _dense(next(ki), STAGE_OUT[i], FPN_DIM)
        p["lat_w"].append(w.astype(jnp.bfloat16))
        p["lat_b"].append(bb.reshape(1, -1))

    # FPN 3x3 smoothing convs folded into per-level dense matrices (bf16) and
    # tiled biases (f32); exact f32 0/1 nearest-upsample matrices.
    p["fpn_conv_m"], p["fpn_conv_b"] = [], []
    for i in range(4):
        kw, kb = jax.random.split(next(ki))
        w9 = np.asarray(jax.random.normal(kw, (3, 3, FPN_DIM, FPN_DIM),
                                          jnp.float32)) / np.sqrt(9.0 * FPN_DIM)
        bb = np.asarray(0.01 * jax.random.normal(kb, (FPN_DIM,), jnp.float32))
        s = FEAT_HW[i]
        p["fpn_conv_m"].append(
            jnp.asarray(_conv3x3_as_matrix(w9, s, s, FPN_DIM), dtype=jnp.bfloat16))
        p["fpn_conv_b"].append(jnp.asarray(np.tile(bb, s * s)).reshape(1, -1))
    p["fpn_up"] = [
        jnp.asarray(_upsample2x_as_matrix(FEAT_HW[i + 1], FEAT_HW[i + 1], FPN_DIM))
        for i in range(3)]

    # base_fc + 4 fv_fc heads (rows stored in NHWC-flatten order: one-time
    # permutation of the torch CHW-order rows; random stand-in here).
    w, bb = _dense(next(ki), BASE_K, BASE_DIM)
    p["head_wb"] = w.astype(jnp.bfloat16)
    p["head_bb"] = bb.reshape(1, -1)
    p["head_wf"], p["head_bf"] = [], []
    for i in range(4):
        w, bb = _dense(next(ki), FPN_D[i], FV_DIM)
        p["head_wf"].append(w.astype(jnp.bfloat16))
        p["head_bf"].append(bb.reshape(1, -1))

    # bias-free classifier, columns padded to a lane multiple (sliced outside)
    w = jax.random.normal(next(ki), (FC_DIM, NUM_CLASSES), jnp.float32)
    w = w / jnp.sqrt(float(FC_DIM))
    wpad = jnp.zeros((FC_DIM, NC_PAD), jnp.float32).at[:, :NUM_CLASSES].set(w)
    p["cls_w"] = wpad.astype(jnp.bfloat16)
    p["coeffs"] = jnp.ones((5,), jnp.float32)
    return p


# ----------------------------- forward ----------------------------------------
def forward(params, x_nchw):
    x = jnp.transpose(x_nchw, (0, 2, 3, 1)).astype(jnp.bfloat16)   # NCHW -> NHWC
    b = x.shape[0]

    # backbone stand-in: 4 strided patch-projection stages + ReLU, each fused
    # with its FPN 1x1 lateral conv.  Laterals come out f32 (keeps the FPN
    # top-down add chain in f32) already in NHWC-flat row order.
    h = x
    lats = []
    feat = None
    for i in range(4):
        pp = STAGE_PATCH[i]
        hs, ws = h.shape[1] // pp, h.shape[2] // pp
        cols = patchify(h, pp)                                  # (B*hs*ws, p*p*Cin)
        feat, lat = stage_lateral(cols,
                                  params["stage_w"][i], params["stage_b"][i],
                                  params["lat_w"][i], params["lat_b"][i])
        h = feat.reshape(b, hs, ws, STAGE_OUT[i])
        lats.append(lat.reshape(b, hs * ws * FPN_DIM))          # free row-major reshape

    feat4_flat = feat.reshape(b, -1)                            # (B, HW*FC_DIM) NHWC-flat

    # FPN: all 4 levels (upsample + lateral add + 3x3 smooth) in one call.
    outs = fpn_fused(lats, params["fpn_up"], params["fpn_conv_m"],
                     params["fpn_conv_b"])

    # fused base_fc + fv heads (segmented dots, no padding) + coeff scale +
    # N-tiled, parallel classifier.
    scale = params["coeffs"][SCALE_IDX].reshape(1, FC_DIM)
    logits = head_classifier(feat4_flat, outs,
                             params["head_wb"], params["head_bb"],
                             params["head_wf"], params["head_bf"],
                             scale, params["cls_w"])
    return logits[:, :NUM_CLASSES]


# ----------------------------- main -------------------------------------------
if __name__ == "__main__":
    key = jax.random.PRNGKey(0)
    kx, kp = jax.random.split(key)
    x = jax.random.normal(kx, (B, IN_C, IN_H, IN_W), jnp.float32)
    params = init_params(kp)

    out = jax.jit(forward)(params, x)
    out = jax.block_until_ready(out)
    assert out.shape == (B, NUM_CLASSES), out.shape
    assert jnp.all(jnp.isfinite(out))
    print("KERNEL_OK")
</pallas_src>

<mosaic_0001>
module attributes {stable_mosaic.version = 11 : i64} {
  func.func @_stage_lateral_kernel(%arg0: memref<128x48xbf16, #tpu.memory_space<vmem>>, %arg1: memref<48x16xbf16, #tpu.memory_space<vmem>>, %arg2: memref<1x16xf32, #tpu.memory_space<vmem>>, %arg3: memref<16x8xbf16, #tpu.memory_space<vmem>>, %arg4: memref<1x8xf32, #tpu.memory_space<vmem>>, %arg5: memref<128x16xbf16, #tpu.memory_space<vmem>>, %arg6: memref<128x8xf32, #tpu.memory_space<vmem>>) attributes {dimension_semantics = [], scalar_prefetch = 0 : i64, scratch_operands = 0 : i64, tpu.core_type = #tpu.core_type<tc>} {
    %c0 = arith.constant 0 : index
    %c0_0 = arith.constant 0 : index
    %0 = vector.load %arg0[%c0, %c0_0] : memref<128x48xbf16, #tpu.memory_space<vmem>>, vector<128x48xbf16>
    %c0_1 = arith.constant 0 : index
    %c0_2 = arith.constant 0 : index
    %1 = vector.load %arg1[%c0_1, %c0_2] : memref<48x16xbf16, #tpu.memory_space<vmem>>, vector<48x16xbf16>
    %cst = arith.constant dense<0.000000e+00> : vector<128x16xf32>
    %2 = tpu.matmul %0, %1, %cst {dimension_numbers = #tpu.dot_dimension_numbers<[1], [0], [0], [1], [0, 0, 1, 1], [], []>} : vector<128x48xbf16>, vector<48x16xbf16>, vector<128x16xf32> -> vector<128x16xf32>
    %c0_3 = arith.constant 0 : index
    %c0_4 = arith.constant 0 : index
    %3 = vector.load %arg2[%c0_3, %c0_4] : memref<1x16xf32, #tpu.memory_space<vmem>>, vector<1x16xf32>
    %4 = vector.broadcast %3 : vector<1x16xf32> to vector<128x16xf32>
    %5 = arith.addf %2, %4 : vector<128x16xf32>
    %cst_5 = arith.constant 0.000000e+00 : f32
    %6 = vector.broadcast %cst_5 : f32 to vector<128x16xf32>
    %7 = arith.maximumf %5, %6 : vector<128x16xf32>
    %8 = arith.truncf %7 : vector<128x16xf32> to vector<128x16xbf16>
    %c0_6 = arith.constant 0 : index
    %c0_7 = arith.constant 0 : index
    %9 = vector.load %arg5[%c0_6, %c0_7] : memref<128x16xbf16, #tpu.memory_space<vmem>>, vector<128x16xbf16>
    tpu.vector_store %arg5[%c0_6, %c0_7], %8 {strides = array<i32>} : memref<128x16xbf16, #tpu.memory_space<vmem>>, vector<128x16xbf16>,
    %10 = arith.truncf %7 : vector<128x16xf32> to vector<128x16xbf16>
    %c0_8 = arith.constant 0 : index
    %c0_9 = arith.constant 0 : index
    %11 = vector.load %arg3[%c0_8, %c0_9] : memref<16x8xbf16, #tpu.memory_space<vmem>>, vector<16x8xbf16>
    %cst_10 = arith.constant dense<0.000000e+00> : vector<128x8xf32>
    %12 = tpu.matmul %10, %11, %cst_10 {dimension_numbers = #tpu.dot_dimension_numbers<[1], [0], [0], [1], [0, 0, 1, 1], [], []>} : vector<128x16xbf16>, vector<16x8xbf16>, vector<128x8xf32> -> vector<128x8xf32>
    %c0_11 = arith.constant 0 : index
    %c0_12 = arith.constant 0 : index
    %13 = vector.load %arg4[%c0_11, %c0_12] : memref<1x8xf32, #tpu.memory_space<vmem>>, vector<1x8xf32>
    %14 = vector.broadcast %13 : vector<1x8xf32> to vector<128x8xf32>
    %15 = arith.addf %12, %14 : vector<128x8xf32>
    %c0_13 = arith.constant 0 : index
    %c0_14 = arith.constant 0 : index
    %16 = vector.load %arg6[%c0_13, %c0_14] : memref<128x8xf32, #tpu.memory_space<vmem>>, vector<128x8xf32>
    tpu.vector_store %arg6[%c0_13, %c0_14], %15 {strides = array<i32>} : memref<128x8xf32, #tpu.memory_space<vmem>>, vector<128x8xf32>,
    return
  }
}

module attributes {stable_mosaic.version = 11 : i64} {
  func.func @_stage_lateral_kernel(%arg0: memref<32x64xbf16, #tpu.memory_space<vmem>>, %arg1: memref<64x32xbf16, #tpu.memory_space<vmem>>, %arg2: memref<1x32xf32, #tpu.memory_space<vmem>>, %arg3: memref<32x8xbf16, #tpu.memory_space<vmem>>, %arg4: memref<1x8xf32, #tpu.memory_space<vmem>>, %arg5: memref<32x32xbf16, #tpu.memory_space<vmem>>, %arg6: memref<32x8xf32, #tpu.memory_space<vmem>>) attributes {dimension_semantics = [], scalar_prefetch = 0 : i64, scratch_operands = 0 : i64, tpu.core_type = #tpu.core_type<tc>} {
    %c0 = arith.constant 0 : index
    %c0_0 = arith.constant 0 : index
    %0 = vector.load %arg0[%c0, %c0_0] : memref<32x64xbf16, #tpu.memory_space<vmem>>, vector<32x64xbf16>
    %c0_1 = arith.constant 0 : index
    %c0_2 = arith.constant 0 : index
    %1 = vector.load %arg1[%c0_1, %c0_2] : memref<64x32xbf16, #tpu.memory_space<vmem>>, vector<64x32xbf16>
    %cst = arith.constant dense<0.000000e+00> : vector<32x32xf32>
    %2 = tpu.matmul %0, %1, %cst {dimension_numbers = #tpu.dot_dimension_numbers<[1], [0], [0], [1], [0, 0, 1, 1], [], []>} : vector<32x64xbf16>, vector<64x32xbf16>, vector<32x32xf32> -> vector<32x32xf32>
    %c0_3 = arith.constant 0 : index
    %c0_4 = arith.constant 0 : index
    %3 = vector.load %arg2[%c0_3, %c0_4] : memref<1x32xf32, #tpu.memory_space<vmem>>, vector<1x32xf32>
    %4 = vector.broadcast %3 : vector<1x32xf32> to vector<32x32xf32>
    %5 = arith.addf %2, %4 : vector<32x32xf32>
    %cst_5 = arith.constant 0.000000e+00 : f32
    %6 = vector.broadcast %cst_5 : f32 to vector<32x32xf32>
    %7 = arith.maximumf %5, %6 : vector<32x32xf32>
    %8 = arith.truncf %7 : vector<32x32xf32> to vector<32x32xbf16>
    %c0_6 = arith.constant 0 : index
    %c0_7 = arith.constant 0 : index
    %9 = vector.load %arg5[%c0_6, %c0_7] : memref<32x32xbf16, #tpu.memory_space<vmem>>, vector<32x32xbf16>
    tpu.vector_store %arg5[%c0_6, %c0_7], %8 {strides = array<i32>} : memref<32x32xbf16, #tpu.memory_space<vmem>>, vector<32x32xbf16>,
    %10 = arith.truncf %7 : vector<32x32xf32> to vector<32x32xbf16>
    %c0_8 = arith.constant 0 : index
    %c0_9 = arith.constant 0 : index
    %11 = vector.load %arg3[%c0_8, %c0_9] : memref<32x8xbf16, #tpu.memory_space<vmem>>, vector<32x8xbf16>
    %cst_10 = arith.constant dense<0.000000e+00> : vector<32x8xf32>
    %12 = tpu.matmul %10, %11, %cst_10 {dimension_numbers = #tpu.dot_dimension_numbers<[1], [0], [0], [1], [0, 0, 1, 1], [], []>} : vector<32x32xbf16>, vector<32x8xbf16>, vector<32x8xf32> -> vector<32x8xf32>
    %c0_11 = arith.constant 0 : index
    %c0_12 = arith.constant 0 : index
    %13 = vector.load %arg4[%c0_11, %c0_12] : memref<1x8xf32, #tpu.memory_space<vmem>>, vector<1x8xf32>
    %14 = vector.broadcast %13 : vector<1x8xf32> to vector<32x8xf32>
    %15 = arith.addf %12, %14 : vector<32x8xf32>
    %c0_13 = arith.constant 0 : index
    %c0_14 = arith.constant 0 : index
    %16 = vector.load %arg6[%c0_13, %c0_14] : memref<32x8xf32, #tpu.memory_space<vmem>>, vector<32x8xf32>
    tpu.vector_store %arg6[%c0_13, %c0_14], %15 {strides = array<i32>} : memref<32x8xf32, #tpu.memory_space<vmem>>, vector<32x8xf32>,
    return
  }
}

module attributes {stable_mosaic.version = 11 : i64} {
  func.func @_stage_lateral_kernel(%arg0: memref<8x128xbf16, #tpu.memory_space<vmem>>, %arg1: memref<128x48xbf16, #tpu.memory_space<vmem>>, %arg2: memref<1x48xf32, #tpu.memory_space<vmem>>, %arg3: memref<48x8xbf16, #tpu.memory_space<vmem>>, %arg4: memref<1x8xf32, #tpu.memory_space<vmem>>, %arg5: memref<8x48xbf16, #tpu.memory_space<vmem>>, %arg6: memref<8x8xf32, #tpu.memory_space<vmem>>) attributes {dimension_semantics = [], scalar_prefetch = 0 : i64, scratch_operands = 0 : i64, tpu.core_type = #tpu.core_type<tc>} {
    %c0 = arith.constant 0 : index
    %c0_0 = arith.constant 0 : index
    %0 = vector.load %arg0[%c0, %c0_0] : memref<8x128xbf16, #tpu.memory_space<vmem>>, vector<8x128xbf16>
    %c0_1 = arith.constant 0 : index
    %c0_2 = arith.constant 0 : index
    %1 = vector.load %arg1[%c0_1, %c0_2] : memref<128x48xbf16, #tpu.memory_space<vmem>>, vector<128x48xbf16>
    %cst = arith.constant dense<0.000000e+00> : vector<8x48xf32>
    %2 = tpu.matmul %0, %1, %cst {dimension_numbers = #tpu.dot_dimension_numbers<[1], [0], [0], [1], [0, 0, 1, 1], [], []>} : vector<8x128xbf16>, vector<128x48xbf16>, vector<8x48xf32> -> vector<8x48xf32>
    %c0_3 = arith.constant 0 : index
    %c0_4 = arith.constant 0 : index
    %3 = vector.load %arg2[%c0_3, %c0_4] : memref<1x48xf32, #tpu.memory_space<vmem>>, vector<1x48xf32>
    %4 = vector.broadcast %3 : vector<1x48xf32> to vector<8x48xf32>
    %5 = arith.addf %2, %4 : vector<8x48xf32>
    %cst_5 = arith.constant 0.000000e+00 : f32
    %6 = vector.broadcast %cst_5 : f32 to vector<8x48xf32>
    %7 = arith.maximumf %5, %6 : vector<8x48xf32>
    %8 = arith.truncf %7 : vector<8x48xf32> to vector<8x48xbf16>
    %c0_6 = arith.constant 0 : index
    %c0_7 = arith.constant 0 : index
    %9 = vector.load %arg5[%c0_6, %c0_7] : memref<8x48xbf16, #tpu.memory_space<vmem>>, vector<8x48xbf16>
    tpu.vector_store %arg5[%c0_6, %c0_7], %8 {strides = array<i32>} : memref<8x48xbf16, #tpu.memory_space<vmem>>, vector<8x48xbf16>,
    %10 = arith.truncf %7 : vector<8x48xf32> to vector<8x48xbf16>
    %c0_8 = arith.constant 0 : index
    %c0_9 = arith.constant 0 : index
    %11 = vector.load %arg3[%c0_8, %c0_9] : memref<48x8xbf16, #tpu.memory_space<vmem>>, vector<48x8xbf16>
    %cst_10 = arith.constant dense<0.000000e+00> : vector<8x8xf32>
    %12 = tpu.matmul %10, %11, %cst_10 {dimension_numbers = #tpu.dot_dimension_numbers<[1], [0], [0], [1], [0, 0, 1, 1], [], []>} : vector<8x48xbf16>, vector<48x8xbf16>, vector<8x8xf32> -> vector<8x8xf32>
    %c0_11 = arith.constant 0 : index
    %c0_12 = arith.constant 0 : index
    %13 = vector.load %arg4[%c0_11, %c0_12] : memref<1x8xf32, #tpu.memory_space<vmem>>, vector<1x8xf32>
    %14 = vector.broadcast %13 : vector<1x8xf32> to vector<8x8xf32>
    %15 = arith.addf %12, %14 : vector<8x8xf32>
    %c0_13 = arith.constant 0 : index
    %c0_14 = arith.constant 0 : index
    %16 = vector.load %arg6[%c0_13, %c0_14] : memref<8x8xf32, #tpu.memory_space<vmem>>, vector<8x8xf32>
    tpu.vector_store %arg6[%c0_13, %c0_14], %15 {strides = array<i32>} : memref<8x8xf32, #tpu.memory_space<vmem>>, vector<8x8xf32>,
    return
  }
}

module attributes {stable_mosaic.version = 11 : i64} {
  func.func @_stage_lateral_kernel(%arg0: memref<2x192xbf16, #tpu.memory_space<vmem>>, %arg1: memref<192x64xbf16, #tpu.memory_space<vmem>>, %arg2: memref<1x64xf32, #tpu.memory_space<vmem>>, %arg3: memref<64x8xbf16, #tpu.memory_space<vmem>>, %arg4: memref<1x8xf32, #tpu.memory_space<vmem>>, %arg5: memref<2x64xbf16, #tpu.memory_space<vmem>>, %arg6: memref<2x8xf32, #tpu.memory_space<vmem>>) attributes {dimension_semantics = [], scalar_prefetch = 0 : i64, scratch_operands = 0 : i64, tpu.core_type = #tpu.core_type<tc>} {
    %c0 = arith.constant 0 : index
    %c0_0 = arith.constant 0 : index
    %0 = vector.load %arg0[%c0, %c0_0] : memref<2x192xbf16, #tpu.memory_space<vmem>>, vector<2x192xbf16>
    %c0_1 = arith.constant 0 : index
    %c0_2 = arith.constant 0 : index
    %1 = vector.load %arg1[%c0_1, %c0_2] : memref<192x64xbf16, #tpu.memory_space<vmem>>, vector<192x64xbf16>
    %cst = arith.constant dense<0.000000e+00> : vector<2x64xf32>
    %2 = tpu.matmul %0, %1, %cst {dimension_numbers = #tpu.dot_dimension_numbers<[1], [0], [0], [1], [0, 0, 1, 1], [], []>} : vector<2x192xbf16>, vector<192x64xbf16>, vector<2x64xf32> -> vector<2x64xf32>
    %c0_3 = arith.constant 0 : index
    %c0_4 = arith.constant 0 : index
    %3 = vector.load %arg2[%c0_3, %c0_4] : memref<1x64xf32, #tpu.memory_space<vmem>>, vector<1x64xf32>
    %4 = vector.broadcast %3 : vector<1x64xf32> to vector<2x64xf32>
    %5 = arith.addf %2, %4 : vector<2x64xf32>
    %cst_5 = arith.constant 0.000000e+00 : f32
    %6 = vector.broadcast %cst_5 : f32 to vector<2x64xf32>
    %7 = arith.maximumf %5, %6 : vector<2x64xf32>
    %8 = arith.truncf %7 : vector<2x64xf32> to vector<2x64xbf16>
    %c0_6 = arith.constant 0 : index
    %c0_7 = arith.constant 0 : index
    %9 = vector.load %arg5[%c0_6, %c0_7] : memref<2x64xbf16, #tpu.memory_space<vmem>>, vector<2x64xbf16>
    tpu.vector_store %arg5[%c0_6, %c0_7], %8 {strides = array<i32>} : memref<2x64xbf16, #tpu.memory_space<vmem>>, vector<2x64xbf16>,
    %10 = arith.truncf %7 : vector<2x64xf32> to vector<2x64xbf16>
    %c0_8 = arith.constant 0 : index
    %c0_9 = arith.constant 0 : index
    %11 = vector.load %arg3[%c0_8, %c0_9] : memref<64x8xbf16, #tpu.memory_space<vmem>>, vector<64x8xbf16>
    %cst_10 = arith.constant dense<0.000000e+00> : vector<2x8xf32>
    %12 = tpu.matmul %10, %11, %cst_10 {dimension_numbers = #tpu.dot_dimension_numbers<[1], [0], [0], [1], [0, 0, 1, 1], [], []>} : vector<2x64xbf16>, vector<64x8xbf16>, vector<2x8xf32> -> vector<2x8xf32>
    %c0_11 = arith.constant 0 : index
    %c0_12 = arith.constant 0 : index
    %13 = vector.load %arg4[%c0_11, %c0_12] : memref<1x8xf32, #tpu.memory_space<vmem>>, vector<1x8xf32>
    %14 = vector.broadcast %13 : vector<1x8xf32> to vector<2x8xf32>
    %15 = arith.addf %12, %14 : vector<2x8xf32>
    %c0_13 = arith.constant 0 : index
    %c0_14 = arith.constant 0 : index
    %16 = vector.load %arg6[%c0_13, %c0_14] : memref<2x8xf32, #tpu.memory_space<vmem>>, vector<2x8xf32>
    tpu.vector_store %arg6[%c0_13, %c0_14], %15 {strides = array<i32>} : memref<2x8xf32, #tpu.memory_space<vmem>>, vector<2x8xf32>,
    return
  }
}

module attributes {stable_mosaic.version = 11 : i64} {
  func.func @_fpn_kernel(%arg0: memref<2x512xf32, #tpu.memory_space<vmem>>, %arg1: memref<2x128xf32, #tpu.memory_space<vmem>>, %arg2: memref<2x32xf32, #tpu.memory_space<vmem>>, %arg3: memref<2x8xf32, #tpu.memory_space<vmem>>, %arg4: memref<128x512xf32, #tpu.memory_space<vmem>>, %arg5: memref<32x128xf32, #tpu.memory_space<vmem>>, %arg6: memref<8x32xf32, #tpu.memory_space<vmem>>, %arg7: memref<512x512xbf16, #tpu.memory_space<vmem>>, %arg8: memref<128x128xbf16, #tpu.memory_space<vmem>>, %arg9: memref<32x32xbf16, #tpu.memory_space<vmem>>, %arg10: memref<8x8xbf16, #tpu.memory_space<vmem>>, %arg11: memref<1x512xf32, #tpu.memory_space<vmem>>, %arg12: memref<1x128xf32, #tpu.memory_space<vmem>>, %arg13: memref<1x32xf32, #tpu.memory_space<vmem>>, %arg14: memref<1x8xf32, #tpu.memory_space<vmem>>, %arg15: memref<2x512xf32, #tpu.memory_space<vmem>>, %arg16: memref<2x128xf32, #tpu.memory_space<vmem>>, %arg17: memref<2x32xf32, #tpu.memory_space<vmem>>, %arg18: memref<2x8xf32, #tpu.memory_space<vmem>>) attributes {dimension_semantics = [], scalar_prefetch = 0 : i64, scratch_operands = 0 : i64, tpu.core_type = #tpu.core_type<tc>} {
    %c0 = arith.constant 0 : index
    %c0_0 = arith.constant 0 : index
    %0 = vector.load %arg3[%c0, %c0_0] : memref<2x8xf32, #tpu.memory_space<vmem>>, vector<2x8xf32>
    %1 = arith.truncf %0 : vector<2x8xf32> to vector<2x8xbf16>
    %c0_1 = arith.constant 0 : index
    %c0_2 = arith.constant 0 : index
    %2 = vector.load %arg10[%c0_1, %c0_2] : memref<8x8xbf16, #tpu.memory_space<vmem>>, vector<8x8xbf16>
    %cst = arith.constant dense<0.000000e+00> : vector<2x8xf32>
    %3 = tpu.matmul %1, %2, %cst {dimension_numbers = #tpu.dot_dimension_numbers<[1], [0], [0], [1], [0, 0, 1, 1], [], []>} : vector<2x8xbf16>, vector<8x8xbf16>, vector<2x8xf32> -> vector<2x8xf32>
    %c0_3 = arith.constant 0 : index
    %c0_4 = arith.constant 0 : index
    %4 = vector.load %arg14[%c0_3, %c0_4] : memref<1x8xf32, #tpu.memory_space<vmem>>, vector<1x8xf32>
    %5 = vector.broadcast %4 : vector<1x8xf32> to vector<2x8xf32>
    %6 = arith.addf %3, %5 : vector<2x8xf32>
    %c0_5 = arith.constant 0 : index
    %c0_6 = arith.constant 0 : index
    %7 = vector.load %arg18[%c0_5, %c0_6] : memref<2x8xf32, #tpu.memory_space<vmem>>, vector<2x8xf32>
    tpu.vector_store %arg18[%c0_5, %c0_6], %6 {strides = array<i32>} : memref<2x8xf32, #tpu.memory_space<vmem>>, vector<2x8xf32>,
    %c0_7 = arith.constant 0 : index
    %c0_8 = arith.constant 0 : index
    %8 = vector.load %arg2[%c0_7, %c0_8] : memref<2x32xf32, #tpu.memory_space<vmem>>, vector<2x32xf32>
    %c0_9 = arith.constant 0 : index
    %c0_10 = arith.constant 0 : index
    %9 = vector.load %arg6[%c0_9, %c0_10] : memref<8x32xf32, #tpu.memory_space<vmem>>, vector<8x32xf32>
    %cst_11 = arith.constant dense<0.000000e+00> : vector<2x32xf32>
    %10 = tpu.matmul %0, %9, %cst_11 {dimension_numbers = #tpu.dot_dimension_numbers<[1], [0], [0], [1], [0, 0, 1, 1], [], []>} : vector<2x8xf32>, vector<8x32xf32>, vector<2x32xf32> -> vector<2x32xf32>
    %11 = arith.addf %8, %10 : vector<2x32xf32>
    %12 = arith.truncf %11 : vector<2x32xf32> to vector<2x32xbf16>
    %c0_12 = arith.constant 0 : index
    %c0_13 = arith.constant 0 : index
    %13 = vector.load %arg9[%c0_12, %c0_13] : memref<32x32xbf16, #tpu.memory_space<vmem>>, vector<32x32xbf16>
    %cst_14 = arith.constant dense<0.000000e+00> : vector<2x32xf32>
    %14 = tpu.matmul %12, %13, %cst_14 {dimension_numbers = #tpu.dot_dimension_numbers<[1], [0], [0], [1], [0, 0, 1, 1], [], []>} : vector<2x32xbf16>, vector<32x32xbf16>, vector<2x32xf32> -> vector<2x32xf32>
    %c0_15 = arith.constant 0 : index
    %c0_16 = arith.constant 0 : index
    %15 = vector.load %arg13[%c0_15, %c0_16] : memref<1x32xf32, #tpu.memory_space<vmem>>, vector<1x32xf32>
    %16 = vector.broadcast %15 : vector<1x32xf32> to vector<2x32xf32>
    %17 = arith.addf %14, %16 : vector<2x32xf32>
    %c0_17 = arith.constant 0 : index
    %c0_18 = arith.constant 0 : index
    %18 = vector.load %arg17[%c0_17, %c0_18] : memref<2x32xf32, #tpu.memory_space<vmem>>, vector<2x32xf32>
    tpu.vector_store %arg17[%c0_17, %c0_18], %17 {strides = array<i32>} : memref<2x32xf32, #tpu.memory_space<vmem>>, vector<2x32xf32>,
    %c0_19 = arith.constant 0 : index
    %c0_20 = arith.constant 0 : index
    %19 = vector.load %arg1[%c0_19, %c0_20] : memref<2x128xf32, #tpu.memory_space<vmem>>, vector<2x128xf32>
    %c0_21 = arith.constant 0 : index
    %c0_22 = arith.constant 0 : index
    %20 = vector.load %arg5[%c0_21, %c0_22] : memref<32x128xf32, #tpu.memory_space<vmem>>, vector<32x128xf32>
    %cst_23 = arith.constant dense<0.000000e+00> : vector<2x128xf32>
    %21 = tpu.matmul %11, %20, %cst_23 {dimension_numbers = #tpu.dot_dimension_numbers<[1], [0], [0], [1], [0, 0, 1, 1], [], []>} : vector<2x32xf32>, vector<32x128xf32>, vector<2x128xf32> -> vector<2x128xf32>
    %22 = arith.addf %19, %21 : vector<2x128xf32>
    %23 = arith.truncf %22 : vector<2x128xf32> to vector<2x128xbf16>
    %c0_24 = arith.constant 0 : index
    %c0_25 = arith.constant 0 : index
    %24 = vector.load %arg8[%c0_24, %c0_25] : memref<128x128xbf16, #tpu.memory_space<vmem>>, vector<128x128xbf16>
    %cst_26 = arith.constant dense<0.000000e+00> : vector<2x128xf32>
    %25 = tpu.matmul %23, %24, %cst_26 {dimension_numbers = #tpu.dot_dimension_numbers<[1], [0], [0], [1], [0, 0, 1, 1], [], []>} : vector<2x128xbf16>, vector<128x128xbf16>, vector<2x128xf32> -> vector<2x128xf32>
    %c0_27 = arith.constant 0 : index
    %c0_28 = arith.constant 0 : index
    %26 = vector.load %arg12[%c0_27, %c0_28] : memref<1x128xf32, #tpu.memory_space<vmem>>, vector<1x128xf32>
    %27 = vector.broadcast %26 : vector<1x128xf32> to vector<2x128xf32>
    %28 = arith.addf %25, %27 : vector<2x128xf32>
    %c0_29 = arith.constant 0 : index
    %c0_30 = arith.constant 0 : index
    %29 = vector.load %arg16[%c0_29, %c0_30] : memref<2x128xf32, #tpu.memory_space<vmem>>, vector<2x128xf32>
    tpu.vector_store %arg16[%c0_29, %c0_30], %28 {strides = array<i32>} : memref<2x128xf32, #tpu.memory_space<vmem>>, vector<2x128xf32>,
    %c0_31 = arith.constant 0 : index
    %c0_32 = arith.constant 0 : index
    %30 = vector.load %arg0[%c0_31, %c0_32] : memref<2x512xf32, #tpu.memory_space<vmem>>, vector<2x512xf32>
    %c0_33 = arith.constant 0 : index
    %c0_34 = arith.constant 0 : index
    %31 = vector.load %arg4[%c0_33, %c0_34] : memref<128x512xf32, #tpu.memory_space<vmem>>, vector<128x512xf32>
    %cst_35 = arith.constant dense<0.000000e+00> : vector<2x512xf32>
    %32 = tpu.matmul %22, %31, %cst_35 {dimension_numbers = #tpu.dot_dimension_numbers<[1], [0], [0], [1], [0, 0, 1, 1], [], []>} : vector<2x128xf32>, vector<128x512xf32>, vector<2x512xf32> -> vector<2x512xf32>
    %33 = arith.addf %30, %32 : vector<2x512xf32>
    %34 = arith.truncf %33 : vector<2x512xf32> to vector<2x512xbf16>
    %c0_36 = arith.constant 0 : index
    %c0_37 = arith.constant 0 : index
    %35 = vector.load %arg7[%c0_36, %c0_37] : memref<512x512xbf16, #tpu.memory_space<vmem>>, vector<512x512xbf16>
    %cst_38 = arith.constant dense<0.000000e+00> : vector<2x512xf32>
    %36 = tpu.matmul %34, %35, %cst_38 {dimension_numbers = #tpu.dot_dimension_numbers<[1], [0], [0], [1], [0, 0, 1, 1], [], []>} : vector<2x512xbf16>, vector<512x512xbf16>, vector<2x512xf32> -> vector<2x512xf32>
    %c0_39 = arith.constant 0 : index
    %c0_40 = arith.constant 0 : index
    %37 = vector.load %arg11[%c0_39, %c0_40] : memref<1x512xf32, #tpu.memory_space<vmem>>, vector<1x512xf32>
    %38 = vector.broadcast %37 : vector<1x512xf32> to vector<2x512xf32>
    %39 = arith.addf %36, %38 : vector<2x512xf32>
    %c0_41 = arith.constant 0 : index
    %c0_42 = arith.constant 0 : index
    %40 = vector.load %arg15[%c0_41, %c0_42] : memref<2x512xf32, #tpu.memory_space<vmem>>, vector<2x512xf32>
    tpu.vector_store %arg15[%c0_41, %c0_42], %39 {strides = array<i32>} : memref<2x512xf32, #tpu.memory_space<vmem>>, vector<2x512xf32>,
    return
  }
}

module attributes {stable_mosaic.version = 11 : i64} {
  func.func @_head_cls_kernel(%arg0: i32, %arg1: memref<2x64xbf16, #tpu.memory_space<vmem>>, %arg2: memref<2x512xf32, #tpu.memory_space<vmem>>, %arg3: memref<2x128xf32, #tpu.memory_space<vmem>>, %arg4: memref<2x32xf32, #tpu.memory_space<vmem>>, %arg5: memref<2x8xf32, #tpu.memory_space<vmem>>, %arg6: memref<64x32xbf16, #tpu.memory_space<vmem>>, %arg7: memref<512x8xbf16, #tpu.memory_space<vmem>>, %arg8: memref<128x8xbf16, #tpu.memory_space<vmem>>, %arg9: memref<32x8xbf16, #tpu.memory_space<vmem>>, %arg10: memref<8x8xbf16, #tpu.memory_space<vmem>>, %arg11: memref<1x32xf32, #tpu.memory_space<vmem>>, %arg12: memref<1x8xf32, #tpu.memory_space<vmem>>, %arg13: memref<1x8xf32, #tpu.memory_space<vmem>>, %arg14: memref<1x8xf32, #tpu.memory_space<vmem>>, %arg15: memref<1x8xf32, #tpu.memory_space<vmem>>, %arg16: memref<1x64xf32, #tpu.memory_space<vmem>>, %arg17: memref<64x128xbf16, #tpu.memory_space<vmem>>, %arg18: memref<2x128xf32, #tpu.memory_space<vmem>>, %arg19: memref<2x64xf32, #tpu.memory_space<vmem>>) attributes {dimension_semantics = [#tpu.dimension_semantics<parallel>], iteration_bounds = array<i64: 3>, scalar_prefetch = 0 : i64, scratch_operands = 1 : i64, tpu.core_type = #tpu.core_type<tc>, window_params = [{pipeline_mode = #tpu.pipeline_mode<synchronous>, transform_indices = @transform_0, window_bounds = array<i64: 2, 64>}, {pipeline_mode = #tpu.pipeline_mode<synchronous>, transform_indices = @transform_1, window_bounds = array<i64: 2, 512>}, {pipeline_mode = #tpu.pipeline_mode<synchronous>, transform_indices = @transform_2, window_bounds = array<i64: 2, 128>}, {pipeline_mode = #tpu.pipeline_mode<synchronous>, transform_indices = @transform_3, window_bounds = array<i64: 2, 32>}, {pipeline_mode = #tpu.pipeline_mode<synchronous>, transform_indices = @transform_4, window_bounds = array<i64: 2, 8>}, {pipeline_mode = #tpu.pipeline_mode<synchronous>, transform_indices = @transform_5, window_bounds = array<i64: 64, 32>}, {pipeline_mode = #tpu.pipeline_mode<synchronous>, transform_indices = @transform_6, window_bounds = array<i64: 512, 8>}, {pipeline_mode = #tpu.pipeline_mode<synchronous>, transform_indices = @transform_7, window_bounds = array<i64: 128, 8>}, {pipeline_mode = #tpu.pipeline_mode<synchronous>, transform_indices = @transform_8, window_bounds = array<i64: 32, 8>}, {pipeline_mode = #tpu.pipeline_mode<synchronous>, transform_indices = @transform_9, window_bounds = array<i64: 8, 8>}, {pipeline_mode = #tpu.pipeline_mode<synchronous>, transform_indices = @transform_10, window_bounds = array<i64: 1, 32>}, {pipeline_mode = #tpu.pipeline_mode<synchronous>, transform_indices = @transform_11, window_bounds = array<i64: 1, 8>}, {pipeline_mode = #tpu.pipeline_mode<synchronous>, transform_indices = @transform_12, window_bounds = array<i64: 1, 8>}, {pipeline_mode = #tpu.pipeline_mode<synchronous>, transform_indices = @transform_13, window_bounds = array<i64: 1, 8>}, {pipeline_mode = #tpu.pipeline_mode<synchronous>, transform_indices = @transform_14, window_bounds = array<i64: 1, 8>}, {pipeline_mode = #tpu.pipeline_mode<synchronous>, transform_indices = @transform_15, window_bounds = array<i64: 1, 64>}, {transform_indices = @transform_16, window_bounds = array<i64: 64, 128>}, {transform_indices = @transform_17, window_bounds = array<i64: 2, 128>}]} {
    %c0 = arith.constant 0 : index
    %c0_0 = arith.constant 0 : index
    %0 = vector.load %arg1[%c0, %c0_0] : memref<2x64xbf16, #tpu.memory_space<vmem>>, vector<2x64xbf16>
    %c0_1 = arith.constant 0 : index
    %c0_2 = arith.constant 0 : index
    %1 = vector.load %arg6[%c0_1, %c0_2] : memref<64x32xbf16, #tpu.memory_space<vmem>>, vector<64x32xbf16>
    %cst = arith.constant dense<0.000000e+00> : vector<2x32xf32>
    %2 = tpu.matmul %0, %1, %cst {dimension_numbers = #tpu.dot_dimension_numbers<[1], [0], [0], [1], [0, 0, 1, 1], [], []>} : vector<2x64xbf16>, vector<64x32xbf16>, vector<2x32xf32> -> vector<2x32xf32>
    %c0_3 = arith.constant 0 : index
    %c0_4 = arith.constant 0 : index
    %3 = vector.load %arg11[%c0_3, %c0_4] : memref<1x32xf32, #tpu.memory_space<vmem>>, vector<1x32xf32>
    %4 = vector.broadcast %3 : vector<1x32xf32> to vector<2x32xf32>
    %5 = arith.addf %2, %4 : vector<2x32xf32>
    %c0_5 = arith.constant 0 : index
    %c0_6 = arith.constant 0 : index
    %6 = vector.load %arg19[%c0_5, %c0_6] : memref<2x64xf32, #tpu.memory_space<vmem>>, vector<2x32xf32>
    tpu.vector_store %arg19[%c0_5, %c0_6], %5 {strides = array<i32>} : memref<2x64xf32, #tpu.memory_space<vmem>>, vector<2x32xf32>,
    %c0_7 = arith.constant 0 : index
    %c0_8 = arith.constant 0 : index
    %7 = vector.load %arg2[%c0_7, %c0_8] : memref<2x512xf32, #tpu.memory_space<vmem>>, vector<2x512xf32>
    %8 = arith.truncf %7 : vector<2x512xf32> to vector<2x512xbf16>
    %c0_9 = arith.constant 0 : index
    %c0_10 = arith.constant 0 : index
    %9 = vector.load %arg7[%c0_9, %c0_10] : memref<512x8xbf16, #tpu.memory_space<vmem>>, vector<512x8xbf16>
    %cst_11 = arith.constant dense<0.000000e+00> : vector<2x8xf32>
    %10 = tpu.matmul %8, %9, %cst_11 {dimension_numbers = #tpu.dot_dimension_numbers<[1], [0], [0], [1], [0, 0, 1, 1], [], []>} : vector<2x512xbf16>, vector<512x8xbf16>, vector<2x8xf32> -> vector<2x8xf32>
    %c0_12 = arith.constant 0 : index
    %c0_13 = arith.constant 0 : index
    %11 = vector.load %arg12[%c0_12, %c0_13] : memref<1x8xf32, #tpu.memory_space<vmem>>, vector<1x8xf32>
    %12 = vector.broadcast %11 : vector<1x8xf32> to vector<2x8xf32>
    %13 = arith.addf %10, %12 : vector<2x8xf32>
    %c0_14 = arith.constant 0 : index
    %c32 = arith.constant 32 : index
    %14 = vector.load %arg19[%c0_14, %c32] : memref<2x64xf32, #tpu.memory_space<vmem>>, vector<2x8xf32>
    tpu.vector_store %arg19[%c0_14, %c32], %13 {strides = array<i32>} : memref<2x64xf32, #tpu.memory_space<vmem>>, vector<2x8xf32>,
    %c0_15 = arith.constant 0 : index
    %c0_16 = arith.constant 0 : index
    %15 = vector.load %arg3[%c0_15, %c0_16] : memref<2x128xf32, #tpu.memory_space<vmem>>, vector<2x128xf32>
    %16 = arith.truncf %15 : vector<2x128xf32> to vector<2x128xbf16>
    %c0_17 = arith.constant 0 : index
    %c0_18 = arith.constant 0 : index
    %17 = vector.load %arg8[%c0_17, %c0_18] : memref<128x8xbf16, #tpu.memory_space<vmem>>, vector<128x8xbf16>
    %cst_19 = arith.constant dense<0.000000e+00> : vector<2x8xf32>
    %18 = tpu.matmul %16, %17, %cst_19 {dimension_numbers = #tpu.dot_dimension_numbers<[1], [0], [0], [1], [0, 0, 1, 1], [], []>} : vector<2x128xbf16>, vector<128x8xbf16>, vector<2x8xf32> -> vector<2x8xf32>
    %c0_20 = arith.constant 0 : index
    %c0_21 = arith.constant 0 : index
    %19 = vector.load %arg13[%c0_20, %c0_21] : memref<1x8xf32, #tpu.memory_space<vmem>>, vector<1x8xf32>
    %20 = vector.broadcast %19 : vector<1x8xf32> to vector<2x8xf32>
    %21 = arith.addf %18, %20 : vector<2x8xf32>
    %c0_22 = arith.constant 0 : index
    %c40 = arith.constant 40 : index
    %22 = vector.load %arg19[%c0_22, %c40] : memref<2x64xf32, #tpu.memory_space<vmem>>, vector<2x8xf32>
    tpu.vector_store %arg19[%c0_22, %c40], %21 {strides = array<i32>} : memref<2x64xf32, #tpu.memory_space<vmem>>, vector<2x8xf32>,
    %c0_23 = arith.constant 0 : index
    %c0_24 = arith.constant 0 : index
    %23 = vector.load %arg4[%c0_23, %c0_24] : memref<2x32xf32, #tpu.memory_space<vmem>>, vector<2x32xf32>
    %24 = arith.truncf %23 : vector<2x32xf32> to vector<2x32xbf16>
    %c0_25 = arith.constant 0 : index
    %c0_26 = arith.constant 0 : index
    %25 = vector.load %arg9[%c0_25, %c0_26] : memref<32x8xbf16, #tpu.memory_space<vmem>>, vector<32x8xbf16>
    %cst_27 = arith.constant dense<0.000000e+00> : vector<2x8xf32>
    %26 = tpu.matmul %24, %25, %cst_27 {dimension_numbers = #tpu.dot_dimension_numbers<[1], [0], [0], [1], [0, 0, 1, 1], [], []>} : vector<2x32xbf16>, vector<32x8xbf16>, vector<2x8xf32> -> vector<2x8xf32>
    %c0_28 = arith.constant 0 : index
    %c0_29 = arith.constant 0 : index
    %27 = vector.load %arg14[%c0_28, %c0_29] : memref<1x8xf32, #tpu.memory_space<vmem>>, vector<1x8xf32>
    %28 = vector.broadcast %27 : vector<1x8xf32> to vector<2x8xf32>
    %29 = arith.addf %26, %28 : vector<2x8xf32>
    %c0_30 = arith.constant 0 : index
    %c48 = arith.constant 48 : index
    %30 = vector.load %arg19[%c0_30, %c48] : memref<2x64xf32, #tpu.memory_space<vmem>>, vector<2x8xf32>
    tpu.vector_store %arg19[%c0_30, %c48], %29 {strides = array<i32>} : memref<2x64xf32, #tpu.memory_space<vmem>>, vector<2x8xf32>,
    %c0_31 = arith.constant 0 : index
    %c0_32 = arith.constant 0 : index
    %31 = vector.load %arg5[%c0_31, %c0_32] : memref<2x8xf32, #tpu.memory_space<vmem>>, vector<2x8xf32>
    %32 = arith.truncf %31 : vector<2x8xf32> to vector<2x8xbf16>
    %c0_33 = arith.constant 0 : index
    %c0_34 = arith.constant 0 : index
    %33 = vector.load %arg10[%c0_33, %c0_34] : memref<8x8xbf16, #tpu.memory_space<vmem>>, vector<8x8xbf16>
    %cst_35 = arith.constant dense<0.000000e+00> : vector<2x8xf32>
    %34 = tpu.matmul %32, %33, %cst_35 {dimension_numbers = #tpu.dot_dimension_numbers<[1], [0], [0], [1], [0, 0, 1, 1], [], []>} : vector<2x8xbf16>, vector<8x8xbf16>, vector<2x8xf32> -> vector<2x8xf32>
    %c0_36 = arith.constant 0 : index
    %c0_37 = arith.constant 0 : index
    %35 = vector.load %arg15[%c0_36, %c0_37] : memref<1x8xf32, #tpu.memory_space<vmem>>, vector<1x8xf32>
    %36 = vector.broadcast %35 : vector<1x8xf32> to vector<2x8xf32>
    %37 = arith.addf %34, %36 : vector<2x8xf32>
    %c0_38 = arith.constant 0 : index
    %c56 = arith.constant 56 : index
    %38 = vector.load %arg19[%c0_38, %c56] : memref<2x64xf32, #tpu.memory_space<vmem>>, vector<2x8xf32>
    tpu.vector_store %arg19[%c0_38, %c56], %37 {strides = array<i32>} : memref<2x64xf32, #tpu.memory_space<vmem>>, vector<2x8xf32>,
    %c0_39 = arith.constant 0 : index
    %c0_40 = arith.constant 0 : index
    %39 = vector.load %arg19[%c0_39, %c0_40] : memref<2x64xf32, #tpu.memory_space<vmem>>, vector<2x64xf32>
    %c0_41 = arith.constant 0 : index
    %c0_42 = arith.constant 0 : index
    %40 = vector.load %arg16[%c0_41, %c0_42] : memref<1x64xf32, #tpu.memory_space<vmem>>, vector<1x64xf32>
    %41 = vector.broadcast %40 : vector<1x64xf32> to vector<2x64xf32>
    %42 = arith.mulf %39, %41 : vector<2x64xf32>
    %43 = arith.truncf %42 : vector<2x64xf32> to vector<2x64xbf16>
    %c0_43 = arith.constant 0 : index
    %c0_44 = arith.constant 0 : index
    %44 = vector.load %arg17[%c0_43, %c0_44] : memref<64x128xbf16, #tpu.memory_space<vmem>>, vector<64x128xbf16>
    %cst_45 = arith.constant dense<0.000000e+00> : vector<2x128xf32>
    %45 = tpu.matmul %43, %44, %cst_45 {dimension_numbers = #tpu.dot_dimension_numbers<[1], [0], [0], [1], [0, 0, 1, 1], [], []>} : vector<2x64xbf16>, vector<64x128xbf16>, vector<2x128xf32> -> vector<2x128xf32>
    %c0_46 = arith.constant 0 : index
    %c0_47 = arith.constant 0 : index
    %46 = vector.load %arg18[%c0_46, %c0_47] : memref<2x128xf32, #tpu.memory_space<vmem>>, vector<2x128xf32>
    tpu.vector_store %arg18[%c0_46, %c0_47], %45 {strides = array<i32>} : memref<2x128xf32, #tpu.memory_space<vmem>>, vector<2x128xf32>,
    return
  }
  func.func @transform_0(%arg0: i32) -> (i32, i32) {
    %c0_i32 = arith.constant 0 : i32
    %c0_i32_0 = arith.constant 0 : i32
    %c0_i32_1 = arith.constant 0 : i32
    return %c0_i32, %c0_i32_0 : i32, i32
  }
  func.func @transform_1(%arg0: i32) -> (i32, i32) {
    %c0_i32 = arith.constant 0 : i32
    %c0_i32_0 = arith.constant 0 : i32
    %c0_i32_1 = arith.constant 0 : i32
    return %c0_i32, %c0_i32_0 : i32, i32
  }
  func.func @transform_2(%arg0: i32) -> (i32, i32) {
    %c0_i32 = arith.constant 0 : i32
    %c0_i32_0 = arith.constant 0 : i32
    %c0_i32_1 = arith.constant 0 : i32
    return %c0_i32, %c0_i32_0 : i32, i32
  }
  func.func @transform_3(%arg0: i32) -> (i32, i32) {
    %c0_i32 = arith.constant 0 : i32
    %c0_i32_0 = arith.constant 0 : i32
    %c0_i32_1 = arith.constant 0 : i32
    return %c0_i32, %c0_i32_0 : i32, i32
  }
  func.func @transform_4(%arg0: i32) -> (i32, i32) {
    %c0_i32 = arith.constant 0 : i32
    %c0_i32_0 = arith.constant 0 : i32
    %c0_i32_1 = arith.constant 0 : i32
    return %c0_i32, %c0_i32_0 : i32, i32
  }
  func.func @transform_5(%arg0: i32) -> (i32, i32) {
    %c0_i32 = arith.constant 0 : i32
    %c0_i32_0 = arith.constant 0 : i32
    %c0_i32_1 = arith.constant 0 : i32
    return %c0_i32, %c0_i32_0 : i32, i32
  }
  func.func @transform_6(%arg0: i32) -> (i32, i32) {
    %c0_i32 = arith.constant 0 : i32
    %c0_i32_0 = arith.constant 0 : i32
    %c0_i32_1 = arith.constant 0 : i32
    return %c0_i32, %c0_i32_0 : i32, i32
  }
  func.func @transform_7(%arg0: i32) -> (i32, i32) {
    %c0_i32 = arith.constant 0 : i32
    %c0_i32_0 = arith.constant 0 : i32
    %c0_i32_1 = arith.constant 0 : i32
    return %c0_i32, %c0_i32_0 : i32, i32
  }
  func.func @transform_8(%arg0: i32) -> (i32, i32) {
    %c0_i32 = arith.constant 0 : i32
    %c0_i32_0 = arith.constant 0 : i32
    %c0_i32_1 = arith.constant 0 : i32
    return %c0_i32, %c0_i32_0 : i32, i32
  }
  func.func @transform_9(%arg0: i32) -> (i32, i32) {
    %c0_i32 = arith.constant 0 : i32
    %c0_i32_0 = arith.constant 0 : i32
    %c0_i32_1 = arith.constant 0 : i32
    return %c0_i32, %c0_i32_0 : i32, i32
  }
  func.func @transform_10(%arg0: i32) -> (i32, i32) {
    %c0_i32 = arith.constant 0 : i32
    %c0_i32_0 = arith.constant 0 : i32
    %c0_i32_1 = arith.constant 0 : i32
    return %c0_i32, %c0_i32_0 : i32, i32
  }
  func.func @transform_11(%arg0: i32) -> (i32, i32) {
    %c0_i32 = arith.constant 0 : i32
    %c0_i32_0 = arith.constant 0 : i32
    %c0_i32_1 = arith.constant 0 : i32
    return %c0_i32, %c0_i32_0 : i32, i32
  }
  func.func @transform_12(%arg0: i32) -> (i32, i32) {
    %c0_i32 = arith.constant 0 : i32
    %c0_i32_0 = arith.constant 0 : i32
    %c0_i32_1 = arith.constant 0 : i32
    return %c0_i32, %c0_i32_0 : i32, i32
  }
  func.func @transform_13(%arg0: i32) -> (i32, i32) {
    %c0_i32 = arith.constant 0 : i32
    %c0_i32_0 = arith.constant 0 : i32
    %c0_i32_1 = arith.constant 0 : i32
    return %c0_i32, %c0_i32_0 : i32, i32
  }
  func.func @transform_14(%arg0: i32) -> (i32, i32) {
    %c0_i32 = arith.constant 0 : i32
    %c0_i32_0 = arith.constant 0 : i32
    %c0_i32_1 = arith.constant 0 : i32
    return %c0_i32, %c0_i32_0 : i32, i32
  }
  func.func @transform_15(%arg0: i32) -> (i32, i32) {
    %c0_i32 = arith.constant 0 : i32
    %c0_i32_0 = arith.constant 0 : i32
    %c0_i32_1 = arith.constant 0 : i32
    return %c0_i32, %c0_i32_0 : i32, i32
  }
  func.func @transform_16(%arg0: i32) -> (i32, i32) {
    %c0_i32 = arith.constant 0 : i32
    %c0_i32_0 = arith.constant 0 : i32
    return %c0_i32, %arg0 : i32, i32
  }
  func.func @transform_17(%arg0: i32) -> (i32, i32) {
    %c0_i32 = arith.constant 0 : i32
    %c0_i32_0 = arith.constant 0 : i32
    return %c0_i32, %arg0 : i32, i32
  }
}

</mosaic_0001>

<llo_original>
// kernel: forward.7
$region0: #{forward.7}
  #allocation0 [shape = 'u32[]', space=smem, size = 0x4, offset = 0x4, fixed_abs, tag = 'smem constant byte address 0x4 - core index']
  #allocation1 [shape = 'u32[144,128]{1,0:T(1,128)}', space=vmem, size = 0x12000, scoped, tag = 'internal scratch']
  %s0 = inlined_call_operand.vmem [shape: bf16[32,64], index: 0, kind: input, shape index: {}]
  %s1 = inlined_call_operand.vmem [shape: bf16[64,32], index: 1, kind: input, shape index: {}]
  %s2 = inlined_call_operand.vmem [shape: f32[1,32], index: 2, kind: input, shape index: {}]
  %s3 = inlined_call_operand.vmem [shape: bf16[32,8], index: 3, kind: input, shape index: {}]
  %s4 = inlined_call_operand.vmem [shape: f32[1,8], index: 4, kind: input, shape index: {}]
  %s5 = inlined_call_operand.vmem [shape: bf16[32,32], index: 5, kind: output, shape index: {0}]
  %s6 = inlined_call_operand.vmem [shape: f32[32,8], index: 6, kind: output, shape index: {1}]
  %7 = xla_tuple %s5, %s6
  %s8 = sld [smem:[#allocation0]]
  $region38: #{forward.7} parent=0
    _
  %s10 = ssub.s32 1, %s8
  %s11 = scalar_select 0, %s10, %s8
  // Predicated region
  $region2: #{forward.7} parent=0 // pred_check
    _
  $region3: #{forward.7} parent=0 // pred_check_branch
    %13 = sbr.rel (0) target = $region5
  $region4: #{forward.7} parent=0 // pred_region
    _
  $region5: #{forward.7} parent=0 // pred_fallthru
    _
  // Predicated region
  $region6: #{forward.7} parent=0 // pred_check
    _
  $region7: #{forward.7} parent=0 // pred_check_branch
    %15 = sbr.rel (0) target = $region9
  $region8: #{forward.7} parent=0 // pred_region
    _
  $region9: #{forward.7} parent=0 // pred_fallthru
    _
  // Predicated region
  $region10: #{forward.7} parent=0 // pred_check
    _
  $region11: #{forward.7} parent=0 // pred_check_branch
    %17 = sbr.rel (0) target = $region13
  $region12: #{forward.7} parent=0 // pred_region
    _
  $region13: #{forward.7} parent=0 // pred_fallthru
    _
  // Predicated region
  $region14: #{forward.7} parent=0 // pred_check
    _
  $region15: #{forward.7} parent=0 // pred_check_branch
    %19 = sbr.rel (0) target = $region17
  $region16: #{forward.7} parent=0 // pred_region
    _
  $region17: #{forward.7} parent=0 // pred_fallthru
    _
  // Predicated region
  $region18: #{forward.7} parent=0 // pred_check
    _
  $region19: #{forward.7} parent=0 // pred_check_branch
    %21 = sbr.rel (0) target = $region21
  $region20: #{forward.7} parent=0 // pred_region
    _
  $region21: #{forward.7} parent=0 // pred_fallthru
    _
  %v23 = vld [vmem:[%s0] sm:$0xf]
  %v24 = vld [vmem:[%s0 + $0x4] sm:$0xf]
  %v25 = vld [vmem:[%s0 + $0x8] sm:$0xf]
  %v26 = vld [vmem:[%s0 + $0xc] sm:$0xf]
  %v27 = vld [vmem:[%s1] sm:$0xf]
  %v28 = vld [vmem:[%s1 + $0x4] sm:$0xf]
  %v29 = vld [vmem:[%s1 + $0x8] sm:$0xf]
  %v30 = vld [vmem:[%s1 + $0xc] sm:$0xf]
  %v31 = vld [vmem:[%s1 + $0x10] sm:$0xf]
  %v32 = vld [vmem:[%s1 + $0x14] sm:$0xf]
  %v33 = vld [vmem:[%s1 + $0x18] sm:$0xf]
  %v34 = vld [vmem:[%s1 + $0x1c] sm:$0xf]
  %v35 = vld [vmem:[%s2] sm:$0x1]
  %v37 = vlaneseq
  %v38 = vshrl.u32 %v37, 7
  %v39 = vsub.s32 0, %v38
  %v40 = vrot.slane %v35, %v39
  %v46 = vunpack.c.l.b16 %v23
  %v47 = vunpack.c.l.b16 %v24
  %v48 = vunpack.c.l.b16 %v25
  %v49 = vunpack.c.l.b16 %v26
  %v50 = vpack.c.b16 %v47, %v46
  %v51 = vpack.c.b16 %v49, %v48
  %v60 = vunpack.c.l.b16 %v27
  %v61 = vunpack.c.l.b16 %v28
  %v62 = vunpack.c.l.b16 %v29
  %v63 = vunpack.c.l.b16 %v30
  %v64 = vunpack.c.l.b16 %v31
  %v65 = vunpack.c.l.b16 %v32
  %v66 = vunpack.c.l.b16 %v33
  %v67 = vunpack.c.l.b16 %v34
  %v68 = vpack.c.b16 %v61, %v60
  %v69 = vpack.c.b16 %v63, %v62
  %v70 = vpack.c.b16 %v65, %v64
  %v71 = vpack.c.b16 %v67, %v66
  %vm76 = vcmask 523264
  %v78 = vsel %vm76, %v50, 0
  %v81 = vsel %vm76, %v51, 0
  %83 = vmatprep.subr.bf16.mxu0 0
  %84 = vmatpush1.bf16.msra.mxu0 %v68
  %85 = vmatprep.subr.bf16.mxu0 0
  %86 = vmatpush1.bf16.msra.mxu0 %v69
  %87 = vmatprep.subr.bf16.mxu0 0
  %88 = vmatpush1.bf16.msra.mxu0 %v70
  %89 = vmatprep.subr.bf16.mxu0 0
  %90 = vmatpush1.bf16.msra.mxu0 %v71
  %91 = vmatprep.subr.bf16.mxu0 0
  %92 = vmatpush1.bf16.msra.mxu0 0
  %93 = vmatprep.subr.bf16.mxu0 0
  %94 = vmatpush1.bf16.msra.mxu0 0
  %95 = vmatprep.subr.bf16.mxu0 0
  %96 = vmatpush1.bf16.msra.mxu0 0
  %97 = vmatprep.subr.bf16.mxu0 0
  %98 = vmatpush1.bf16.msra.mxu0 0
  %99 = vmatprep.subr.bf16.mxu0 0
  %100 = vmatpush1.bf16.msra.mxu0 0
  %101 = vmatprep.subr.bf16.mxu0 0
  %102 = vmatpush1.bf16.msra.mxu0 0
  %103 = vmatprep.subr.bf16.mxu0 0
  %104 = vmatpush1.bf16.msra.mxu0 0
  %105 = vmatprep.subr.bf16.mxu0 0
  %106 = vmatpush1.bf16.msra.mxu0 0
  %107 = vmatprep.subr.bf16.mxu0 0
  %108 = vmatpush1.bf16.msra.mxu0 0
  %109 = vmatprep.subr.bf16.mxu0 0
  %110 = vmatpush1.bf16.msra.mxu0 0
  %111 = vmatprep.subr.bf16.mxu0 0
  %112 = vmatpush1.bf16.msra.mxu0 0
  %113 = vmatprep.subr.bf16.mxu0 0
  %114 = vmatpush1.bf16.msra.mxu0 0
  %115 = vmatprep.mubr.bf16.mxu0 0
  %116 = vmatmul.mubr.bf16.gmra.mrb[0].mxu0 %v78
  %v117 = vpop.f32.mrb[0].mxu0
  %v118 = vadd.f32 %v40, %v117
  %v119 = vpop.f32.mrb[0].mxu0
  %v120 = vpop.f32.mrb[0].mxu0
  %v121 = vadd.f32 %v40, %v120
  %v122 = vpop.f32.mrb[0].mxu0
  %123 = vmatprep.mubr.bf16.mxu0 0
  %124 = vmatmul.mubr.bf16.gmra.mrb[0].mxu0 %v81
  %v125 = vpop.f32.mrb[0].mxu0
  %v126 = vadd.f32 %v40, %v125
  %v127 = vpop.f32.mrb[0].mxu0
  %v128 = vpop.f32.mrb[0].mxu0
  %v129 = vadd.f32 %v40, %v128
  %v130 = vpop.f32.mrb[0].mxu0
  %131 = vdwg.mxu0
  %v132 = vmax.f32 %v118, 0.0
  %v133 = vmax.f32 %v121, 0.0
  %v134 = vmax.f32 %v126, 0.0
  %v135 = vmax.f32 %v129, 0.0
  %v136 = vpack.c.bf16 %v133, %v132
  %v137 = vpack.c.bf16 %v135, %v134
  %v140 = vunpack.c.l.b16 %v136
  %v141 = vunpack.c.h.b16 %v136
  %v142 = vunpack.c.l.b16 %v137
  %v143 = vunpack.c.h.b16 %v137
  %v144 = vpack.c.b16 %v140, %v140
  %v145 = vpack.c.b16 %v141, %v141
  %v146 = vpack.c.b16 %v142, %v142
  %v147 = vpack.c.b16 %v143, %v143
  %vm152 = vcmask 257024
  %153 = vst.msk [vmem:[%s5] sm:$0xf] %vm152, %v144
  %154 = vst.msk [vmem:[%s5 + $0x4] sm:$0xf] %vm152, %v145
  %155 = vst.msk [vmem:[%s5 + $0x8] sm:$0xf] %vm152, %v146
  %156 = vst.msk [vmem:[%s5 + $0xc] sm:$0xf] %vm152, %v147
  %v157 = vld [vmem:[%s3] sm:$0xf]
  %v158 = vld [vmem:[%s3 + $0x4] sm:$0xf]
  %v159 = vld [vmem:[%s3 + $0x8] sm:$0xf]
  %v160 = vld [vmem:[%s3 + $0xc] sm:$0xf]
  %v161 = vld [vmem:[%s4] sm:$0x1]
  %v163 = vlaneseq
  %v164 = vshrl.u32 %v163, 7
  %v165 = vsub.s32 0, %v164
  %v166 = vrot.slane %v161, %v165
  %v172 = vunpack.c.l.b16 %v157
  %v173 = vunpack.c.l.b16 %v158
  %v174 = vunpack.c.l.b16 %v159
  %v175 = vunpack.c.l.b16 %v160
  %v176 = vpack.c.b16 %v173, %v172
  %v177 = vpack.c.b16 %v175, %v174
  %vm180 = vcmask 261120
  %v182 = vsel %vm180, %v136, 0
  %v185 = vsel %vm180, %v137, 0
  %187 = vmatprep.subr.bf16.mxu0 0
  %188 = vmatpush1.bf16.msra.mxu0 %v176
  %189 = vmatprep.subr.bf16.mxu0 0
  %190 = vmatpush1.bf16.msra.mxu0 %v177
  %191 = vmatprep.subr.bf16.mxu0 0
  %192 = vmatpush1.bf16.msra.mxu0 0
  %193 = vmatprep.subr.bf16.mxu0 0
  %194 = vmatpush1.bf16.msra.mxu0 0
  %195 = vmatprep.subr.bf16.mxu0 0
  %196 = vmatpush1.bf16.msra.mxu0 0
  %197 = vmatprep.subr.bf16.mxu0 0
  %198 = vmatpush1.bf16.msra.mxu0 0
  %199 = vmatprep.subr.bf16.mxu0 0
  %200 = vmatpush1.bf16.msra.mxu0 0
  %201 = vmatprep.subr.bf16.mxu0 0
  %202 = vmatpush1.bf16.msra.mxu0 0
  %203 = vmatprep.subr.bf16.mxu0 0
  %204 = vmatpush1.bf16.msra.mxu0 0
  %205 = vmatprep.subr.bf16.mxu0 0
  %206 = vmatpush1.bf16.msra.mxu0 0
  %207 = vmatprep.subr.bf16.mxu0 0
  %208 = vmatpush1.bf16.msra.mxu0 0
  %209 = vmatprep.subr.bf16.mxu0 0
  %210 = vmatpush1.bf16.msra.mxu0 0
  %211 = vmatprep.subr.bf16.mxu0 0
  %212 = vmatpush1.bf16.msra.mxu0 0
  %213 = vmatprep.subr.bf16.mxu0 0
  %214 = vmatpush1.bf16.msra.mxu0 0
  %215 = vmatprep.subr.bf16.mxu0 0
  %216 = vmatpush1.bf16.msra.mxu0 0
  %217 = vmatprep.subr.bf16.mxu0 0
  %218 = vmatpush1.bf16.msra.mxu0 0
  %219 = vmatprep.mubr.bf16.mxu0 0
  %220 = vmatmul.mubr.bf16.gmra.mrb[0].mxu0 %v182
  %v221 = vpop.f32.mrb[0].mxu0
  %v222 = vadd.f32 %v166, %v221
  %v223 = vpop.f32.mrb[0].mxu0
  %v224 = vpop.f32.mrb[0].mxu0
  %v225 = vadd.f32 %v166, %v224
  %v226 = vpop.f32.mrb[0].mxu0
  %227 = vmatprep.mubr.bf16.mxu0 0
  %228 = vmatmul.mubr.bf16.gmra.mrb[0].mxu0 %v185
  %v229 = vpop.f32.mrb[0].mxu0
  %v230 = vadd.f32 %v166, %v229
  %v231 = vpop.f32.mrb[0].mxu0
  %v232 = vpop.f32.mrb[0].mxu0
  %v233 = vadd.f32 %v166, %v232
  %v234 = vpop.f32.mrb[0].mxu0
  %235 = vdwg.mxu0
  %vm236 = vcmask 64512
  %237 = vst.msk [vmem:[%s6] sm:$0xff] %vm236, %v222
  %238 = vst.msk [vmem:[%s6 + $0x8] sm:$0xff] %vm236, %v225
  %239 = vst.msk [vmem:[%s6 + $0x10] sm:$0xff] %vm236, %v230
  %240 = vst.msk [vmem:[%s6 + $0x18] sm:$0xff] %vm236, %v233
  // Predicated region
  $region22: #{forward.7} parent=0 // pred_check
    _
  $region23: #{forward.7} parent=0 // pred_check_branch
    %242 = sbr.rel (0) target = $region25
  $region24: #{forward.7} parent=0 // pred_region
    _
  $region25: #{forward.7} parent=0 // pred_fallthru
    _
  // Predicated region
  $region26: #{forward.7} parent=0 // pred_check
    _
  $region27: #{forward.7} parent=0 // pred_check_branch
    %244 = sbr.rel (0) target = $region29
  $region28: #{forward.7} parent=0 // pred_region
    _
  $region29: #{forward.7} parent=0 // pred_fallthru
    _
  // Predicated region
  $region30: #{forward.7} parent=0 // pred_check
    _
  $region31: #{forward.7} parent=0 // pred_check_branch
    %246 = sbr.rel (0) target = $region33
  $region32: #{forward.7} parent=0 // pred_region
    _
  $region33: #{forward.7} parent=0 // pred_fallthru
    _
  // Predicated region
  $region34: #{forward.7} parent=0 // pred_check
    _
  $region35: #{forward.7} parent=0 // pred_check_branch
    %248 = sbr.rel (0) target = $region37
  $region36: #{forward.7} parent=0 // pred_region
    _
  $region37: #{forward.7} parent=0 // pred_fallthru
    _

// kernel: forward.6
$region0: #{forward.6}
  #allocation0 [shape = 'u32[]', space=smem, size = 0x4, offset = 0x4, fixed_abs, tag = 'smem constant byte address 0x4 - core index']
  #allocation1 [shape = 'u32[144,128]{1,0:T(1,128)}', space=vmem, size = 0x12000, scoped, tag = 'internal scratch']
  %s0 = inlined_call_operand.vmem [shape: bf16[128,48], index: 0, kind: input, shape index: {}]
  %s1 = inlined_call_operand.vmem [shape: bf16[48,16], index: 1, kind: input, shape index: {}]
  %s2 = inlined_call_operand.vmem [shape: f32[1,16], index: 2, kind: input, shape index: {}]
  %s3 = inlined_call_operand.vmem [shape: bf16[16,8], index: 3, kind: input, shape index: {}]
  %s4 = inlined_call_operand.vmem [shape: f32[1,8], index: 4, kind: input, shape index: {}]
  %s5 = inlined_call_operand.vmem [shape: bf16[128,16], index: 5, kind: output, shape index: {0}]
  %s6 = inlined_call_operand.vmem [shape: f32[128,8], index: 6, kind: output, shape index: {1}]
  %7 = xla_tuple %s5, %s6
  %s8 = sld [smem:[#allocation0]]
  $region38: #{forward.6} parent=0
    _
  %s10 = ssub.s32 1, %s8
  %s11 = scalar_select 0, %s10, %s8
  // Predicated region
  $region2: #{forward.6} parent=0 // pred_check
    _
  $region3: #{forward.6} parent=0 // pred_check_branch
    %13 = sbr.rel (0) target = $region5
  $region4: #{forward.6} parent=0 // pred_region
    _
  $region5: #{forward.6} parent=0 // pred_fallthru
    _
  // Predicated region
  $region6: #{forward.6} parent=0 // pred_check
    _
  $region7: #{forward.6} parent=0 // pred_check_branch
    %15 = sbr.rel (0) target = $region9
  $region8: #{forward.6} parent=0 // pred_region
    _
  $region9: #{forward.6} parent=0 // pred_fallthru
    _
  // Predicated region
  $region10: #{forward.6} parent=0 // pred_check
    _
  $region11: #{forward.6} parent=0 // pred_check_branch
    %17 = sbr.rel (0) target = $region13
  $region12: #{forward.6} parent=0 // pred_region
    _
  $region13: #{forward.6} parent=0 // pred_fallthru
    _
  // Predicated region
  $region14: #{forward.6} parent=0 // pred_check
    _
  $region15: #{forward.6} parent=0 // pred_check_branch
    %19 = sbr.rel (0) target = $region17
  $region16: #{forward.6} parent=0 // pred_region
    _
  $region17: #{forward.6} parent=0 // pred_fallthru
    _
  // Predicated region
  $region18: #{forward.6} parent=0 // pred_check
    _
  $region19: #{forward.6} parent=0 // pred_check_branch
    %21 = sbr.rel (0) target = $region21
  $region20: #{forward.6} parent=0 // pred_region
    _
  $region21: #{forward.6} parent=0 // pred_fallthru
    _
  %v23 = vld [vmem:[%s0] sm:$0xf]
  %v24 = vld [vmem:[%s0 + $0x4] sm:$0xf]
  %v25 = vld [vmem:[%s0 + $0x8] sm:$0xf]
  %v26 = vld [vmem:[%s0 + $0xc] sm:$0xf]
  %v27 = vld [vmem:[%s0 + $0x10] sm:$0xf]
  %v28 = vld [vmem:[%s0 + $0x14] sm:$0xf]
  %v29 = vld [vmem:[%s0 + $0x18] sm:$0xf]
  %v30 = vld [vmem:[%s0 + $0x1c] sm:$0xf]
  %v31 = vld [vmem:[%s0 + $0x20] sm:$0xf]
  %v32 = vld [vmem:[%s0 + $0x24] sm:$0xf]
  %v33 = vld [vmem:[%s0 + $0x28] sm:$0xf]
  %v34 = vld [vmem:[%s0 + $0x2c] sm:$0xf]
  %v35 = vld [vmem:[%s0 + $0x30] sm:$0xf]
  %v36 = vld [vmem:[%s0 + $0x34] sm:$0xf]
  %v37 = vld [vmem:[%s0 + $0x38] sm:$0xf]
  %v38 = vld [vmem:[%s0 + $0x3c] sm:$0xf]
  %v39 = vld [vmem:[%s1] sm:$0xf]
  %v40 = vld [vmem:[%s1 + $0x4] sm:$0xf]
  %v41 = vld [vmem:[%s1 + $0x8] sm:$0xf]
  %v42 = vld [vmem:[%s1 + $0xc] sm:$0xf]
  %v43 = vld [vmem:[%s1 + $0x10] sm:$0xf]
  %v44 = vld [vmem:[%s1 + $0x14] sm:$0xf]
  %v45 = vld [vmem:[%s2] sm:$0x1]
  %v47 = vlaneseq
  %v48 = vshrl.u32 %v47, 7
  %v49 = vsub.s32 0, %v48
  %v50 = vrot.slane %v45, %v49
  %v68 = vunpack.c.l.b16 %v23
  %v69 = vunpack.c.l.b16 %v24
  %v70 = vunpack.c.l.b16 %v25
  %v71 = vunpack.c.l.b16 %v26
  %v72 = vunpack.c.l.b16 %v27
  %v73 = vunpack.c.l.b16 %v28
  %v74 = vunpack.c.l.b16 %v29
  %v75 = vunpack.c.l.b16 %v30
  %v76 = vunpack.c.l.b16 %v31
  %v77 = vunpack.c.l.b16 %v32
  %v78 = vunpack.c.l.b16 %v33
  %v79 = vunpack.c.l.b16 %v34
  %v80 = vunpack.c.l.b16 %v35
  %v81 = vunpack.c.l.b16 %v36
  %v82 = vunpack.c.l.b16 %v37
  %v83 = vunpack.c.l.b16 %v38
  %v84 = vpack.c.b16 %v69, %v68
  %v85 = vpack.c.b16 %v71, %v70
  %v86 = vpack.c.b16 %v73, %v72
  %v87 = vpack.c.b16 %v75, %v74
  %v88 = vpack.c.b16 %v77, %v76
  %v89 = vpack.c.b16 %v79, %v78
  %v90 = vpack.c.b16 %v81, %v80
  %v91 = vpack.c.b16 %v83, %v82
  %v98 = vunpack.c.l.b16 %v39
  %v99 = vunpack.c.l.b16 %v40
  %v100 = vunpack.c.l.b16 %v41
  %v101 = vunpack.c.l.b16 %v42
  %v102 = vunpack.c.l.b16 %v43
  %v103 = vunpack.c.l.b16 %v44
  %v104 = vpack.c.b16 %v99, %v98
  %v105 = vpack.c.b16 %v101, %v100
  %v106 = vpack.c.b16 %v103, %v102
  %vm110 = vcmask 392192
  %v112 = vsel %vm110, %v84, 0
  %v115 = vsel %vm110, %v85, 0
  %v118 = vsel %vm110, %v86, 0
  %v121 = vsel %vm110, %v87, 0
  %v124 = vsel %vm110, %v88, 0
  %v127 = vsel %vm110, %v89, 0
  %v130 = vsel %vm110, %v90, 0
  %v133 = vsel %vm110, %v91, 0
  %135 = vmatprep.subr.bf16.mxu0 0
  %136 = vmatpush1.bf16.msra.mxu0 %v104
  %137 = vmatprep.subr.bf16.mxu0 0
  %138 = vmatpush1.bf16.msra.mxu0 %v105
  %139 = vmatprep.subr.bf16.mxu0 0
  %140 = vmatpush1.bf16.msra.mxu0 %v106
  %141 = vmatprep.subr.bf16.mxu0 0
  %142 = vmatpush1.bf16.msra.mxu0 0
  %143 = vmatprep.subr.bf16.mxu0 0
  %144 = vmatpush1.bf16.msra.mxu0 0
  %145 = vmatprep.subr.bf16.mxu0 0
  %146 = vmatpush1.bf16.msra.mxu0 0
  %147 = vmatprep.subr.bf16.mxu0 0
  %148 = vmatpush1.bf16.msra.mxu0 0
  %149 = vmatprep.subr.bf16.mxu0 0
  %150 = vmatpush1.bf16.msra.mxu0 0
  %151 = vmatprep.subr.bf16.mxu0 0
  %152 = vmatpush1.bf16.msra.mxu0 0
  %153 = vmatprep.subr.bf16.mxu0 0
  %154 = vmatpush1.bf16.msra.mxu0 0
  %155 = vmatprep.subr.bf16.mxu0 0
  %156 = vmatpush1.bf16.msra.mxu0 0
  %157 = vmatprep.subr.bf16.mxu0 0
  %158 = vmatpush1.bf16.msra.mxu0 0
  %159 = vmatprep.subr.bf16.mxu0 0
  %160 = vmatpush1.bf16.msra.mxu0 0
  %161 = vmatprep.subr.bf16.mxu0 0
  %162 = vmatpush1.bf16.msra.mxu0 0
  %163 = vmatprep.subr.bf16.mxu0 0
  %164 = vmatpush1.bf16.msra.mxu0 0
  %165 = vmatprep.subr.bf16.mxu0 0
  %166 = vmatpush1.bf16.msra.mxu0 0
  %167 = vmatprep.mubr.bf16.mxu0 0
  %168 = vmatmul.mubr.bf16.gmra.mrb[0].mxu0 %v112
  %v169 = vpop.f32.mrb[0].mxu0
  %v170 = vadd.f32 %v50, %v169
  %v171 = vpop.f32.mrb[0].mxu0
  %v172 = vpop.f32.mrb[0].mxu0
  %v173 = vadd.f32 %v50, %v172
  %v174 = vpop.f32.mrb[0].mxu0
  %175 = vmatprep.mubr.bf16.mxu0 0
  %176 = vmatmul.mubr.bf16.gmra.mrb[0].mxu0 %v115
  %v177 = vpop.f32.mrb[0].mxu0
  %v178 = vadd.f32 %v50, %v177
  %v179 = vpop.f32.mrb[0].mxu0
  %v180 = vpop.f32.mrb[0].mxu0
  %v181 = vadd.f32 %v50, %v180
  %v182 = vpop.f32.mrb[0].mxu0
  %183 = vmatprep.mubr.bf16.mxu0 0
  %184 = vmatmul.mubr.bf16.gmra.mrb[0].mxu0 %v118
  %v185 = vpop.f32.mrb[0].mxu0
  %v186 = vadd.f32 %v50, %v185
  %v187 = vpop.f32.mrb[0].mxu0
  %v188 = vpop.f32.mrb[0].mxu0
  %v189 = vadd.f32 %v50, %v188
  %v190 = vpop.f32.mrb[0].mxu0
  %191 = vmatprep.mubr.bf16.mxu0 0
  %192 = vmatmul.mubr.bf16.gmra.mrb[0].mxu0 %v121
  %v193 = vpop.f32.mrb[0].mxu0
  %v194 = vadd.f32 %v50, %v193
  %v195 = vpop.f32.mrb[0].mxu0
  %v196 = vpop.f32.mrb[0].mxu0
  %v197 = vadd.f32 %v50, %v196
  %v198 = vpop.f32.mrb[0].mxu0
  %199 = vmatprep.mubr.bf16.mxu0 0
  %200 = vmatmul.mubr.bf16.gmra.mrb[0].mxu0 %v124
  %v201 = vpop.f32.mrb[0].mxu0
  %v202 = vadd.f32 %v50, %v201
  %v203 = vpop.f32.mrb[0].mxu0
  %v204 = vpop.f32.mrb[0].mxu0
  %v205 = vadd.f32 %v50, %v204
  %v206 = vpop.f32.mrb[0].mxu0
  %207 = vmatprep.mubr.bf16.mxu0 0
  %208 = vmatmul.mubr.bf16.gmra.mrb[0].mxu0 %v127
  %v209 = vpop.f32.mrb[0].mxu0
  %v210 = vadd.f32 %v50, %v209
  %v211 = vpop.f32.mrb[0].mxu0
  %v212 = vpop.f32.mrb[0].mxu0
  %v213 = vadd.f32 %v50, %v212
  %v214 = vpop.f32.mrb[0].mxu0
  %215 = vmatprep.mubr.bf16.mxu0 0
  %216 = vmatmul.mubr.bf16.gmra.mrb[0].mxu0 %v130
  %v217 = vpop.f32.mrb[0].mxu0
  %v218 = vadd.f32 %v50, %v217
  %v219 = vpop.f32.mrb[0].mxu0
  %v220 = vpop.f32.mrb[0].mxu0
  %v221 = vadd.f32 %v50, %v220
  %v222 = vpop.f32.mrb[0].mxu0
  %223 = vmatprep.mubr.bf16.mxu0 0
  %224 = vmatmul.mubr.bf16.gmra.mrb[0].mxu0 %v133
  %v225 = vpop.f32.mrb[0].mxu0
  %v226 = vadd.f32 %v50, %v225
  %v227 = vpop.f32.mrb[0].mxu0
  %v228 = vpop.f32.mrb[0].mxu0
  %v229 = vadd.f32 %v50, %v228
  %v230 = vpop.f32.mrb[0].mxu0
  %231 = vdwg.mxu0
  %v232 = vmax.f32 %v170, 0.0
  %v233 = vmax.f32 %v173, 0.0
  %v234 = vmax.f32 %v178, 0.0
  %v235 = vmax.f32 %v181, 0.0
  %v236 = vmax.f32 %v186, 0.0
  %v237 = vmax.f32 %v189, 0.0
  %v238 = vmax.f32 %v194, 0.0
  %v239 = vmax.f32 %v197, 0.0
  %v240 = vmax.f32 %v202, 0.0
  %v241 = vmax.f32 %v205, 0.0
  %v242 = vmax.f32 %v210, 0.0
  %v243 = vmax.f32 %v213, 0.0
  %v244 = vmax.f32 %v218, 0.0
  %v245 = vmax.f32 %v221, 0.0
  %v246 = vmax.f32 %v226, 0.0
  %v247 = vmax.f32 %v229, 0.0
  %v248 = vpack.c.bf16 %v233, %v232
  %v249 = vpack.c.bf16 %v235, %v234
  %v250 = vpack.c.bf16 %v237, %v236
  %v251 = vpack.c.bf16 %v239, %v238
  %v252 = vpack.c.bf16 %v241, %v240
  %v253 = vpack.c.bf16 %v243, %v242
  %v254 = vpack.c.bf16 %v245, %v244
  %v255 = vpack.c.bf16 %v247, %v246
  %v264 = vunpack.c.l.b16 %v248
  %v265 = vunpack.c.h.b16 %v248
  %v266 = vunpack.c.l.b16 %v249
  %v267 = vunpack.c.h.b16 %v249
  %v268 = vunpack.c.l.b16 %v250
  %v269 = vunpack.c.h.b16 %v250
  %v270 = vunpack.c.l.b16 %v251
  %v271 = vunpack.c.h.b16 %v251
  %v272 = vunpack.c.l.b16 %v252
  %v273 = vunpack.c.h.b16 %v252
  %v274 = vunpack.c.l.b16 %v253
  %v275 = vunpack.c.h.b16 %v253
  %v276 = vunpack.c.l.b16 %v254
  %v277 = vunpack.c.h.b16 %v254
  %v278 = vunpack.c.l.b16 %v255
  %v279 = vunpack.c.h.b16 %v255
  %v280 = vpack.c.b16 %v264, %v264
  %v281 = vpack.c.b16 %v265, %v265
  %v282 = vpack.c.b16 %v266, %v266
  %v283 = vpack.c.b16 %v267, %v267
  %v284 = vpack.c.b16 %v268, %v268
  %v285 = vpack.c.b16 %v269, %v269
  %v286 = vpack.c.b16 %v270, %v270
  %v287 = vpack.c.b16 %v271, %v271
  %v288 = vpack.c.b16 %v272, %v272
  %v289 = vpack.c.b16 %v273, %v273
  %v290 = vpack.c.b16 %v274, %v274
  %v291 = vpack.c.b16 %v275, %v275
  %v292 = vpack.c.b16 %v276, %v276
  %v293 = vpack.c.b16 %v277, %v277
  %v294 = vpack.c.b16 %v278, %v278
  %v295 = vpack.c.b16 %v279, %v279
  %vm312 = vcmask 125952
  %313 = vst.msk [vmem:[%s5] sm:$0xf] %vm312, %v280
  %314 = vst.msk [vmem:[%s5 + $0x4] sm:$0xf] %vm312, %v281
  %315 = vst.msk [vmem:[%s5 + $0x8] sm:$0xf] %vm312, %v282
  %316 = vst.msk [vmem:[%s5 + $0xc] sm:$0xf] %vm312, %v283
  %317 = vst.msk [vmem:[%s5 + $0x10] sm:$0xf] %vm312, %v284
  %318 = vst.msk [vmem:[%s5 + $0x14] sm:$0xf] %vm312, %v285
  %319 = vst.msk [vmem:[%s5 + $0x18] sm:$0xf] %vm312, %v286
  %320 = vst.msk [vmem:[%s5 + $0x1c] sm:$0xf] %vm312, %v287
  %321 = vst.msk [vmem:[%s5 + $0x20] sm:$0xf] %vm312, %v288
  %322 = vst.msk [vmem:[%s5 + $0x24] sm:$0xf] %vm312, %v289
  %323 = vst.msk [vmem:[%s5 + $0x28] sm:$0xf] %vm312, %v290
  %324 = vst.msk [vmem:[%s5 + $0x2c] sm:$0xf] %vm312, %v291
  %325 = vst.msk [vmem:[%s5 + $0x30] sm:$0xf] %vm312, %v292
  %326 = vst.msk [vmem:[%s5 + $0x34] sm:$0xf] %vm312, %v293
  %327 = vst.msk [vmem:[%s5 + $0x38] sm:$0xf] %vm312, %v294
  %328 = vst.msk [vmem:[%s5 + $0x3c] sm:$0xf] %vm312, %v295
  %v329 = vld [vmem:[%s3] sm:$0xf]
  %v330 = vld [vmem:[%s3 + $0x4] sm:$0xf]
  %v331 = vld [vmem:[%s4] sm:$0x1]
  %v333 = vlaneseq
  %v334 = vshrl.u32 %v333, 7
  %v335 = vsub.s32 0, %v334
  %v336 = vrot.slane %v331, %v335
  %v340 = vunpack.c.l.b16 %v329
  %v341 = vunpack.c.l.b16 %v330
  %v342 = vpack.c.b16 %v341, %v340
  %vm344 = vcmask 130048
  %v346 = vsel %vm344, %v248, 0
  %v349 = vsel %vm344, %v249, 0
  %v352 = vsel %vm344, %v250, 0
  %v355 = vsel %vm344, %v251, 0
  %v358 = vsel %vm344, %v252, 0
  %v361 = vsel %vm344, %v253, 0
  %v364 = vsel %vm344, %v254, 0
  %v367 = vsel %vm344, %v255, 0
  %369 = vmatprep.subr.bf16.mxu0 0
  %370 = vmatpush1.bf16.msra.mxu0 %v342
  %371 = vmatprep.subr.bf16.mxu0 0
  %372 = vmatpush1.bf16.msra.mxu0 0
  %373 = vmatprep.subr.bf16.mxu0 0
  %374 = vmatpush1.bf16.msra.mxu0 0
  %375 = vmatprep.subr.bf16.mxu0 0
  %376 = vmatpush1.bf16.msra.mxu0 0
  %377 = vmatprep.subr.bf16.mxu0 0
  %378 = vmatpush1.bf16.msra.mxu0 0
  %379 = vmatprep.subr.bf16.mxu0 0
  %380 = vmatpush1.bf16.msra.mxu0 0
  %381 = vmatprep.subr.bf16.mxu0 0
  %382 = vmatpush1.bf16.msra.mxu0 0
  %383 = vmatprep.subr.bf16.mxu0 0
  %384 = vmatpush1.bf16.msra.mxu0 0
  %385 = vmatprep.subr.bf16.mxu0 0
  %386 = vmatpush1.bf16.msra.mxu0 0
  %387 = vmatprep.subr.bf16.mxu0 0
  %388 = vmatpush1.bf16.msra.mxu0 0
  %389 = vmatprep.subr.bf16.mxu0 0
  %390 = vmatpush1.bf16.msra.mxu0 0
  %391 = vmatprep.subr.bf16.mxu0 0
  %392 = vmatpush1.bf16.msra.mxu0 0
  %393 = vmatprep.subr.bf16.mxu0 0
  %394 = vmatpush1.bf16.msra.mxu0 0
  %395 = vmatprep.subr.bf16.mxu0 0
  %396 = vmatpush1.bf16.msra.mxu0 0
  %397 = vmatprep.subr.bf16.mxu0 0
  %398 = vmatpush1.bf16.msra.mxu0 0
  %399 = vmatprep.subr.bf16.mxu0 0
  %400 = vmatpush1.bf16.msra.mxu0 0
  %401 = vmatprep.mubr.bf16.mxu0 0
  %402 = vmatmul.mubr.bf16.gmra.mrb[0].mxu0 %v346
  %v403 = vpop.f32.mrb[0].mxu0
  %v404 = vadd.f32 %v336, %v403
  %v405 = vpop.f32.mrb[0].mxu0
  %v406 = vpop.f32.mrb[0].mxu0
  %v407 = vadd.f32 %v336, %v406
  %v408 = vpop.f32.mrb[0].mxu0
  %409 = vmatprep.mubr.bf16.mxu0 0
  %410 = vmatmul.mubr.bf16.gmra.mrb[0].mxu0 %v349
  %v411 = vpop.f32.mrb[0].mxu0
  %v412 = vadd.f32 %v336, %v411
  %v413 = vpop.f32.mrb[0].mxu0
  %v414 = vpop.f32.mrb[0].mxu0
  %v415 = vadd.f32 %v336, %v414
  %v416 = vpop.f32.mrb[0].mxu0
  %417 = vmatprep.mubr.bf16.mxu0 0
  %418 = vmatmul.mubr.bf16.gmra.mrb[0].mxu0 %v352
  %v419 = vpop.f32.mrb[0].mxu0
  %v420 = vadd.f32 %v336, %v419
  %v421 = vpop.f32.mrb[0].mxu0
  %v422 = vpop.f32.mrb[0].mxu0
  %v423 = vadd.f32 %v336, %v422
  %v424 = vpop.f32.mrb[0].mxu0
  %425 = vmatprep.mubr.bf16.mxu0 0
  %426 = vmatmul.mubr.bf16.gmra.mrb[0].mxu0 %v355
  %v427 = vpop.f32.mrb[0].mxu0
  %v428 = vadd.f32 %v336, %v427
  %v429 = vpop.f32.mrb[0].mxu0
  %v430 = vpop.f32.mrb[0].mxu0
  %v431 = vadd.f32 %v336, %v430
  %v432 = vpop.f32.mrb[0].mxu0
  %433 = vmatprep.mubr.bf16.mxu0 0
  %434 = vmatmul.mubr.bf16.gmra.mrb[0].mxu0 %v358
  %v435 = vpop.f32.mrb[0].mxu0
  %v436 = vadd.f32 %v336, %v435
  %v437 = vpop.f32.mrb[0].mxu0
  %v438 = vpop.f32.mrb[0].mxu0
  %v439 = vadd.f32 %v336, %v438
  %v440 = vpop.f32.mrb[0].mxu0
  %441 = vmatprep.mubr.bf16.mxu0 0
  %442 = vmatmul.mubr.bf16.gmra.mrb[0].mxu0 %v361
  %v443 = vpop.f32.mrb[0].mxu0
  %v444 = vadd.f32 %v336, %v443
  %v445 = vpop.f32.mrb[0].mxu0
  %v446 = vpop.f32.mrb[0].mxu0
  %v447 = vadd.f32 %v336, %v446
  %v448 = vpop.f32.mrb[0].mxu0
  %449 = vmatprep.mubr.bf16.mxu0 0
  %450 = vmatmul.mubr.bf16.gmra.mrb[0].mxu0 %v364
  %v451 = vpop.f32.mrb[0].mxu0
  %v452 = vadd.f32 %v336, %v451
  %v453 = vpop.f32.mrb[0].mxu0
  %v454 = vpop.f32.mrb[0].mxu0
  %v455 = vadd.f32 %v336, %v454
  %v456 = vpop.f32.mrb[0].mxu0
  %457 = vmatprep.mubr.bf16.mxu0 0
  %458 = vmatmul.mubr.bf16.gmra.mrb[0].mxu0 %v367
  %v459 = vpop.f32.mrb[0].mxu0
  %v460 = vadd.f32 %v336, %v459
  %v461 = vpop.f32.mrb[0].mxu0
  %v462 = vpop.f32.mrb[0].mxu0
  %v463 = vadd.f32 %v336, %v462
  %v464 = vpop.f32.mrb[0].mxu0
  %465 = vdwg.mxu0
  %vm466 = vcmask 64512
  %467 = vst.msk [vmem:[%s6] sm:$0xff] %vm466, %v404
  %468 = vst.msk [vmem:[%s6 + $0x8] sm:$0xff] %vm466, %v407
  %469 = vst.msk [vmem:[%s6 + $0x10] sm:$0xff] %vm466, %v412
  %470 = vst.msk [vmem:[%s6 + $0x18] sm:$0xff] %vm466, %v415
  %471 = vst.msk [vmem:[%s6 + $0x20] sm:$0xff] %vm466, %v420
  %472 = vst.msk [vmem:[%s6 + $0x28] sm:$0xff] %vm466, %v423
  %473 = vst.msk [vmem:[%s6 + $0x30] sm:$0xff] %vm466, %v428
  %474 = vst.msk [vmem:[%s6 + $0x38] sm:$0xff] %vm466, %v431
  %475 = vst.msk [vmem:[%s6 + $0x40] sm:$0xff] %vm466, %v436
  %476 = vst.msk [vmem:[%s6 + $0x48] sm:$0xff] %vm466, %v439
  %477 = vst.msk [vmem:[%s6 + $0x50] sm:$0xff] %vm466, %v444
  %478 = vst.msk [vmem:[%s6 + $0x58] sm:$0xff] %vm466, %v447
  %479 = vst.msk [vmem:[%s6 + $0x60] sm:$0xff] %vm466, %v452
  %480 = vst.msk [vmem:[%s6 + $0x68] sm:$0xff] %vm466, %v455
  %481 = vst.msk [vmem:[%s6 + $0x70] sm:$0xff] %vm466, %v460
  %482 = vst.msk [vmem:[%s6 + $0x78] sm:$0xff] %vm466, %v463
  // Predicated region
  $region22: #{forward.6} parent=0 // pred_check
    _
  $region23: #{forward.6} parent=0 // pred_check_branch
    %484 = sbr.rel (0) target = $region25
  $region24: #{forward.6} parent=0 // pred_region
    _
  $region25: #{forward.6} parent=0 // pred_fallthru
    _
  // Predicated region
  $region26: #{forward.6} parent=0 // pred_check
    _
  $region27: #{forward.6} parent=0 // pred_check_branch
    %486 = sbr.rel (0) target = $region29
  $region28: #{forward.6} parent=0 // pred_region
    _
  $region29: #{forward.6} parent=0 // pred_fallthru
    _
  // Predicated region
  $region30: #{forward.6} parent=0 // pred_check
    _
  $region31: #{forward.6} parent=0 // pred_check_branch
    %488 = sbr.rel (0) target = $region33
  $region32: #{forward.6} parent=0 // pred_region
    _
  $region33: #{forward.6} parent=0 // pred_fallthru
    _
  // Predicated region
  $region34: #{forward.6} parent=0 // pred_check
    _
  $region35: #{forward.6} parent=0 // pred_check_branch
    %490 = sbr.rel (0) target = $region37
  $region36: #{forward.6} parent=0 // pred_region
    _
  $region37: #{forward.6} parent=0 // pred_fallthru
    _

// kernel: forward.8
$region0: #{forward.8}
  #allocation0 [shape = 'u32[]', space=smem, size = 0x4, offset = 0x4, fixed_abs, tag = 'smem constant byte address 0x4 - core index']
  #allocation1 [shape = 'u32[144,128]{1,0:T(1,128)}', space=vmem, size = 0x12000, scoped, tag = 'internal scratch']
  %s0 = inlined_call_operand.vmem [shape: bf16[8,128], index: 0, kind: input, shape index: {}]
  %s1 = inlined_call_operand.vmem [shape: bf16[128,48], index: 1, kind: input, shape index: {}]
  %s2 = inlined_call_operand.vmem [shape: f32[1,48], index: 2, kind: input, shape index: {}]
  %s3 = inlined_call_operand.vmem [shape: bf16[48,8], index: 3, kind: input, shape index: {}]
  %s4 = inlined_call_operand.vmem [shape: f32[1,8], index: 4, kind: input, shape index: {}]
  %s5 = inlined_call_operand.vmem [shape: bf16[8,48], index: 5, kind: output, shape index: {0}]
  %s6 = inlined_call_operand.vmem [shape: f32[8,8], index: 6, kind: output, shape index: {1}]
  %7 = xla_tuple %s5, %s6
  %s8 = sld [smem:[#allocation0]]
  $region38: #{forward.8} parent=0
    _
  %s10 = ssub.s32 1, %s8
  %s11 = scalar_select 0, %s10, %s8
  // Predicated region
  $region2: #{forward.8} parent=0 // pred_check
    _
  $region3: #{forward.8} parent=0 // pred_check_branch
    %13 = sbr.rel (0) target = $region5
  $region4: #{forward.8} parent=0 // pred_region
    _
  $region5: #{forward.8} parent=0 // pred_fallthru
    _
  // Predicated region
  $region6: #{forward.8} parent=0 // pred_check
    _
  $region7: #{forward.8} parent=0 // pred_check_branch
    %15 = sbr.rel (0) target = $region9
  $region8: #{forward.8} parent=0 // pred_region
    _
  $region9: #{forward.8} parent=0 // pred_fallthru
    _
  // Predicated region
  $region10: #{forward.8} parent=0 // pred_check
    _
  $region11: #{forward.8} parent=0 // pred_check_branch
    %17 = sbr.rel (0) target = $region13
  $region12: #{forward.8} parent=0 // pred_region
    _
  $region13: #{forward.8} parent=0 // pred_fallthru
    _
  // Predicated region
  $region14: #{forward.8} parent=0 // pred_check
    _
  $region15: #{forward.8} parent=0 // pred_check_branch
    %19 = sbr.rel (0) target = $region17
  $region16: #{forward.8} parent=0 // pred_region
    _
  $region17: #{forward.8} parent=0 // pred_fallthru
    _
  // Predicated region
  $region18: #{forward.8} parent=0 // pred_check
    _
  $region19: #{forward.8} parent=0 // pred_check_branch
    %21 = sbr.rel (0) target = $region21
  $region20: #{forward.8} parent=0 // pred_region
    _
  $region21: #{forward.8} parent=0 // pred_fallthru
    _
  %v23 = vld [vmem:[%s0] sm:$0xf]
  %v24 = vld [vmem:[%s1] sm:$0xf]
  %v25 = vld [vmem:[%s1 + $0x4] sm:$0xf]
  %v26 = vld [vmem:[%s1 + $0x8] sm:$0xf]
  %v27 = vld [vmem:[%s1 + $0xc] sm:$0xf]
  %v28 = vld [vmem:[%s1 + $0x10] sm:$0xf]
  %v29 = vld [vmem:[%s1 + $0x14] sm:$0xf]
  %v30 = vld [vmem:[%s1 + $0x18] sm:$0xf]
  %v31 = vld [vmem:[%s1 + $0x1c] sm:$0xf]
  %v32 = vld [vmem:[%s1 + $0x20] sm:$0xf]
  %v33 = vld [vmem:[%s1 + $0x24] sm:$0xf]
  %v34 = vld [vmem:[%s1 + $0x28] sm:$0xf]
  %v35 = vld [vmem:[%s1 + $0x2c] sm:$0xf]
  %v36 = vld [vmem:[%s1 + $0x30] sm:$0xf]
  %v37 = vld [vmem:[%s1 + $0x34] sm:$0xf]
  %v38 = vld [vmem:[%s1 + $0x38] sm:$0xf]
  %v39 = vld [vmem:[%s1 + $0x3c] sm:$0xf]
  %v40 = vld [vmem:[%s2] sm:$0x1]
  %v42 = vlaneseq
  %v43 = vshrl.u32 %v42, 7
  %v44 = vsub.s32 0, %v43
  %v45 = vrot.slane %v40, %v44
  %v63 = vunpack.c.l.b16 %v24
  %v64 = vunpack.c.l.b16 %v25
  %v65 = vunpack.c.l.b16 %v26
  %v66 = vunpack.c.l.b16 %v27
  %v67 = vunpack.c.l.b16 %v28
  %v68 = vunpack.c.l.b16 %v29
  %v69 = vunpack.c.l.b16 %v30
  %v70 = vunpack.c.l.b16 %v31
  %v71 = vunpack.c.l.b16 %v32
  %v72 = vunpack.c.l.b16 %v33
  %v73 = vunpack.c.l.b16 %v34
  %v74 = vunpack.c.l.b16 %v35
  %v75 = vunpack.c.l.b16 %v36
  %v76 = vunpack.c.l.b16 %v37
  %v77 = vunpack.c.l.b16 %v38
  %v78 = vunpack.c.l.b16 %v39
  %v79 = vpack.c.b16 %v64, %v63
  %v80 = vpack.c.b16 %v66, %v65
  %v81 = vpack.c.b16 %v68, %v67
  %v82 = vpack.c.b16 %v70, %v69
  %v83 = vpack.c.b16 %v72, %v71
  %v84 = vpack.c.b16 %v74, %v73
  %v85 = vpack.c.b16 %v76, %v75
  %v86 = vpack.c.b16 %v78, %v77
  %95 = vmatprep.subr.bf16.mxu0 0
  %96 = vmatpush1.bf16.msra.mxu0 %v79
  %97 = vmatprep.subr.bf16.mxu0 0
  %98 = vmatpush1.bf16.msra.mxu0 %v80
  %99 = vmatprep.subr.bf16.mxu0 0
  %100 = vmatpush1.bf16.msra.mxu0 %v81
  %101 = vmatprep.subr.bf16.mxu0 0
  %102 = vmatpush1.bf16.msra.mxu0 %v82
  %103 = vmatprep.subr.bf16.mxu0 0
  %104 = vmatpush1.bf16.msra.mxu0 %v83
  %105 = vmatprep.subr.bf16.mxu0 0
  %106 = vmatpush1.bf16.msra.mxu0 %v84
  %107 = vmatprep.subr.bf16.mxu0 0
  %108 = vmatpush1.bf16.msra.mxu0 %v85
  %109 = vmatprep.subr.bf16.mxu0 0
  %110 = vmatpush1.bf16.msra.mxu0 %v86
  %111 = vmatprep.subr.bf16.mxu0 0
  %112 = vmatpush1.bf16.msra.mxu0 0
  %113 = vmatprep.subr.bf16.mxu0 0
  %114 = vmatpush1.bf16.msra.mxu0 0
  %115 = vmatprep.subr.bf16.mxu0 0
  %116 = vmatpush1.bf16.msra.mxu0 0
  %117 = vmatprep.subr.bf16.mxu0 0
  %118 = vmatpush1.bf16.msra.mxu0 0
  %119 = vmatprep.subr.bf16.mxu0 0
  %120 = vmatpush1.bf16.msra.mxu0 0
  %121 = vmatprep.subr.bf16.mxu0 0
  %122 = vmatpush1.bf16.msra.mxu0 0
  %123 = vmatprep.subr.bf16.mxu0 0
  %124 = vmatpush1.bf16.msra.mxu0 0
  %125 = vmatprep.subr.bf16.mxu0 0
  %126 = vmatpush1.bf16.msra.mxu0 0
  %127 = vmatprep.mubr.bf16.mxu0 0
  %128 = vmatmul.mubr.bf16.gmra.mrb[0].mxu0 %v23
  %v129 = vpop.f32.mrb[0].mxu0
  %v130 = vadd.f32 %v45, %v129
  %v131 = vpop.f32.mrb[0].mxu0
  %v132 = vpop.f32.mrb[0].mxu0
  %v133 = vpop.f32.mrb[0].mxu0
  %134 = vdwg.mxu0
  %v135 = vmax.f32 %v130, 0.0
  %v136 = vpack.c.bf16 %v135, %v135
  %vm137 = vcmask 388096
  %138 = vst.msk [vmem:[%s5] sm:$0xf] %vm137, %v136
  %v139 = vld [vmem:[%s3] sm:$0xf]
  %v140 = vld [vmem:[%s3 + $0x4] sm:$0xf]
  %v141 = vld [vmem:[%s3 + $0x8] sm:$0xf]
  %v142 = vld [vmem:[%s3 + $0xc] sm:$0xf]
  %v143 = vld [vmem:[%s3 + $0x10] sm:$0xf]
  %v144 = vld [vmem:[%s3 + $0x14] sm:$0xf]
  %v145 = vld [vmem:[%s4] sm:$0x1]
  %v147 = vlaneseq
  %v148 = vshrl.u32 %v147, 7
  %v149 = vsub.s32 0, %v148
  %v150 = vrot.slane %v145, %v149
  %v158 = vunpack.c.l.b16 %v139
  %v159 = vunpack.c.l.b16 %v140
  %v160 = vunpack.c.l.b16 %v141
  %v161 = vunpack.c.l.b16 %v142
  %v162 = vunpack.c.l.b16 %v143
  %v163 = vunpack.c.l.b16 %v144
  %v164 = vpack.c.b16 %v159, %v158
  %v165 = vpack.c.b16 %v161, %v160
  %v166 = vpack.c.b16 %v163, %v162
  %vm170 = vcmask 392192
  %v172 = vsel %vm170, %v136, 0
  %174 = vmatprep.subr.bf16.mxu0 0
  %175 = vmatpush1.bf16.msra.mxu0 %v164
  %176 = vmatprep.subr.bf16.mxu0 0
  %177 = vmatpush1.bf16.msra.mxu0 %v165
  %178 = vmatprep.subr.bf16.mxu0 0
  %179 = vmatpush1.bf16.msra.mxu0 %v166
  %180 = vmatprep.subr.bf16.mxu0 0
  %181 = vmatpush1.bf16.msra.mxu0 0
  %182 = vmatprep.subr.bf16.mxu0 0
  %183 = vmatpush1.bf16.msra.mxu0 0
  %184 = vmatprep.subr.bf16.mxu0 0
  %185 = vmatpush1.bf16.msra.mxu0 0
  %186 = vmatprep.subr.bf16.mxu0 0
  %187 = vmatpush1.bf16.msra.mxu0 0
  %188 = vmatprep.subr.bf16.mxu0 0
  %189 = vmatpush1.bf16.msra.mxu0 0
  %190 = vmatprep.subr.bf16.mxu0 0
  %191 = vmatpush1.bf16.msra.mxu0 0
  %192 = vmatprep.subr.bf16.mxu0 0
  %193 = vmatpush1.bf16.msra.mxu0 0
  %194 = vmatprep.subr.bf16.mxu0 0
  %195 = vmatpush1.bf16.msra.mxu0 0
  %196 = vmatprep.subr.bf16.mxu0 0
  %197 = vmatpush1.bf16.msra.mxu0 0
  %198 = vmatprep.subr.bf16.mxu0 0
  %199 = vmatpush1.bf16.msra.mxu0 0
  %200 = vmatprep.subr.bf16.mxu0 0
  %201 = vmatpush1.bf16.msra.mxu0 0
  %202 = vmatprep.subr.bf16.mxu0 0
  %203 = vmatpush1.bf16.msra.mxu0 0
  %204 = vmatprep.subr.bf16.mxu0 0
  %205 = vmatpush1.bf16.msra.mxu0 0
  %206 = vmatprep.mubr.bf16.mxu0 0
  %207 = vmatmul.mubr.bf16.gmra.mrb[0].mxu0 %v172
  %v208 = vpop.f32.mrb[0].mxu0
  %v209 = vadd.f32 %v150, %v208
  %v210 = vpop.f32.mrb[0].mxu0
  %v211 = vpop.f32.mrb[0].mxu0
  %v212 = vpop.f32.mrb[0].mxu0
  %213 = vdwg.mxu0
  %vm214 = vcmask 64512
  %215 = vst.msk [vmem:[%s6] sm:$0xff] %vm214, %v209
  // Predicated region
  $region22: #{forward.8} parent=0 // pred_check
    _
  $region23: #{forward.8} parent=0 // pred_check_branch
    %217 = sbr.rel (0) target = $region25
  $region24: #{forward.8} parent=0 // pred_region
    _
  $region25: #{forward.8} parent=0 // pred_fallthru
    _
  // Predicated region
  $region26: #{forward.8} parent=0 // pred_check
    _
  $region27: #{forward.8} parent=0 // pred_check_branch
    %219 = sbr.rel (0) target = $region29
  $region28: #{forward.8} parent=0 // pred_region
    _
  $region29: #{forward.8} parent=0 // pred_fallthru
    _
  // Predicated region
  $region30: #{forward.8} parent=0 // pred_check
    _
  $region31: #{forward.8} parent=0 // pred_check_branch
    %221 = sbr.rel (0) target = $region33
  $region32: #{forward.8} parent=0 // pred_region
    _
  $region33: #{forward.8} parent=0 // pred_fallthru
    _
  // Predicated region
  $region34: #{forward.8} parent=0 // pred_check
    _
  $region35: #{forward.8} parent=0 // pred_check_branch
    %223 = sbr.rel (0) target = $region37
  $region36: #{forward.8} parent=0 // pred_region
    _
  $region37: #{forward.8} parent=0 // pred_fallthru
    _

// kernel: forward.9
$region0: #{forward.9}
  #allocation0 [shape = 'u32[]', space=smem, size = 0x4, offset = 0x4, fixed_abs, tag = 'smem constant byte address 0x4 - core index']
  #allocation1 [shape = 'u32[144,128]{1,0:T(1,128)}', space=vmem, size = 0x12000, scoped, tag = 'internal scratch']
  %s0 = inlined_call_operand.vmem [shape: bf16[2,192], index: 0, kind: input, shape index: {}]
  %s1 = inlined_call_operand.vmem [shape: bf16[192,64], index: 1, kind: input, shape index: {}]
  %s2 = inlined_call_operand.vmem [shape: f32[1,64], index: 2, kind: input, shape index: {}]
  %s3 = inlined_call_operand.vmem [shape: bf16[64,8], index: 3, kind: input, shape index: {}]
  %s4 = inlined_call_operand.vmem [shape: f32[1,8], index: 4, kind: input, shape index: {}]
  %s5 = inlined_call_operand.vmem [shape: bf16[2,64], index: 5, kind: output, shape index: {0}]
  %s6 = inlined_call_operand.vmem [shape: f32[2,8], index: 6, kind: output, shape index: {1}]
  %7 = xla_tuple %s5, %s6
  %s8 = sld [smem:[#allocation0]]
  $region38: #{forward.9} parent=0
    _
  %s10 = ssub.s32 1, %s8
  %s11 = scalar_select 0, %s10, %s8
  // Predicated region
  $region2: #{forward.9} parent=0 // pred_check
    _
  $region3: #{forward.9} parent=0 // pred_check_branch
    %13 = sbr.rel (0) target = $region5
  $region4: #{forward.9} parent=0 // pred_region
    _
  $region5: #{forward.9} parent=0 // pred_fallthru
    _
  // Predicated region
  $region6: #{forward.9} parent=0 // pred_check
    _
  $region7: #{forward.9} parent=0 // pred_check_branch
    %15 = sbr.rel (0) target = $region9
  $region8: #{forward.9} parent=0 // pred_region
    _
  $region9: #{forward.9} parent=0 // pred_fallthru
    _
  // Predicated region
  $region10: #{forward.9} parent=0 // pred_check
    _
  $region11: #{forward.9} parent=0 // pred_check_branch
    %17 = sbr.rel (0) target = $region13
  $region12: #{forward.9} parent=0 // pred_region
    _
  $region13: #{forward.9} parent=0 // pred_fallthru
    _
  // Predicated region
  $region14: #{forward.9} parent=0 // pred_check
    _
  $region15: #{forward.9} parent=0 // pred_check_branch
    %19 = sbr.rel (0) target = $region17
  $region16: #{forward.9} parent=0 // pred_region
    _
  $region17: #{forward.9} parent=0 // pred_fallthru
    _
  // Predicated region
  $region18: #{forward.9} parent=0 // pred_check
    _
  $region19: #{forward.9} parent=0 // pred_check_branch
    %21 = sbr.rel (0) target = $region21
  $region20: #{forward.9} parent=0 // pred_region
    _
  $region21: #{forward.9} parent=0 // pred_fallthru
    _
  %v23 = vld [vmem:[%s0] sm:$0x3]
  %v24 = vld [vmem:[%s1] sm:$0xf]
  %v25 = vld [vmem:[%s1 + $0x4] sm:$0xf]
  %v26 = vld [vmem:[%s1 + $0x8] sm:$0xf]
  %v27 = vld [vmem:[%s1 + $0xc] sm:$0xf]
  %v28 = vld [vmem:[%s1 + $0x10] sm:$0xf]
  %v29 = vld [vmem:[%s1 + $0x14] sm:$0xf]
  %v30 = vld [vmem:[%s1 + $0x18] sm:$0xf]
  %v31 = vld [vmem:[%s1 + $0x1c] sm:$0xf]
  %v32 = vld [vmem:[%s1 + $0x20] sm:$0xf]
  %v33 = vld [vmem:[%s1 + $0x24] sm:$0xf]
  %v34 = vld [vmem:[%s1 + $0x28] sm:$0xf]
  %v35 = vld [vmem:[%s1 + $0x2c] sm:$0xf]
  %v36 = vld [vmem:[%s1 + $0x30] sm:$0xf]
  %v37 = vld [vmem:[%s1 + $0x34] sm:$0xf]
  %v38 = vld [vmem:[%s1 + $0x38] sm:$0xf]
  %v39 = vld [vmem:[%s1 + $0x3c] sm:$0xf]
  %v40 = vld [vmem:[%s1 + $0x40] sm:$0xf]
  %v41 = vld [vmem:[%s1 + $0x44] sm:$0xf]
  %v42 = vld [vmem:[%s1 + $0x48] sm:$0xf]
  %v43 = vld [vmem:[%s1 + $0x4c] sm:$0xf]
  %v44 = vld [vmem:[%s1 + $0x50] sm:$0xf]
  %v45 = vld [vmem:[%s1 + $0x54] sm:$0xf]
  %v46 = vld [vmem:[%s1 + $0x58] sm:$0xf]
  %v47 = vld [vmem:[%s1 + $0x5c] sm:$0xf]
  %v48 = vld [vmem:[%s2] sm:$0x1]
  %v50 = vlaneseq
  %v51 = vshrl.u32 %v50, 7
  %v52 = vsub.s32 0, %v51
  %v53 = vrot.slane %v48, %v52
  %v57 = vunpack.c.l.s4 1966171168
  %v58 = vunpack.c.0.s8 %v57
  %v59 = vlaneseq
  %v60 = vshrl.u32 %v59, 7
  %v61 = vsub.s32 %v58, %v60
  %v62 = vrot.slane %v23, %v61
  %v63 = vcombine.high %v62, %v62
  %v65 = vunpack.c.l.s4 1966171168
  %v66 = vunpack.c.0.s8 %v65
  %v67 = vlaneseq
  %v68 = vshrl.u32 %v67, 7
  %v69 = vsub.s32 %v66, %v68
  %v70 = vrot.slane %v62, %v69
  %v72 = vunpack.c.l.s4 1966171168
  %v73 = vunpack.c.0.s8 %v72
  %v74 = vlaneseq
  %v75 = vshrl.u32 %v74, 7
  %v76 = vsub.s32 %v73, %v75
  %v77 = vrot.slane %v63, %v76
  %v103 = vunpack.c.l.b16 %v24
  %v104 = vunpack.c.l.b16 %v25
  %v105 = vunpack.c.l.b16 %v26
  %v106 = vunpack.c.l.b16 %v27
  %v107 = vunpack.c.l.b16 %v28
  %v108 = vunpack.c.l.b16 %v29
  %v109 = vunpack.c.l.b16 %v30
  %v110 = vunpack.c.l.b16 %v31
  %v111 = vunpack.c.l.b16 %v32
  %v112 = vunpack.c.l.b16 %v33
  %v113 = vunpack.c.l.b16 %v34
  %v114 = vunpack.c.l.b16 %v35
  %v115 = vunpack.c.l.b16 %v36
  %v116 = vunpack.c.l.b16 %v37
  %v117 = vunpack.c.l.b16 %v38
  %v118 = vunpack.c.l.b16 %v39
  %v119 = vunpack.c.l.b16 %v40
  %v120 = vunpack.c.l.b16 %v41
  %v121 = vunpack.c.l.b16 %v42
  %v122 = vunpack.c.l.b16 %v43
  %v123 = vunpack.c.l.b16 %v44
  %v124 = vunpack.c.l.b16 %v45
  %v125 = vunpack.c.l.b16 %v46
  %v126 = vunpack.c.l.b16 %v47
  %v127 = vpack.c.b16 %v104, %v103
  %v128 = vpack.c.b16 %v106, %v105
  %v129 = vpack.c.b16 %v108, %v107
  %v130 = vpack.c.b16 %v110, %v109
  %v131 = vpack.c.b16 %v112, %v111
  %v132 = vpack.c.b16 %v114, %v113
  %v133 = vpack.c.b16 %v116, %v115
  %v134 = vpack.c.b16 %v118, %v117
  %v135 = vpack.c.b16 %v120, %v119
  %v136 = vpack.c.b16 %v122, %v121
  %v137 = vpack.c.b16 %v124, %v123
  %v138 = vpack.c.b16 %v126, %v125
  %vm151 = vcmask 523264
  %v153 = vsel %vm151, %v77, 0
  %155 = vmatprep.subr.bf16.mxu0 0
  %156 = vmatpush1.bf16.msra.mxu0 %v127
  %157 = vmatprep.subr.bf16.mxu0 0
  %158 = vmatpush1.bf16.msra.mxu0 %v128
  %159 = vmatprep.subr.bf16.mxu0 0
  %160 = vmatpush1.bf16.msra.mxu0 %v129
  %161 = vmatprep.subr.bf16.mxu0 0
  %162 = vmatpush1.bf16.msra.mxu0 %v130
  %163 = vmatprep.subr.bf16.mxu0 0
  %164 = vmatpush1.bf16.msra.mxu0 %v131
  %165 = vmatprep.subr.bf16.mxu0 0
  %166 = vmatpush1.bf16.msra.mxu0 %v132
  %167 = vmatprep.subr.bf16.mxu0 0
  %168 = vmatpush1.bf16.msra.mxu0 %v133
  %169 = vmatprep.subr.bf16.mxu0 0
  %170 = vmatpush1.bf16.msra.mxu0 %v134
  %171 = vmatprep.subr.bf16.mxu0 0
  %172 = vmatpush1.bf16.msra.mxu0 %v135
  %173 = vmatprep.subr.bf16.mxu0 0
  %174 = vmatpush1.bf16.msra.mxu0 %v136
  %175 = vmatprep.subr.bf16.mxu0 0
  %176 = vmatpush1.bf16.msra.mxu0 %v137
  %177 = vmatprep.subr.bf16.mxu0 0
  %178 = vmatpush1.bf16.msra.mxu0 %v138
  %179 = vmatprep.subr.bf16.mxu0 0
  %180 = vmatpush1.bf16.msra.mxu0 0
  %181 = vmatprep.subr.bf16.mxu0 0
  %182 = vmatpush1.bf16.msra.mxu0 0
  %183 = vmatprep.subr.bf16.mxu0 0
  %184 = vmatpush1.bf16.msra.mxu0 0
  %185 = vmatprep.subr.bf16.mxu0 0
  %186 = vmatpush1.bf16.msra.mxu0 0
  %187 = vmatprep.mubr.bf16.mxu0 %v153
  %188 = vmatmul.mubr.bf16.gmra.mrb[0].mxu0 %v70
  %v189 = vpop.f32.mrb[0].mxu0
  %v190 = vadd.f32 %v53, %v189
  %v191 = vpop.f32.mrb[0].mxu0
  %v192 = vpop.f32.mrb[0].mxu0
  %v193 = vpop.f32.mrb[0].mxu0
  %194 = vdwg.mxu0
  %v195 = vmax.f32 %v190, 0.0
  %v196 = vpack.c.bf16 %v195, %v195
  %vm197 = vcmask 516096
  %198 = vst.msk [vmem:[%s5] sm:$0x1] %vm197, %v196
  %v199 = vld [vmem:[%s3] sm:$0xf]
  %v200 = vld [vmem:[%s3 + $0x4] sm:$0xf]
  %v201 = vld [vmem:[%s3 + $0x8] sm:$0xf]
  %v202 = vld [vmem:[%s3 + $0xc] sm:$0xf]
  %v203 = vld [vmem:[%s3 + $0x10] sm:$0xf]
  %v204 = vld [vmem:[%s3 + $0x14] sm:$0xf]
  %v205 = vld [vmem:[%s3 + $0x18] sm:$0xf]
  %v206 = vld [vmem:[%s3 + $0x1c] sm:$0xf]
  %v207 = vld [vmem:[%s4] sm:$0x1]
  %v209 = vlaneseq
  %v210 = vshrl.u32 %v209, 7
  %v211 = vsub.s32 0, %v210
  %v212 = vrot.slane %v207, %v211
  %v222 = vunpack.c.l.b16 %v199
  %v223 = vunpack.c.l.b16 %v200
  %v224 = vunpack.c.l.b16 %v201
  %v225 = vunpack.c.l.b16 %v202
  %v226 = vunpack.c.l.b16 %v203
  %v227 = vunpack.c.l.b16 %v204
  %v228 = vunpack.c.l.b16 %v205
  %v229 = vunpack.c.l.b16 %v206
  %v230 = vpack.c.b16 %v223, %v222
  %v231 = vpack.c.b16 %v225, %v224
  %v232 = vpack.c.b16 %v227, %v226
  %v233 = vpack.c.b16 %v229, %v228
  %v239 = vsel %vm151, %v196, 0
  %241 = vmatprep.subr.bf16.mxu0 0
  %242 = vmatpush1.bf16.msra.mxu0 %v230
  %243 = vmatprep.subr.bf16.mxu0 0
  %244 = vmatpush1.bf16.msra.mxu0 %v231
  %245 = vmatprep.subr.bf16.mxu0 0
  %246 = vmatpush1.bf16.msra.mxu0 %v232
  %247 = vmatprep.subr.bf16.mxu0 0
  %248 = vmatpush1.bf16.msra.mxu0 %v233
  %249 = vmatprep.subr.bf16.mxu0 0
  %250 = vmatpush1.bf16.msra.mxu0 0
  %251 = vmatprep.subr.bf16.mxu0 0
  %252 = vmatpush1.bf16.msra.mxu0 0
  %253 = vmatprep.subr.bf16.mxu0 0
  %254 = vmatpush1.bf16.msra.mxu0 0
  %255 = vmatprep.subr.bf16.mxu0 0
  %256 = vmatpush1.bf16.msra.mxu0 0
  %257 = vmatprep.subr.bf16.mxu0 0
  %258 = vmatpush1.bf16.msra.mxu0 0
  %259 = vmatprep.subr.bf16.mxu0 0
  %260 = vmatpush1.bf16.msra.mxu0 0
  %261 = vmatprep.subr.bf16.mxu0 0
  %262 = vmatpush1.bf16.msra.mxu0 0
  %263 = vmatprep.subr.bf16.mxu0 0
  %264 = vmatpush1.bf16.msra.mxu0 0
  %265 = vmatprep.subr.bf16.mxu0 0
  %266 = vmatpush1.bf16.msra.mxu0 0
  %267 = vmatprep.subr.bf16.mxu0 0
  %268 = vmatpush1.bf16.msra.mxu0 0
  %269 = vmatprep.subr.bf16.mxu0 0
  %270 = vmatpush1.bf16.msra.mxu0 0
  %271 = vmatprep.subr.bf16.mxu0 0
  %272 = vmatpush1.bf16.msra.mxu0 0
  %273 = vmatprep.mubr.bf16.mxu0 0
  %274 = vmatmul.mubr.bf16.gmra.mrb[0].mxu0 %v239
  %v275 = vpop.f32.mrb[0].mxu0
  %v276 = vadd.f32 %v212, %v275
  %v277 = vpop.f32.mrb[0].mxu0
  %v278 = vpop.f32.mrb[0].mxu0
  %v279 = vpop.f32.mrb[0].mxu0
  %280 = vdwg.mxu0
  %vm281 = vcmask 58368
  %282 = vst.msk [vmem:[%s6] sm:$0x3] %vm281, %v276
  // Predicated region
  $region22: #{forward.9} parent=0 // pred_check
    _
  $region23: #{forward.9} parent=0 // pred_check_branch
    %284 = sbr.rel (0) target = $region25
  $region24: #{forward.9} parent=0 // pred_region
    _
  $region25: #{forward.9} parent=0 // pred_fallthru
    _
  // Predicated region
  $region26: #{forward.9} parent=0 // pred_check
    _
  $region27: #{forward.9} parent=0 // pred_check_branch
    %286 = sbr.rel (0) target = $region29
  $region28: #{forward.9} parent=0 // pred_region
    _
  $region29: #{forward.9} parent=0 // pred_fallthru
    _
  // Predicated region
  $region30: #{forward.9} parent=0 // pred_check
    _
  $region31: #{forward.9} parent=0 // pred_check_branch
    %288 = sbr.rel (0) target = $region33
  $region32: #{forward.9} parent=0 // pred_region
    _
  $region33: #{forward.9} parent=0 // pred_fallthru
    _
  // Predicated region
  $region34: #{forward.9} parent=0 // pred_check
    _
  $region35: #{forward.9} parent=0 // pred_check_branch
    %290 = sbr.rel (0) target = $region37
  $region36: #{forward.9} parent=0 // pred_region
    _
  $region37: #{forward.9} parent=0 // pred_fallthru
    _

// kernel: forward.10
$region0: #{forward.10}
  #allocation0 [shape = 'u32[]', space=smem, size = 0x4, offset = 0x4, fixed_abs, tag = 'smem constant byte address 0x4 - core index']
  #allocation1 [shape = 'u32[144,128]{1,0:T(1,128)}', space=vmem, size = 0x12000, scoped, tag = 'internal scratch']
  %s0 = inlined_call_operand.vmem [shape: f32[2,512], index: 0, kind: input, shape index: {}]
  %s1 = inlined_call_operand.vmem [shape: f32[2,128], index: 1, kind: input, shape index: {}]
  %s2 = inlined_call_operand.vmem [shape: f32[2,32], index: 2, kind: input, shape index: {}]
  %s3 = inlined_call_operand.vmem [shape: f32[2,8], index: 3, kind: input, shape index: {}]
  %s4 = inlined_call_operand.vmem [shape: f32[128,512], index: 4, kind: input, shape index: {}]
  %s5 = inlined_call_operand.vmem [shape: f32[32,128], index: 5, kind: input, shape index: {}]
  %s6 = inlined_call_operand.vmem [shape: f32[8,32], index: 6, kind: input, shape index: {}]
  %s7 = inlined_call_operand.vmem [shape: bf16[512,512], index: 7, kind: input, shape index: {}]
  %s8 = inlined_call_operand.vmem [shape: bf16[128,128], index: 8, kind: input, shape index: {}]
  %s9 = inlined_call_operand.vmem [shape: bf16[32,32], index: 9, kind: input, shape index: {}]
  %s10 = inlined_call_operand.vmem [shape: bf16[8,8], index: 10, kind: input, shape index: {}]
  %s11 = inlined_call_operand.vmem [shape: f32[1,512], index: 11, kind: input, shape index: {}]
  %s12 = inlined_call_operand.vmem [shape: f32[1,128], index: 12, kind: input, shape index: {}]
  %s13 = inlined_call_operand.vmem [shape: f32[1,32], index: 13, kind: input, shape index: {}]
  %s14 = inlined_call_operand.vmem [shape: f32[1,8], index: 14, kind: input, shape index: {}]
  %s15 = inlined_call_operand.vmem [shape: f32[2,512], index: 15, kind: output, shape index: {0}]
  %s16 = inlined_call_operand.vmem [shape: f32[2,128], index: 16, kind: output, shape index: {1}]
  %s17 = inlined_call_operand.vmem [shape: f32[2,32], index: 17, kind: output, shape index: {2}]
  %s18 = inlined_call_operand.vmem [shape: f32[2,8], index: 18, kind: output, shape index: {3}]
  %19 = xla_tuple %s15, %s16, %s17, %s18
  %s20 = sld [smem:[#allocation0]]
  $region94: #{forward.10} parent=0
    _
  %s22 = ssub.s32 1, %s20
  %s23 = scalar_select 0, %s22, %s20
  // Predicated region
  $region2: #{forward.10} parent=0 // pred_check
    _
  $region3: #{forward.10} parent=0 // pred_check_branch
    %25 = sbr.rel (0) target = $region5
  $region4: #{forward.10} parent=0 // pred_region
    _
  $region5: #{forward.10} parent=0 // pred_fallthru
    _
  // Predicated region
  $region6: #{forward.10} parent=0 // pred_check
    _
  $region7: #{forward.10} parent=0 // pred_check_branch
    %27 = sbr.rel (0) target = $region9
  $region8: #{forward.10} parent=0 // pred_region
    _
  $region9: #{forward.10} parent=0 // pred_fallthru
    _
  // Predicated region
  $region10: #{forward.10} parent=0 // pred_check
    _
  $region11: #{forward.10} parent=0 // pred_check_branch
    %29 = sbr.rel (0) target = $region13
  $region12: #{forward.10} parent=0 // pred_region
    _
  $region13: #{forward.10} parent=0 // pred_fallthru
    _
  // Predicated region
  $region14: #{forward.10} parent=0 // pred_check
    _
  $region15: #{forward.10} parent=0 // pred_check_branch
    %31 = sbr.rel (0) target = $region17
  $region16: #{forward.10} parent=0 // pred_region
    _
  $region17: #{forward.10} parent=0 // pred_fallthru
    _
  // Predicated region
  $region18: #{forward.10} parent=0 // pred_check
    _
  $region19: #{forward.10} parent=0 // pred_check_branch
    %33 = sbr.rel (0) target = $region21
  $region20: #{forward.10} parent=0 // pred_region
    _
  $region21: #{forward.10} parent=0 // pred_fallthru
    _
  // Predicated region
  $region22: #{forward.10} parent=0 // pred_check
    _
  $region23: #{forward.10} parent=0 // pred_check_branch
    %35 = sbr.rel (0) target = $region25
  $region24: #{forward.10} parent=0 // pred_region
    _
  $region25: #{forward.10} parent=0 // pred_fallthru
    _
  // Predicated region
  $region26: #{forward.10} parent=0 // pred_check
    _
  $region27: #{forward.10} parent=0 // pred_check_branch
    %37 = sbr.rel (0) target = $region29
  $region28: #{forward.10} parent=0 // pred_region
    _
  $region29: #{forward.10} parent=0 // pred_fallthru
    _
  // Predicated region
  $region30: #{forward.10} parent=0 // pred_check
    _
  $region31: #{forward.10} parent=0 // pred_check_branch
    %39 = sbr.rel (0) target = $region33
  $region32: #{forward.10} parent=0 // pred_region
    _
  $region33: #{forward.10} parent=0 // pred_fallthru
    _
  // Predicated region
  $region34: #{forward.10} parent=0 // pred_check
    _
  $region35: #{forward.10} parent=0 // pred_check_branch
    %41 = sbr.rel (0) target = $region37
  $region36: #{forward.10} parent=0 // pred_region
    _
  $region37: #{forward.10} parent=0 // pred_fallthru
    _
  // Predicated region
  $region38: #{forward.10} parent=0 // pred_check
    _
  $region39: #{forward.10} parent=0 // pred_check_branch
    %43 = sbr.rel (0) target = $region41
  $region40: #{forward.10} parent=0 // pred_region
    _
  $region41: #{forward.10} parent=0 // pred_fallthru
    _
  // Predicated region
  $region42: #{forward.10} parent=0 // pred_check
    _
  $region43: #{forward.10} parent=0 // pred_check_branch
    %45 = sbr.rel (0) target = $region45
  $region44: #{forward.10} parent=0 // pred_region
    _
  $region45: #{forward.10} parent=0 // pred_fallthru
    _
  // Predicated region
  $region46: #{forward.10} parent=0 // pred_check
    _
  $region47: #{forward.10} parent=0 // pred_check_branch
    %47 = sbr.rel (0) target = $region49
  $region48: #{forward.10} parent=0 // pred_region
    _
  $region49: #{forward.10} parent=0 // pred_fallthru
    _
  // Predicated region
  $region50: #{forward.10} parent=0 // pred_check
    _
  $region51: #{forward.10} parent=0 // pred_check_branch
    %49 = sbr.rel (0) target = $region53
  $region52: #{forward.10} parent=0 // pred_region
    _
  $region53: #{forward.10} parent=0 // pred_fallthru
    _
  // Predicated region
  $region54: #{forward.10} parent=0 // pred_check
    _
  $region55: #{forward.10} parent=0 // pred_check_branch
    %51 = sbr.rel (0) target = $region57
  $region56: #{forward.10} parent=0 // pred_region
    _
  $region57: #{forward.10} parent=0 // pred_fallthru
    _
  // Predicated region
  $region58: #{forward.10} parent=0 // pred_check
    _
  $region59: #{forward.10} parent=0 // pred_check_branch
    %53 = sbr.rel (0) target = $region61
  $region60: #{forward.10} parent=0 // pred_region
    _
  $region61: #{forward.10} parent=0 // pred_fallthru
    _
  %v55 = vld [vmem:[%s3] sm:$0x3]
  %v56 = vpack.c.bf16 %v55, %v55
  %v57 = vld [vmem:[%s10] sm:$0xf]
  %v58 = vld [vmem:[%s14] sm:$0x1]
  %v60 = vlaneseq
  %v61 = vshrl.u32 %v60, 7
  %v62 = vsub.s32 0, %v61
  %v63 = vrot.slane %v58, %v62
  %vm65 = vcmask 64512
  %v67 = vsel %vm65, %v56, 0
  %vm69 = vcmask 1043456
  %v71 = vsel %vm69, %v57, 0
  %73 = vmatprep.subr.bf16.mxu0 0
  %74 = vmatpush1.bf16.msra.mxu0 %v71
  %75 = vmatprep.subr.bf16.mxu0 0
  %76 = vmatpush1.bf16.msra.mxu0 0
  %77 = vmatprep.subr.bf16.mxu0 0
  %78 = vmatpush1.bf16.msra.mxu0 0
  %79 = vmatprep.subr.bf16.mxu0 0
  %80 = vmatpush1.bf16.msra.mxu0 0
  %81 = vmatprep.subr.bf16.mxu0 0
  %82 = vmatpush1.bf16.msra.mxu0 0
  %83 = vmatprep.subr.bf16.mxu0 0
  %84 = vmatpush1.bf16.msra.mxu0 0
  %85 = vmatprep.subr.bf16.mxu0 0
  %86 = vmatpush1.bf16.msra.mxu0 0
  %87 = vmatprep.subr.bf16.mxu0 0
  %88 = vmatpush1.bf16.msra.mxu0 0
  %89 = vmatprep.subr.bf16.mxu0 0
  %90 = vmatpush1.bf16.msra.mxu0 0
  %91 = vmatprep.subr.bf16.mxu0 0
  %92 = vmatpush1.bf16.msra.mxu0 0
  %93 = vmatprep.subr.bf16.mxu0 0
  %94 = vmatpush1.bf16.msra.mxu0 0
  %95 = vmatprep.subr.bf16.mxu0 0
  %96 = vmatpush1.bf16.msra.mxu0 0
  %97 = vmatprep.subr.bf16.mxu0 0
  %98 = vmatpush1.bf16.msra.mxu0 0
  %99 = vmatprep.subr.bf16.mxu0 0
  %100 = vmatpush1.bf16.msra.mxu0 0
  %101 = vmatprep.subr.bf16.mxu0 0
  %102 = vmatpush1.bf16.msra.mxu0 0
  %103 = vmatprep.subr.bf16.mxu0 0
  %104 = vmatpush1.bf16.msra.mxu0 0
  %105 = vmatprep.mubr.bf16.mxu0 0
  %106 = vmatmul.mubr.bf16.gmra.mrb[0].mxu0 %v67
  %v107 = vpop.f32.mrb[0].mxu0
  %v108 = vadd.f32 %v63, %v107
  %v109 = vpop.f32.mrb[0].mxu0
  %v110 = vpop.f32.mrb[0].mxu0
  %v111 = vpop.f32.mrb[0].mxu0
  %112 = vdwg.mxu0
  %vm113 = vcmask 58368
  %114 = vst.msk [vmem:[%s18] sm:$0x3] %vm113, %v108
  %v115 = vld [vmem:[%s2] sm:$0x3]
  %v116 = vld [vmem:[%s6] sm:$0xff]
  %v118 = vsel %vm65, %v55, 0
  %120 = vmatprep.subr.mxu0 0.0
  %121 = vmatpush1.msra.mxu0 %v116
  %122 = vmatprep.subr.mxu0 0.0
  %123 = vmatpush1.msra.mxu0 0.0
  %124 = vmatprep.subr.mxu0 0.0
  %125 = vmatpush1.msra.mxu0 0.0
  %126 = vmatprep.subr.mxu0 0.0
  %127 = vmatpush1.msra.mxu0 0.0
  %128 = vmatprep.subr.mxu0 0.0
  %129 = vmatpush1.msra.mxu0 0.0
  %130 = vmatprep.subr.mxu0 0.0
  %131 = vmatpush1.msra.mxu0 0.0
  %132 = vmatprep.subr.mxu0 0.0
  %133 = vmatpush1.msra.mxu0 0.0
  %134 = vmatprep.subr.mxu0 0.0
  %135 = vmatpush1.msra.mxu0 0.0
  %136 = vmatprep.subr.mxu0 0.0
  %137 = vmatpush1.msra.mxu0 0.0
  %138 = vmatprep.subr.mxu0 0.0
  %139 = vmatpush1.msra.mxu0 0.0
  %140 = vmatprep.subr.mxu0 0.0
  %141 = vmatpush1.msra.mxu0 0.0
  %142 = vmatprep.subr.mxu0 0.0
  %143 = vmatpush1.msra.mxu0 0.0
  %144 = vmatprep.subr.mxu0 0.0
  %145 = vmatpush1.msra.mxu0 0.0
  %146 = vmatprep.subr.mxu0 0.0
  %147 = vmatpush1.msra.mxu0 0.0
  %148 = vmatprep.subr.mxu0 0.0
  %149 = vmatpush1.msra.mxu0 0.0
  %150 = vmatprep.subr.mxu0 0.0
  %151 = vmatpush1.msra.mxu0 0.0
  %152 = vmatprep.subr.mxu0 0.0
  %153 = vmatpush1.msra.mxu0 0.0
  %154 = vmatprep.subr.mxu0 0.0
  %155 = vmatpush1.msra.mxu0 0.0
  %156 = vmatprep.subr.mxu0 0.0
  %157 = vmatpush1.msra.mxu0 0.0
  %158 = vmatprep.subr.mxu0 0.0
  %159 = vmatpush1.msra.mxu0 0.0
  %160 = vmatprep.subr.mxu0 0.0
  %161 = vmatpush1.msra.mxu0 0.0
  %162 = vmatprep.subr.mxu0 0.0
  %163 = vmatpush1.msra.mxu0 0.0
  %164 = vmatprep.subr.mxu0 0.0
  %165 = vmatpush1.msra.mxu0 0.0
  %166 = vmatprep.subr.mxu0 0.0
  %167 = vmatpush1.msra.mxu0 0.0
  %168 = vmatprep.subr.mxu0 0.0
  %169 = vmatpush1.msra.mxu0 0.0
  %170 = vmatprep.subr.mxu0 0.0
  %171 = vmatpush1.msra.mxu0 0.0
  %172 = vmatprep.subr.mxu0 0.0
  %173 = vmatpush1.msra.mxu0 0.0
  %174 = vmatprep.subr.mxu0 0.0
  %175 = vmatpush1.msra.mxu0 0.0
  %176 = vmatprep.subr.mxu0 0.0
  %177 = vmatpush1.msra.mxu0 0.0
  %178 = vmatprep.subr.mxu0 0.0
  %179 = vmatpush1.msra.mxu0 0.0
  %180 = vmatprep.subr.mxu0 0.0
  %181 = vmatpush1.msra.mxu0 0.0
  %182 = vmatprep.subr.mxu0 0.0
  %183 = vmatpush1.msra.mxu0 0.0
  %184 = vmatprep.mubr.f32.mxu0 0.0
  %185 = vmatmul.mubr.f32.gmra.mrb[0].mxu0 %v118
  %v186 = vpop.f32.mrb[0].mxu0
  %v187 = vadd.f32 0.0, %v186
  %v188 = vpop.f32.mrb[0].mxu0
  %189 = vdwg.mxu0
  %v190 = vadd.f32 %v115, %v187
  %v191 = vpack.c.bf16 %v190, %v190
  %v192 = vld [vmem:[%s9] sm:$0xf]
  %v193 = vld [vmem:[%s9 + $0x4] sm:$0xf]
  %v194 = vld [vmem:[%s9 + $0x8] sm:$0xf]
  %v195 = vld [vmem:[%s9 + $0xc] sm:$0xf]
  %v196 = vld [vmem:[%s13] sm:$0x1]
  %v198 = vlaneseq
  %v199 = vshrl.u32 %v198, 7
  %v200 = vsub.s32 0, %v199
  %v201 = vrot.slane %v196, %v200
  %v207 = vunpack.c.l.b16 %v192
  %v208 = vunpack.c.l.b16 %v193
  %v209 = vunpack.c.l.b16 %v194
  %v210 = vunpack.c.l.b16 %v195
  %v211 = vpack.c.b16 %v208, %v207
  %v212 = vpack.c.b16 %v210, %v209
  %vm215 = vcmask 261120
  %v217 = vsel %vm215, %v191, 0
  %219 = vmatprep.subr.bf16.mxu0 0
  %220 = vmatpush1.bf16.msra.mxu0 %v211
  %221 = vmatprep.subr.bf16.mxu0 0
  %222 = vmatpush1.bf16.msra.mxu0 %v212
  %223 = vmatprep.subr.bf16.mxu0 0
  %224 = vmatpush1.bf16.msra.mxu0 0
  %225 = vmatprep.subr.bf16.mxu0 0
  %226 = vmatpush1.bf16.msra.mxu0 0
  %227 = vmatprep.subr.bf16.mxu0 0
  %228 = vmatpush1.bf16.msra.mxu0 0
  %229 = vmatprep.subr.bf16.mxu0 0
  %230 = vmatpush1.bf16.msra.mxu0 0
  %231 = vmatprep.subr.bf16.mxu0 0
  %232 = vmatpush1.bf16.msra.mxu0 0
  %233 = vmatprep.subr.bf16.mxu0 0
  %234 = vmatpush1.bf16.msra.mxu0 0
  %235 = vmatprep.subr.bf16.mxu0 0
  %236 = vmatpush1.bf16.msra.mxu0 0
  %237 = vmatprep.subr.bf16.mxu0 0
  %238 = vmatpush1.bf16.msra.mxu0 0
  %239 = vmatprep.subr.bf16.mxu0 0
  %240 = vmatpush1.bf16.msra.mxu0 0
  %241 = vmatprep.subr.bf16.mxu0 0
  %242 = vmatpush1.bf16.msra.mxu0 0
  %243 = vmatprep.subr.bf16.mxu0 0
  %244 = vmatpush1.bf16.msra.mxu0 0
  %245 = vmatprep.subr.bf16.mxu0 0
  %246 = vmatpush1.bf16.msra.mxu0 0
  %247 = vmatprep.subr.bf16.mxu0 0
  %248 = vmatpush1.bf16.msra.mxu0 0
  %249 = vmatprep.subr.bf16.mxu0 0
  %250 = vmatpush1.bf16.msra.mxu0 0
  %251 = vmatprep.mubr.bf16.mxu0 0
  %252 = vmatmul.mubr.bf16.gmra.mrb[0].mxu0 %v217
  %v253 = vpop.f32.mrb[0].mxu0
  %v254 = vadd.f32 %v201, %v253
  %v255 = vpop.f32.mrb[0].mxu0
  %v256 = vpop.f32.mrb[0].mxu0
  %v257 = vpop.f32.mrb[0].mxu0
  %258 = vdwg.mxu0
  %vm259 = vcmask 254976
  %260 = vst.msk [vmem:[%s17] sm:$0x3] %vm259, %v254
  %v261 = vld [vmem:[%s1] sm:$0x3]
  %v262 = vld [vmem:[%s5] sm:$0xff]
  %v263 = vld [vmem:[%s5 + $0x8] sm:$0xff]
  %v264 = vld [vmem:[%s5 + $0x10] sm:$0xff]
  %v265 = vld [vmem:[%s5 + $0x18] sm:$0xff]
  %v267 = vsel %vm215, %v190, 0
  %269 = vmatprep.subr.mxu0 0.0
  %270 = vmatpush1.msra.mxu0 %v262
  %271 = vmatprep.subr.mxu0 0.0
  %272 = vmatpush1.msra.mxu0 %v263
  %273 = vmatprep.subr.mxu0 0.0
  %274 = vmatpush1.msra.mxu0 %v264
  %275 = vmatprep.subr.mxu0 0.0
  %276 = vmatpush1.msra.mxu0 %v265
  %277 = vmatprep.subr.mxu0 0.0
  %278 = vmatpush1.msra.mxu0 0.0
  %279 = vmatprep.subr.mxu0 0.0
  %280 = vmatpush1.msra.mxu0 0.0
  %281 = vmatprep.subr.mxu0 0.0
  %282 = vmatpush1.msra.mxu0 0.0
  %283 = vmatprep.subr.mxu0 0.0
  %284 = vmatpush1.msra.mxu0 0.0
  %285 = vmatprep.subr.mxu0 0.0
  %286 = vmatpush1.msra.mxu0 0.0
  %287 = vmatprep.subr.mxu0 0.0
  %288 = vmatpush1.msra.mxu0 0.0
  %289 = vmatprep.subr.mxu0 0.0
  %290 = vmatpush1.msra.mxu0 0.0
  %291 = vmatprep.subr.mxu0 0.0
  %292 = vmatpush1.msra.mxu0 0.0
  %293 = vmatprep.subr.mxu0 0.0
  %294 = vmatpush1.msra.mxu0 0.0
  %295 = vmatprep.subr.mxu0 0.0
  %296 = vmatpush1.msra.mxu0 0.0
  %297 = vmatprep.subr.mxu0 0.0
  %298 = vmatpush1.msra.mxu0 0.0
  %299 = vmatprep.subr.mxu0 0.0
  %300 = vmatpush1.msra.mxu0 0.0
  %301 = vmatprep.subr.mxu0 0.0
  %302 = vmatpush1.msra.mxu0 0.0
  %303 = vmatprep.subr.mxu0 0.0
  %304 = vmatpush1.msra.mxu0 0.0
  %305 = vmatprep.subr.mxu0 0.0
  %306 = vmatpush1.msra.mxu0 0.0
  %307 = vmatprep.subr.mxu0 0.0
  %308 = vmatpush1.msra.mxu0 0.0
  %309 = vmatprep.subr.mxu0 0.0
  %310 = vmatpush1.msra.mxu0 0.0
  %311 = vmatprep.subr.mxu0 0.0
  %312 = vmatpush1.msra.mxu0 0.0
  %313 = vmatprep.subr.mxu0 0.0
  %314 = vmatpush1.msra.mxu0 0.0
  %315 = vmatprep.subr.mxu0 0.0
  %316 = vmatpush1.msra.mxu0 0.0
  %317 = vmatprep.subr.mxu0 0.0
  %318 = vmatpush1.msra.mxu0 0.0
  %319 = vmatprep.subr.mxu0 0.0
  %320 = vmatpush1.msra.mxu0 0.0
  %321 = vmatprep.subr.mxu0 0.0
  %322 = vmatpush1.msra.mxu0 0.0
  %323 = vmatprep.subr.mxu0 0.0
  %324 = vmatpush1.msra.mxu0 0.0
  %325 = vmatprep.subr.mxu0 0.0
  %326 = vmatpush1.msra.mxu0 0.0
  %327 = vmatprep.subr.mxu0 0.0
  %328 = vmatpush1.msra.mxu0 0.0
  %329 = vmatprep.subr.mxu0 0.0
  %330 = vmatpush1.msra.mxu0 0.0
  %331 = vmatprep.subr.mxu0 0.0
  %332 = vmatpush1.msra.mxu0 0.0
  %333 = vmatprep.mubr.f32.mxu0 0.0
  %334 = vmatmul.mubr.f32.gmra.mrb[0].mxu0 %v267
  %v335 = vpop.f32.mrb[0].mxu0
  %v336 = vadd.f32 0.0, %v335
  %v337 = vpop.f32.mrb[0].mxu0
  %338 = vdwg.mxu0
  %v339 = vadd.f32 %v261, %v336
  %v340 = vpack.c.bf16 %v339, %v339
  %v341 = vld [vmem:[%s8] sm:$0xf]
  %v342 = vld [vmem:[%s8 + $0x4] sm:$0xf]
  %v343 = vld [vmem:[%s8 + $0x8] sm:$0xf]
  %v344 = vld [vmem:[%s8 + $0xc] sm:$0xf]
  %v345 = vld [vmem:[%s8 + $0x10] sm:$0xf]
  %v346 = vld [vmem:[%s8 + $0x14] sm:$0xf]
  %v347 = vld [vmem:[%s8 + $0x18] sm:$0xf]
  %v348 = vld [vmem:[%s8 + $0x1c] sm:$0xf]
  %v349 = vld [vmem:[%s8 + $0x20] sm:$0xf]
  %v350 = vld [vmem:[%s8 + $0x24] sm:$0xf]
  %v351 = vld [vmem:[%s8 + $0x28] sm:$0xf]
  %v352 = vld [vmem:[%s8 + $0x2c] sm:$0xf]
  %v353 = vld [vmem:[%s8 + $0x30] sm:$0xf]
  %v354 = vld [vmem:[%s8 + $0x34] sm:$0xf]
  %v355 = vld [vmem:[%s8 + $0x38] sm:$0xf]
  %v356 = vld [vmem:[%s8 + $0x3c] sm:$0xf]
  %v357 = vld [vmem:[%s12] sm:$0x1]
  %v359 = vlaneseq
  %v360 = vshrl.u32 %v359, 7
  %v361 = vsub.s32 0, %v360
  %v362 = vrot.slane %v357, %v361
  %v380 = vunpack.c.l.b16 %v341
  %v381 = vunpack.c.l.b16 %v342
  %v382 = vunpack.c.l.b16 %v343
  %v383 = vunpack.c.l.b16 %v344
  %v384 = vunpack.c.l.b16 %v345
  %v385 = vunpack.c.l.b16 %v346
  %v386 = vunpack.c.l.b16 %v347
  %v387 = vunpack.c.l.b16 %v348
  %v388 = vunpack.c.l.b16 %v349
  %v389 = vunpack.c.l.b16 %v350
  %v390 = vunpack.c.l.b16 %v351
  %v391 = vunpack.c.l.b16 %v352
  %v392 = vunpack.c.l.b16 %v353
  %v393 = vunpack.c.l.b16 %v354
  %v394 = vunpack.c.l.b16 %v355
  %v395 = vunpack.c.l.b16 %v356
  %v396 = vpack.c.b16 %v381, %v380
  %v397 = vpack.c.b16 %v383, %v382
  %v398 = vpack.c.b16 %v385, %v384
  %v399 = vpack.c.b16 %v387, %v386
  %v400 = vpack.c.b16 %v389, %v388
  %v401 = vpack.c.b16 %v391, %v390
  %v402 = vpack.c.b16 %v393, %v392
  %v403 = vpack.c.b16 %v395, %v394
  %412 = vmatprep.subr.bf16.mxu0 0
  %413 = vmatpush1.bf16.msra.mxu0 %v396
  %414 = vmatprep.subr.bf16.mxu0 0
  %415 = vmatpush1.bf16.msra.mxu0 %v397
  %416 = vmatprep.subr.bf16.mxu0 0
  %417 = vmatpush1.bf16.msra.mxu0 %v398
  %418 = vmatprep.subr.bf16.mxu0 0
  %419 = vmatpush1.bf16.msra.mxu0 %v399
  %420 = vmatprep.subr.bf16.mxu0 0
  %421 = vmatpush1.bf16.msra.mxu0 %v400
  %422 = vmatprep.subr.bf16.mxu0 0
  %423 = vmatpush1.bf16.msra.mxu0 %v401
  %424 = vmatprep.subr.bf16.mxu0 0
  %425 = vmatpush1.bf16.msra.mxu0 %v402
  %426 = vmatprep.subr.bf16.mxu0 0
  %427 = vmatpush1.bf16.msra.mxu0 %v403
  %428 = vmatprep.subr.bf16.mxu0 0
  %429 = vmatpush1.bf16.msra.mxu0 0
  %430 = vmatprep.subr.bf16.mxu0 0
  %431 = vmatpush1.bf16.msra.mxu0 0
  %432 = vmatprep.subr.bf16.mxu0 0
  %433 = vmatpush1.bf16.msra.mxu0 0
  %434 = vmatprep.subr.bf16.mxu0 0
  %435 = vmatpush1.bf16.msra.mxu0 0
  %436 = vmatprep.subr.bf16.mxu0 0
  %437 = vmatpush1.bf16.msra.mxu0 0
  %438 = vmatprep.subr.bf16.mxu0 0
  %439 = vmatpush1.bf16.msra.mxu0 0
  %440 = vmatprep.subr.bf16.mxu0 0
  %441 = vmatpush1.bf16.msra.mxu0 0
  %442 = vmatprep.subr.bf16.mxu0 0
  %443 = vmatpush1.bf16.msra.mxu0 0
  %444 = vmatprep.mubr.bf16.mxu0 0
  %445 = vmatmul.mubr.bf16.gmra.mrb[0].mxu0 %v340
  %v446 = vpop.f32.mrb[0].mxu0
  %v447 = vadd.f32 %v362, %v446
  %v448 = vpop.f32.mrb[0].mxu0
  %v449 = vpop.f32.mrb[0].mxu0
  %v450 = vpop.f32.mrb[0].mxu0
  %451 = vdwg.mxu0
  %452 = vst [vmem:[%s16] sm:$0x3] %v447
  %v453 = vld [vmem:[%s0] sm:$0xff]
  %v454 = vld [vmem:[%s4] sm:$0xff]
  %v455 = vld [vmem:[%s4 + $0x8] sm:$0xff]
  %v456 = vld [vmem:[%s4 + $0x10] sm:$0xff]
  %v457 = vld [vmem:[%s4 + $0x18] sm:$0xff]
  %v458 = vld [vmem:[%s4 + $0x20] sm:$0xff]
  %v459 = vld [vmem:[%s4 + $0x28] sm:$0xff]
  %v460 = vld [vmem:[%s4 + $0x30] sm:$0xff]
  %v461 = vld [vmem:[%s4 + $0x38] sm:$0xff]
  %v462 = vld [vmem:[%s4 + $0x40] sm:$0xff]
  %v463 = vld [vmem:[%s4 + $0x48] sm:$0xff]
  %v464 = vld [vmem:[%s4 + $0x50] sm:$0xff]
  %v465 = vld [vmem:[%s4 + $0x58] sm:$0xff]
  %v466 = vld [vmem:[%s4 + $0x60] sm:$0xff]
  %v467 = vld [vmem:[%s4 + $0x68] sm:$0xff]
  %v468 = vld [vmem:[%s4 + $0x70] sm:$0xff]
  %v469 = vld [vmem:[%s4 + $0x78] sm:$0xff]
  %v470 = vld [vmem:[%s4 + $0x80] sm:$0xff]
  %v471 = vld [vmem:[%s4 + $0x88] sm:$0xff]
  %v472 = vld [vmem:[%s4 + $0x90] sm:$0xff]
  %v473 = vld [vmem:[%s4 + $0x98] sm:$0xff]
  %v474 = vld [vmem:[%s4 + $0xa0] sm:$0xff]
  %v475 = vld [vmem:[%s4 + $0xa8] sm:$0xff]
  %v476 = vld [vmem:[%s4 + $0xb0] sm:$0xff]
  %v477 = vld [vmem:[%s4 + $0xb8] sm:$0xff]
  %v478 = vld [vmem:[%s4 + $0xc0] sm:$0xff]
  %v479 = vld [vmem:[%s4 + $0xc8] sm:$0xff]
  %v480 = vld [vmem:[%s4 + $0xd0] sm:$0xff]
  %v481 = vld [vmem:[%s4 + $0xd8] sm:$0xff]
  %v482 = vld [vmem:[%s4 + $0xe0] sm:$0xff]
  %v483 = vld [vmem:[%s4 + $0xe8] sm:$0xff]
  %v484 = vld [vmem:[%s4 + $0xf0] sm:$0xff]
  %v485 = vld [vmem:[%s4 + $0xf8] sm:$0xff]
  %v486 = vld [vmem:[%s4 + $0x100] sm:$0xff]
  %v487 = vld [vmem:[%s4 + $0x108] sm:$0xff]
  %v488 = vld [vmem:[%s4 + $0x110] sm:$0xff]
  %v489 = vld [vmem:[%s4 + $0x118] sm:$0xff]
  %v490 = vld [vmem:[%s4 + $0x120] sm:$0xff]
  %v491 = vld [vmem:[%s4 + $0x128] sm:$0xff]
  %v492 = vld [vmem:[%s4 + $0x130] sm:$0xff]
  %v493 = vld [vmem:[%s4 + $0x138] sm:$0xff]
  %v494 = vld [vmem:[%s4 + $0x140] sm:$0xff]
  %v495 = vld [vmem:[%s4 + $0x148] sm:$0xff]
  %v496 = vld [vmem:[%s4 + $0x150] sm:$0xff]
  %v497 = vld [vmem:[%s4 + $0x158] sm:$0xff]
  %v498 = vld [vmem:[%s4 + $0x160] sm:$0xff]
  %v499 = vld [vmem:[%s4 + $0x168] sm:$0xff]
  %v500 = vld [vmem:[%s4 + $0x170] sm:$0xff]
  %v501 = vld [vmem:[%s4 + $0x178] sm:$0xff]
  %v502 = vld [vmem:[%s4 + $0x180] sm:$0xff]
  %v503 = vld [vmem:[%s4 + $0x188] sm:$0xff]
  %v504 = vld [vmem:[%s4 + $0x190] sm:$0xff]
  %v505 = vld [vmem:[%s4 + $0x198] sm:$0xff]
  %v506 = vld [vmem:[%s4 + $0x1a0] sm:$0xff]
  %v507 = vld [vmem:[%s4 + $0x1a8] sm:$0xff]
  %v508 = vld [vmem:[%s4 + $0x1b0] sm:$0xff]
  %v509 = vld [vmem:[%s4 + $0x1b8] sm:$0xff]
  %v510 = vld [vmem:[%s4 + $0x1c0] sm:$0xff]
  %v511 = vld [vmem:[%s4 + $0x1c8] sm:$0xff]
  %v512 = vld [vmem:[%s4 + $0x1d0] sm:$0xff]
  %v513 = vld [vmem:[%s4 + $0x1d8] sm:$0xff]
  %v514 = vld [vmem:[%s4 + $0x1e0] sm:$0xff]
  %v515 = vld [vmem:[%s4 + $0x1e8] sm:$0xff]
  %v516 = vld [vmem:[%s4 + $0x1f0] sm:$0xff]
  %v517 = vld [vmem:[%s4 + $0x1f8] sm:$0xff]
  %518 = vmatprep.subr.mxu0 %v455
  %519 = vmatpush1.msra.mxu0 %v454
  %520 = vmatprep.subr.mxu0 %v459
  %521 = vmatpush1.msra.mxu0 %v458
  %522 = vmatprep.subr.mxu0 %v463
  %523 = vmatpush1.msra.mxu0 %v462
  %524 = vmatprep.subr.mxu0 %v467
  %525 = vmatpush1.msra.mxu0 %v466
  %526 = vmatprep.subr.mxu0 %v471
  %527 = vmatpush1.msra.mxu0 %v470
  %528 = vmatprep.subr.mxu0 %v475
  %529 = vmatpush1.msra.mxu0 %v474
  %530 = vmatprep.subr.mxu0 %v479
  %531 = vmatpush1.msra.mxu0 %v478
  %532 = vmatprep.subr.mxu0 %v483
  %533 = vmatpush1.msra.mxu0 %v482
  %534 = vmatprep.subr.mxu0 %v487
  %535 = vmatpush1.msra.mxu0 %v486
  %536 = vmatprep.subr.mxu0 %v491
  %537 = vmatpush1.msra.mxu0 %v490
  %538 = vmatprep.subr.mxu0 %v495
  %539 = vmatpush1.msra.mxu0 %v494
  %540 = vmatprep.subr.mxu0 %v499
  %541 = vmatpush1.msra.mxu0 %v498
  %542 = vmatprep.subr.mxu0 %v503
  %543 = vmatpush1.msra.mxu0 %v502
  %544 = vmatprep.subr.mxu0 %v507
  %545 = vmatpush1.msra.mxu0 %v506
  %546 = vmatprep.subr.mxu0 %v511
  %547 = vmatpush1.msra.mxu0 %v510
  %548 = vmatprep.subr.mxu0 %v515
  %549 = vmatpush1.msra.mxu0 %v514
  %550 = vmatprep.subr.mxu0 0.0
  %551 = vmatpush1.msra.mxu0 0.0
  %552 = vmatprep.subr.mxu0 0.0
  %553 = vmatpush1.msra.mxu0 0.0
  %554 = vmatprep.subr.mxu0 0.0
  %555 = vmatpush1.msra.mxu0 0.0
  %556 = vmatprep.subr.mxu0 0.0
  %557 = vmatpush1.msra.mxu0 0.0
  %558 = vmatprep.subr.mxu0 0.0
  %559 = vmatpush1.msra.mxu0 0.0
  %560 = vmatprep.subr.mxu0 0.0
  %561 = vmatpush1.msra.mxu0 0.0
  %562 = vmatprep.subr.mxu0 0.0
  %563 = vmatpush1.msra.mxu0 0.0
  %564 = vmatprep.subr.mxu0 0.0
  %565 = vmatpush1.msra.mxu0 0.0
  %566 = vmatprep.subr.mxu0 0.0
  %567 = vmatpush1.msra.mxu0 0.0
  %568 = vmatprep.subr.mxu0 0.0
  %569 = vmatpush1.msra.mxu0 0.0
  %570 = vmatprep.subr.mxu0 0.0
  %571 = vmatpush1.msra.mxu0 0.0
  %572 = vmatprep.subr.mxu0 0.0
  %573 = vmatpush1.msra.mxu0 0.0
  %574 = vmatprep.subr.mxu0 0.0
  %575 = vmatpush1.msra.mxu0 0.0
  %576 = vmatprep.subr.mxu0 0.0
  %577 = vmatpush1.msra.mxu0 0.0
  %578 = vmatprep.subr.mxu0 0.0
  %579 = vmatpush1.msra.mxu0 0.0
  %580 = vmatprep.subr.mxu0 0.0
  %581 = vmatpush1.msra.mxu0 0.0
  %582 = vmatprep.mubr.f32.mxu0 0.0
  %583 = vmatmul.mubr.f32.gmra.mrb[0].mxu0 %v339
  %v584 = vpop.f32.mrb[0].mxu0
  %v585 = vadd.f32 0.0, %v584
  %v586 = vpop.f32.mrb[0].mxu0
  %v587 = vadd.f32 0.0, %v586
  %588 = vdwg.mxu0
  %589 = vmatprep.subr.mxu0 %v457
  %590 = vmatpush1.msra.mxu0 %v456
  %591 = vmatprep.subr.mxu0 %v461
  %592 = vmatpush1.msra.mxu0 %v460
  %593 = vmatprep.subr.mxu0 %v465
  %594 = vmatpush1.msra.mxu0 %v464
  %595 = vmatprep.subr.mxu0 %v469
  %596 = vmatpush1.msra.mxu0 %v468
  %597 = vmatprep.subr.mxu0 %v473
  %598 = vmatpush1.msra.mxu0 %v472
  %599 = vmatprep.subr.mxu0 %v477
  %600 = vmatpush1.msra.mxu0 %v476
  %601 = vmatprep.subr.mxu0 %v481
  %602 = vmatpush1.msra.mxu0 %v480
  %603 = vmatprep.subr.mxu0 %v485
  %604 = vmatpush1.msra.mxu0 %v484
  %605 = vmatprep.subr.mxu0 %v489
  %606 = vmatpush1.msra.mxu0 %v488
  %607 = vmatprep.subr.mxu0 %v493
  %608 = vmatpush1.msra.mxu0 %v492
  %609 = vmatprep.subr.mxu0 %v497
  %610 = vmatpush1.msra.mxu0 %v496
  %611 = vmatprep.subr.mxu0 %v501
  %612 = vmatpush1.msra.mxu0 %v500
  %613 = vmatprep.subr.mxu0 %v505
  %614 = vmatpush1.msra.mxu0 %v504
  %615 = vmatprep.subr.mxu0 %v509
  %616 = vmatpush1.msra.mxu0 %v508
  %617 = vmatprep.subr.mxu0 %v513
  %618 = vmatpush1.msra.mxu0 %v512
  %619 = vmatprep.subr.mxu0 %v517
  %620 = vmatpush1.msra.mxu0 %v516
  %621 = vmatprep.subr.mxu0 0.0
  %622 = vmatpush1.msra.mxu0 0.0
  %623 = vmatprep.subr.mxu0 0.0
  %624 = vmatpush1.msra.mxu0 0.0
  %625 = vmatprep.subr.mxu0 0.0
  %626 = vmatpush1.msra.mxu0 0.0
  %627 = vmatprep.subr.mxu0 0.0
  %628 = vmatpush1.msra.mxu0 0.0
  %629 = vmatprep.subr.mxu0 0.0
  %630 = vmatpush1.msra.mxu0 0.0
  %631 = vmatprep.subr.mxu0 0.0
  %632 = vmatpush1.msra.mxu0 0.0
  %633 = vmatprep.subr.mxu0 0.0
  %634 = vmatpush1.msra.mxu0 0.0
  %635 = vmatprep.subr.mxu0 0.0
  %636 = vmatpush1.msra.mxu0 0.0
  %637 = vmatprep.subr.mxu0 0.0
  %638 = vmatpush1.msra.mxu0 0.0
  %639 = vmatprep.subr.mxu0 0.0
  %640 = vmatpush1.msra.mxu0 0.0
  %641 = vmatprep.subr.mxu0 0.0
  %642 = vmatpush1.msra.mxu0 0.0
  %643 = vmatprep.subr.mxu0 0.0
  %644 = vmatpush1.msra.mxu0 0.0
  %645 = vmatprep.subr.mxu0 0.0
  %646 = vmatpush1.msra.mxu0 0.0
  %647 = vmatprep.subr.mxu0 0.0
  %648 = vmatpush1.msra.mxu0 0.0
  %649 = vmatprep.subr.mxu0 0.0
  %650 = vmatpush1.msra.mxu0 0.0
  %651 = vmatprep.subr.mxu0 0.0
  %652 = vmatpush1.msra.mxu0 0.0
  %653 = vmatprep.mubr.f32.mxu0 0.0
  %654 = vmatmul.mubr.f32.gmra.mrb[0].mxu0 %v339
  %v655 = vpop.f32.mrb[0].mxu0
  %v656 = vadd.f32 0.0, %v655
  %v657 = vpop.f32.mrb[0].mxu0
  %v658 = vadd.f32 0.0, %v657
  %659 = vdwg.mxu0
  %v664 = vcombine.low %v585, %v587
  %v665 = vcombine.low %v656, %v658
  %v667 = vunpack.c.l.s4 1983009808
  %v668 = vunpack.c.0.s8 %v667
  %v669 = vlaneseq
  %v670 = vshrl.u32 %v669, 7
  %v671 = vsub.s32 %v668, %v670
  %v672 = vrot.slane %v664, %v671
  %v674 = vunpack.c.l.s4 1983009808
  %v675 = vunpack.c.0.s8 %v674
  %v676 = vlaneseq
  %v677 = vshrl.u32 %v676, 7
  %v678 = vsub.s32 %v675, %v677
  %v679 = vrot.slane %v665, %v678
  %v680 = vcombine.low %v672, %v679
  %v682 = vadd.f32 %v453, %v680
  %v684 = vcombine.high %v682, %v682
  %v686 = vunpack.c.l.s4 1983009808
  %v687 = vunpack.c.0.s8 %v686
  %v688 = vlaneseq
  %v689 = vshrl.u32 %v688, 7
  %v690 = vsub.s32 %v687, %v689
  %v691 = vrot.slane %v682, %v690
  %v693 = vunpack.c.l.s4 1983009808
  %v694 = vunpack.c.0.s8 %v693
  %v695 = vlaneseq
  %v696 = vshrl.u32 %v695, 7
  %v697 = vsub.s32 %v694, %v696
  %v698 = vrot.slane %v684, %v697
  %v699 = vcombine.high %v691, %v691
  %v700 = vcombine.high %v698, %v698
  %v705 = vpack.c.bf16 %v691, %v691
  %v706 = vpack.c.bf16 %v699, %v699
  %v707 = vpack.c.bf16 %v698, %v698
  %v708 = vpack.c.bf16 %v700, %v700
  %v709 = vld [vmem:[%s7] sm:$0xff]
  %v710 = vld [vmem:[%s7 + $0x8] sm:$0xff]
  %v711 = vld [vmem:[%s7 + $0x10] sm:$0xff]
  %v712 = vld [vmem:[%s7 + $0x18] sm:$0xff]
  %v713 = vld [vmem:[%s7 + $0x20] sm:$0xff]
  %v714 = vld [vmem:[%s7 + $0x28] sm:$0xff]
  %v715 = vld [vmem:[%s7 + $0x30] sm:$0xff]
  %v716 = vld [vmem:[%s7 + $0x38] sm:$0xff]
  %v717 = vld [vmem:[%s7 + $0x40] sm:$0xff]
  %v718 = vld [vmem:[%s7 + $0x48] sm:$0xff]
  %v719 = vld [vmem:[%s7 + $0x50] sm:$0xff]
  %v720 = vld [vmem:[%s7 + $0x58] sm:$0xff]
  %v721 = vld [vmem:[%s7 + $0x60] sm:$0xff]
  %v722 = vld [vmem:[%s7 + $0x68] sm:$0xff]
  %v723 = vld [vmem:[%s7 + $0x70] sm:$0xff]
  %v724 = vld [vmem:[%s7 + $0x78] sm:$0xff]
  %v725 = vld [vmem:[%s7 + $0x80] sm:$0xff]
  %v726 = vld [vmem:[%s7 + $0x88] sm:$0xff]
  %v727 = vld [vmem:[%s7 + $0x90] sm:$0xff]
  %v728 = vld [vmem:[%s7 + $0x98] sm:$0xff]
  %v729 = vld [vmem:[%s7 + $0xa0] sm:$0xff]
  %v730 = vld [vmem:[%s7 + $0xa8] sm:$0xff]
  %v731 = vld [vmem:[%s7 + $0xb0] sm:$0xff]
  %v732 = vld [vmem:[%s7 + $0xb8] sm:$0xff]
  %v733 = vld [vmem:[%s7 + $0xc0] sm:$0xff]
  %v734 = vld [vmem:[%s7 + $0xc8] sm:$0xff]
  %v735 = vld [vmem:[%s7 + $0xd0] sm:$0xff]
  %v736 = vld [vmem:[%s7 + $0xd8] sm:$0xff]
  %v737 = vld [vmem:[%s7 + $0xe0] sm:$0xff]
  %v738 = vld [vmem:[%s7 + $0xe8] sm:$0xff]
  %v739 = vld [vmem:[%s7 + $0xf0] sm:$0xff]
  %v740 = vld [vmem:[%s7 + $0xf8] sm:$0xff]
  %v741 = vld [vmem:[%s7 + $0x100] sm:$0xff]
  %v742 = vld [vmem:[%s7 + $0x108] sm:$0xff]
  %v743 = vld [vmem:[%s7 + $0x110] sm:$0xff]
  %v744 = vld [vmem:[%s7 + $0x118] sm:$0xff]
  %v745 = vld [vmem:[%s7 + $0x120] sm:$0xff]
  %v746 = vld [vmem:[%s7 + $0x128] sm:$0xff]
  %v747 = vld [vmem:[%s7 + $0x130] sm:$0xff]
  %v748 = vld [vmem:[%s7 + $0x138] sm:$0xff]
  %v749 = vld [vmem:[%s7 + $0x140] sm:$0xff]
  %v750 = vld [vmem:[%s7 + $0x148] sm:$0xff]
  %v751 = vld [vmem:[%s7 + $0x150] sm:$0xff]
  %v752 = vld [vmem:[%s7 + $0x158] sm:$0xff]
  %v753 = vld [vmem:[%s7 + $0x160] sm:$0xff]
  %v754 = vld [vmem:[%s7 + $0x168] sm:$0xff]
  %v755 = vld [vmem:[%s7 + $0x170] sm:$0xff]
  %v756 = vld [vmem:[%s7 + $0x178] sm:$0xff]
  %v757 = vld [vmem:[%s7 + $0x180] sm:$0xff]
  %v758 = vld [vmem:[%s7 + $0x188] sm:$0xff]
  %v759 = vld [vmem:[%s7 + $0x190] sm:$0xff]
  %v760 = vld [vmem:[%s7 + $0x198] sm:$0xff]
  %v761 = vld [vmem:[%s7 + $0x1a0] sm:$0xff]
  %v762 = vld [vmem:[%s7 + $0x1a8] sm:$0xff]
  %v763 = vld [vmem:[%s7 + $0x1b0] sm:$0xff]
  %v764 = vld [vmem:[%s7 + $0x1b8] sm:$0xff]
  %v765 = vld [vmem:[%s7 + $0x1c0] sm:$0xff]
  %v766 = vld [vmem:[%s7 + $0x1c8] sm:$0xff]
  %v767 = vld [vmem:[%s7 + $0x1d0] sm:$0xff]
  %v768 = vld [vmem:[%s7 + $0x1d8] sm:$0xff]
  %v769 = vld [vmem:[%s7 + $0x1e0] sm:$0xff]
  %v770 = vld [vmem:[%s7 + $0x1e8] sm:$0xff]
  %v771 = vld [vmem:[%s7 + $0x1f0] sm:$0xff]
  %v772 = vld [vmem:[%s7 + $0x1f8] sm:$0xff]
  %v773 = vld [vmem:[%s7 + $0x200] sm:$0xff]
  %v774 = vld [vmem:[%s7 + $0x208] sm:$0xff]
  %v775 = vld [vmem:[%s7 + $0x210] sm:$0xff]
  %v776 = vld [vmem:[%s7 + $0x218] sm:$0xff]
  %v777 = vld [vmem:[%s7 + $0x220] sm:$0xff]
  %v778 = vld [vmem:[%s7 + $0x228] sm:$0xff]
  %v779 = vld [vmem:[%s7 + $0x230] sm:$0xff]
  %v780 = vld [vmem:[%s7 + $0x238] sm:$0xff]
  %v781 = vld [vmem:[%s7 + $0x240] sm:$0xff]
  %v782 = vld [vmem:[%s7 + $0x248] sm:$0xff]
  %v783 = vld [vmem:[%s7 + $0x250] sm:$0xff]
  %v784 = vld [vmem:[%s7 + $0x258] sm:$0xff]
  %v785 = vld [vmem:[%s7 + $0x260] sm:$0xff]
  %v786 = vld [vmem:[%s7 + $0x268] sm:$0xff]
  %v787 = vld [vmem:[%s7 + $0x270] sm:$0xff]
  %v788 = vld [vmem:[%s7 + $0x278] sm:$0xff]
  %v789 = vld [vmem:[%s7 + $0x280] sm:$0xff]
  %v790 = vld [vmem:[%s7 + $0x288] sm:$0xff]
  %v791 = vld [vmem:[%s7 + $0x290] sm:$0xff]
  %v792 = vld [vmem:[%s7 + $0x298] sm:$0xff]
  %v793 = vld [vmem:[%s7 + $0x2a0] sm:$0xff]
  %v794 = vld [vmem:[%s7 + $0x2a8] sm:$0xff]
  %v795 = vld [vmem:[%s7 + $0x2b0] sm:$0xff]
  %v796 = vld [vmem:[%s7 + $0x2b8] sm:$0xff]
  %v797 = vld [vmem:[%s7 + $0x2c0] sm:$0xff]
  %v798 = vld [vmem:[%s7 + $0x2c8] sm:$0xff]
  %v799 = vld [vmem:[%s7 + $0x2d0] sm:$0xff]
  %v800 = vld [vmem:[%s7 + $0x2d8] sm:$0xff]
  %v801 = vld [vmem:[%s7 + $0x2e0] sm:$0xff]
  %v802 = vld [vmem:[%s7 + $0x2e8] sm:$0xff]
  %v803 = vld [vmem:[%s7 + $0x2f0] sm:$0xff]
  %v804 = vld [vmem:[%s7 + $0x2f8] sm:$0xff]
  %v805 = vld [vmem:[%s7 + $0x300] sm:$0xff]
  %v806 = vld [vmem:[%s7 + $0x308] sm:$0xff]
  %v807 = vld [vmem:[%s7 + $0x310] sm:$0xff]
  %v808 = vld [vmem:[%s7 + $0x318] sm:$0xff]
  %v809 = vld [vmem:[%s7 + $0x320] sm:$0xff]
  %v810 = vld [vmem:[%s7 + $0x328] sm:$0xff]
  %v811 = vld [vmem:[%s7 + $0x330] sm:$0xff]
  %v812 = vld [vmem:[%s7 + $0x338] sm:$0xff]
  %v813 = vld [vmem:[%s7 + $0x340] sm:$0xff]
  %v814 = vld [vmem:[%s7 + $0x348] sm:$0xff]
  %v815 = vld [vmem:[%s7 + $0x350] sm:$0xff]
  %v816 = vld [vmem:[%s7 + $0x358] sm:$0xff]
  %v817 = vld [vmem:[%s7 + $0x360] sm:$0xff]
  %v818 = vld [vmem:[%s7 + $0x368] sm:$0xff]
  %v819 = vld [vmem:[%s7 + $0x370] sm:$0xff]
  %v820 = vld [vmem:[%s7 + $0x378] sm:$0xff]
  %v821 = vld [vmem:[%s7 + $0x380] sm:$0xff]
  %v822 = vld [vmem:[%s7 + $0x388] sm:$0xff]
  %v823 = vld [vmem:[%s7 + $0x390] sm:$0xff]
  %v824 = vld [vmem:[%s7 + $0x398] sm:$0xff]
  %v825 = vld [vmem:[%s7 + $0x3a0] sm:$0xff]
  %v826 = vld [vmem:[%s7 + $0x3a8] sm:$0xff]
  %v827 = vld [vmem:[%s7 + $0x3b0] sm:$0xff]
  %v828 = vld [vmem:[%s7 + $0x3b8] sm:$0xff]
  %v829 = vld [vmem:[%s7 + $0x3c0] sm:$0xff]
  %v830 = vld [vmem:[%s7 + $0x3c8] sm:$0xff]
  %v831 = vld [vmem:[%s7 + $0x3d0] sm:$0xff]
  %v832 = vld [vmem:[%s7 + $0x3d8] sm:$0xff]
  %v833 = vld [vmem:[%s7 + $0x3e0] sm:$0xff]
  %v834 = vld [vmem:[%s7 + $0x3e8] sm:$0xff]
  %v835 = vld [vmem:[%s7 + $0x3f0] sm:$0xff]
  %v836 = vld [vmem:[%s7 + $0x3f8] sm:$0xff]
  %v837 = vld [vmem:[%s11] sm:$0xf]
  %v839 = vlaneseq
  %v840 = vshrl.u32 %v839, 7
  %v841 = vsub.s32 0, %v840
  %v842 = vrot.slane %v837, %v841
  %v843 = vlaneseq
  %v844 = vshrl.u32 %v843, 7
  %v845 = vsub.s32 1, %v844
  %v846 = vrot.slane %v837, %v845
  %v847 = vlaneseq
  %v848 = vshrl.u32 %v847, 7
  %v849 = vsub.s32 2, %v848
  %v850 = vrot.slane %v837, %v849
  %v851 = vlaneseq
  %v852 = vshrl.u32 %v851, 7
  %v853 = vsub.s32 3, %v852
  %v854 = vrot.slane %v837, %v853
  %v987 = vunpack.c.l.b16 %v709
  %v988 = vunpack.c.h.b16 %v709
  %v989 = vunpack.c.l.b16 %v710
  %v990 = vunpack.c.h.b16 %v710
  %v991 = vunpack.c.l.b16 %v711
  %v992 = vunpack.c.h.b16 %v711
  %v993 = vunpack.c.l.b16 %v712
  %v994 = vunpack.c.h.b16 %v712
  %v995 = vunpack.c.l.b16 %v713
  %v996 = vunpack.c.h.b16 %v713
  %v997 = vunpack.c.l.b16 %v714
  %v998 = vunpack.c.h.b16 %v714
  %v999 = vunpack.c.l.b16 %v715
  %v1000 = vunpack.c.h.b16 %v715
  %v1001 = vunpack.c.l.b16 %v716
  %v1002 = vunpack.c.h.b16 %v716
  %v1003 = vunpack.c.l.b16 %v717
  %v1004 = vunpack.c.h.b16 %v717
  %v1005 = vunpack.c.l.b16 %v718
  %v1006 = vunpack.c.h.b16 %v718
  %v1007 = vunpack.c.l.b16 %v719
  %v1008 = vunpack.c.h.b16 %v719
  %v1009 = vunpack.c.l.b16 %v720
  %v1010 = vunpack.c.h.b16 %v720
  %v1011 = vunpack.c.l.b16 %v721
  %v1012 = vunpack.c.h.b16 %v721
  %v1013 = vunpack.c.l.b16 %v722
  %v1014 = vunpack.c.h.b16 %v722
  %v1015 = vunpack.c.l.b16 %v723
  %v1016 = vunpack.c.h.b16 %v723
  %v1017 = vunpack.c.l.b16 %v724
  %v1018 = vunpack.c.h.b16 %v724
  %v1019 = vunpack.c.l.b16 %v725
  %v1020 = vunpack.c.h.b16 %v725
  %v1021 = vunpack.c.l.b16 %v726
  %v1022 = vunpack.c.h.b16 %v726
  %v1023 = vunpack.c.l.b16 %v727
  %v1024 = vunpack.c.h.b16 %v727
  %v1025 = vunpack.c.l.b16 %v728
  %v1026 = vunpack.c.h.b16 %v728
  %v1027 = vunpack.c.l.b16 %v729
  %v1028 = vunpack.c.h.b16 %v729
  %v1029 = vunpack.c.l.b16 %v730
  %v1030 = vunpack.c.h.b16 %v730
  %v1031 = vunpack.c.l.b16 %v731
  %v1032 = vunpack.c.h.b16 %v731
  %v1033 = vunpack.c.l.b16 %v732
  %v1034 = vunpack.c.h.b16 %v732
  %v1035 = vunpack.c.l.b16 %v733
  %v1036 = vunpack.c.h.b16 %v733
  %v1037 = vunpack.c.l.b16 %v734
  %v1038 = vunpack.c.h.b16 %v734
  %v1039 = vunpack.c.l.b16 %v735
  %v1040 = vunpack.c.h.b16 %v735
  %v1041 = vunpack.c.l.b16 %v736
  %v1042 = vunpack.c.h.b16 %v736
  %v1043 = vunpack.c.l.b16 %v737
  %v1044 = vunpack.c.h.b16 %v737
  %v1045 = vunpack.c.l.b16 %v738
  %v1046 = vunpack.c.h.b16 %v738
  %v1047 = vunpack.c.l.b16 %v739
  %v1048 = vunpack.c.h.b16 %v739
  %v1049 = vunpack.c.l.b16 %v740
  %v1050 = vunpack.c.h.b16 %v740
  %v1051 = vunpack.c.l.b16 %v741
  %v1052 = vunpack.c.h.b16 %v741
  %v1053 = vunpack.c.l.b16 %v742
  %v1054 = vunpack.c.h.b16 %v742
  %v1055 = vunpack.c.l.b16 %v743
  %v1056 = vunpack.c.h.b16 %v743
  %v1057 = vunpack.c.l.b16 %v744
  %v1058 = vunpack.c.h.b16 %v744
  %v1059 = vunpack.c.l.b16 %v745
  %v1060 = vunpack.c.h.b16 %v745
  %v1061 = vunpack.c.l.b16 %v746
  %v1062 = vunpack.c.h.b16 %v746
  %v1063 = vunpack.c.l.b16 %v747
  %v1064 = vunpack.c.h.b16 %v747
  %v1065 = vunpack.c.l.b16 %v748
  %v1066 = vunpack.c.h.b16 %v748
  %v1067 = vunpack.c.l.b16 %v749
  %v1068 = vunpack.c.h.b16 %v749
  %v1069 = vunpack.c.l.b16 %v750
  %v1070 = vunpack.c.h.b16 %v750
  %v1071 = vunpack.c.l.b16 %v751
  %v1072 = vunpack.c.h.b16 %v751
  %v1073 = vunpack.c.l.b16 %v752
  %v1074 = vunpack.c.h.b16 %v752
  %v1075 = vunpack.c.l.b16 %v753
  %v1076 = vunpack.c.h.b16 %v753
  %v1077 = vunpack.c.l.b16 %v754
  %v1078 = vunpack.c.h.b16 %v754
  %v1079 = vunpack.c.l.b16 %v755
  %v1080 = vunpack.c.h.b16 %v755
  %v1081 = vunpack.c.l.b16 %v756
  %v1082 = vunpack.c.h.b16 %v756
  %v1083 = vunpack.c.l.b16 %v757
  %v1084 = vunpack.c.h.b16 %v757
  %v1085 = vunpack.c.l.b16 %v758
  %v1086 = vunpack.c.h.b16 %v758
  %v1087 = vunpack.c.l.b16 %v759
  %v1088 = vunpack.c.h.b16 %v759
  %v1089 = vunpack.c.l.b16 %v760
  %v1090 = vunpack.c.h.b16 %v760
  %v1091 = vunpack.c.l.b16 %v761
  %v1092 = vunpack.c.h.b16 %v761
  %v1093 = vunpack.c.l.b16 %v762
  %v1094 = vunpack.c.h.b16 %v762
  %v1095 = vunpack.c.l.b16 %v763
  %v1096 = vunpack.c.h.b16 %v763
  %v1097 = vunpack.c.l.b16 %v764
  %v1098 = vunpack.c.h.b16 %v764
  %v1099 = vunpack.c.l.b16 %v765
  %v1100 = vunpack.c.h.b16 %v765
  %v1101 = vunpack.c.l.b16 %v766
  %v1102 = vunpack.c.h.b16 %v766
  %v1103 = vunpack.c.l.b16 %v767
  %v1104 = vunpack.c.h.b16 %v767
  %v1105 = vunpack.c.l.b16 %v768
  %v1106 = vunpack.c.h.b16 %v768
  %v1107 = vunpack.c.l.b16 %v769
  %v1108 = vunpack.c.h.b16 %v769
  %v1109 = vunpack.c.l.b16 %v770
  %v1110 = vunpack.c.h.b16 %v770
  %v1111 = vunpack.c.l.b16 %v771
  %v1112 = vunpack.c.h.b16 %v771
  %v1113 = vunpack.c.l.b16 %v772
  %v1114 = vunpack.c.h.b16 %v772
  %v1115 = vunpack.c.l.b16 %v773
  %v1116 = vunpack.c.h.b16 %v773
  %v1117 = vunpack.c.l.b16 %v774
  %v1118 = vunpack.c.h.b16 %v774
  %v1119 = vunpack.c.l.b16 %v775
  %v1120 = vunpack.c.h.b16 %v775
  %v1121 = vunpack.c.l.b16 %v776
  %v1122 = vunpack.c.h.b16 %v776
  %v1123 = vunpack.c.l.b16 %v777
  %v1124 = vunpack.c.h.b16 %v777
  %v1125 = vunpack.c.l.b16 %v778
  %v1126 = vunpack.c.h.b16 %v778
  %v1127 = vunpack.c.l.b16 %v779
  %v1128 = vunpack.c.h.b16 %v779
  %v1129 = vunpack.c.l.b16 %v780
  %v1130 = vunpack.c.h.b16 %v780
  %v1131 = vunpack.c.l.b16 %v781
  %v1132 = vunpack.c.h.b16 %v781
  %v1133 = vunpack.c.l.b16 %v782
  %v1134 = vunpack.c.h.b16 %v782
  %v1135 = vunpack.c.l.b16 %v783
  %v1136 = vunpack.c.h.b16 %v783
  %v1137 = vunpack.c.l.b16 %v784
  %v1138 = vunpack.c.h.b16 %v784
  %v1139 = vunpack.c.l.b16 %v785
  %v1140 = vunpack.c.h.b16 %v785
  %v1141 = vunpack.c.l.b16 %v786
  %v1142 = vunpack.c.h.b16 %v786
  %v1143 = vunpack.c.l.b16 %v787
  %v1144 = vunpack.c.h.b16 %v787
  %v1145 = vunpack.c.l.b16 %v788
  %v1146 = vunpack.c.h.b16 %v788
  %v1147 = vunpack.c.l.b16 %v789
  %v1148 = vunpack.c.h.b16 %v789
  %v1149 = vunpack.c.l.b16 %v790
  %v1150 = vunpack.c.h.b16 %v790
  %v1151 = vunpack.c.l.b16 %v791
  %v1152 = vunpack.c.h.b16 %v791
  %v1153 = vunpack.c.l.b16 %v792
  %v1154 = vunpack.c.h.b16 %v792
  %v1155 = vunpack.c.l.b16 %v793
  %v1156 = vunpack.c.h.b16 %v793
  %v1157 = vunpack.c.l.b16 %v794
  %v1158 = vunpack.c.h.b16 %v794
  %v1159 = vunpack.c.l.b16 %v795
  %v1160 = vunpack.c.h.b16 %v795
  %v1161 = vunpack.c.l.b16 %v796
  %v1162 = vunpack.c.h.b16 %v796
  %v1163 = vunpack.c.l.b16 %v797
  %v1164 = vunpack.c.h.b16 %v797
  %v1165 = vunpack.c.l.b16 %v798
  %v1166 = vunpack.c.h.b16 %v798
  %v1167 = vunpack.c.l.b16 %v799
  %v1168 = vunpack.c.h.b16 %v799
  %v1169 = vunpack.c.l.b16 %v800
  %v1170 = vunpack.c.h.b16 %v800
  %v1171 = vunpack.c.l.b16 %v801
  %v1172 = vunpack.c.h.b16 %v801
  %v1173 = vunpack.c.l.b16 %v802
  %v1174 = vunpack.c.h.b16 %v802
  %v1175 = vunpack.c.l.b16 %v803
  %v1176 = vunpack.c.h.b16 %v803
  %v1177 = vunpack.c.l.b16 %v804
  %v1178 = vunpack.c.h.b16 %v804
  %v1179 = vunpack.c.l.b16 %v805
  %v1180 = vunpack.c.h.b16 %v805
  %v1181 = vunpack.c.l.b16 %v806
  %v1182 = vunpack.c.h.b16 %v806
  %v1183 = vunpack.c.l.b16 %v807
  %v1184 = vunpack.c.h.b16 %v807
  %v1185 = vunpack.c.l.b16 %v808
  %v1186 = vunpack.c.h.b16 %v808
  %v1187 = vunpack.c.l.b16 %v809
  %v1188 = vunpack.c.h.b16 %v809
  %v1189 = vunpack.c.l.b16 %v810
  %v1190 = vunpack.c.h.b16 %v810
  %v1191 = vunpack.c.l.b16 %v811
  %v1192 = vunpack.c.h.b16 %v811
  %v1193 = vunpack.c.l.b16 %v812
  %v1194 = vunpack.c.h.b16 %v812
  %v1195 = vunpack.c.l.b16 %v813
  %v1196 = vunpack.c.h.b16 %v813
  %v1197 = vunpack.c.l.b16 %v814
  %v1198 = vunpack.c.h.b16 %v814
  %v1199 = vunpack.c.l.b16 %v815
  %v1200 = vunpack.c.h.b16 %v815
  %v1201 = vunpack.c.l.b16 %v816
  %v1202 = vunpack.c.h.b16 %v816
  %v1203 = vunpack.c.l.b16 %v817
  %v1204 = vunpack.c.h.b16 %v817
  %v1205 = vunpack.c.l.b16 %v818
  %v1206 = vunpack.c.h.b16 %v818
  %v1207 = vunpack.c.l.b16 %v819
  %v1208 = vunpack.c.h.b16 %v819
  %v1209 = vunpack.c.l.b16 %v820
  %v1210 = vunpack.c.h.b16 %v820
  %v1211 = vunpack.c.l.b16 %v821
  %v1212 = vunpack.c.h.b16 %v821
  %v1213 = vunpack.c.l.b16 %v822
  %v1214 = vunpack.c.h.b16 %v822
  %v1215 = vunpack.c.l.b16 %v823
  %v1216 = vunpack.c.h.b16 %v823
  %v1217 = vunpack.c.l.b16 %v824
  %v1218 = vunpack.c.h.b16 %v824
  %v1219 = vunpack.c.l.b16 %v825
  %v1220 = vunpack.c.h.b16 %v825
  %v1221 = vunpack.c.l.b16 %v826
  %v1222 = vunpack.c.h.b16 %v826
  %v1223 = vunpack.c.l.b16 %v827
  %v1224 = vunpack.c.h.b16 %v827
  %v1225 = vunpack.c.l.b16 %v828
  %v1226 = vunpack.c.h.b16 %v828
  %v1227 = vunpack.c.l.b16 %v829
  %v1228 = vunpack.c.h.b16 %v829
  %v1229 = vunpack.c.l.b16 %v830
  %v1230 = vunpack.c.h.b16 %v830
  %v1231 = vunpack.c.l.b16 %v831
  %v1232 = vunpack.c.h.b16 %v831
  %v1233 = vunpack.c.l.b16 %v832
  %v1234 = vunpack.c.h.b16 %v832
  %v1235 = vunpack.c.l.b16 %v833
  %v1236 = vunpack.c.h.b16 %v833
  %v1237 = vunpack.c.l.b16 %v834
  %v1238 = vunpack.c.h.b16 %v834
  %v1239 = vunpack.c.l.b16 %v835
  %v1240 = vunpack.c.h.b16 %v835
  %v1241 = vunpack.c.l.b16 %v836
  %v1242 = vunpack.c.h.b16 %v836
  %v1243 = vpack.c.b16 %v991, %v987
  %v1244 = vpack.c.b16 %v992, %v988
  %v1245 = vpack.c.b16 %v993, %v989
  %v1246 = vpack.c.b16 %v994, %v990
  %v1247 = vpack.c.b16 %v999, %v995
  %v1248 = vpack.c.b16 %v1000, %v996
  %v1249 = vpack.c.b16 %v1001, %v997
  %v1250 = vpack.c.b16 %v1002, %v998
  %v1251 = vpack.c.b16 %v1007, %v1003
  %v1252 = vpack.c.b16 %v1008, %v1004
  %v1253 = vpack.c.b16 %v1009, %v1005
  %v1254 = vpack.c.b16 %v1010, %v1006
  %v1255 = vpack.c.b16 %v1015, %v1011
  %v1256 = vpack.c.b16 %v1016, %v1012
  %v1257 = vpack.c.b16 %v1017, %v1013
  %v1258 = vpack.c.b16 %v1018, %v1014
  %v1259 = vpack.c.b16 %v1023, %v1019
  %v1260 = vpack.c.b16 %v1024, %v1020
  %v1261 = vpack.c.b16 %v1025, %v1021
  %v1262 = vpack.c.b16 %v1026, %v1022
  %v1263 = vpack.c.b16 %v1031, %v1027
  %v1264 = vpack.c.b16 %v1032, %v1028
  %v1265 = vpack.c.b16 %v1033, %v1029
  %v1266 = vpack.c.b16 %v1034, %v1030
  %v1267 = vpack.c.b16 %v1039, %v1035
  %v1268 = vpack.c.b16 %v1040, %v1036
  %v1269 = vpack.c.b16 %v1041, %v1037
  %v1270 = vpack.c.b16 %v1042, %v1038
  %v1271 = vpack.c.b16 %v1047, %v1043
  %v1272 = vpack.c.b16 %v1048, %v1044
  %v1273 = vpack.c.b16 %v1049, %v1045
  %v1274 = vpack.c.b16 %v1050, %v1046
  %v1275 = vpack.c.b16 %v1055, %v1051
  %v1276 = vpack.c.b16 %v1056, %v1052
  %v1277 = vpack.c.b16 %v1057, %v1053
  %v1278 = vpack.c.b16 %v1058, %v1054
  %v1279 = vpack.c.b16 %v1063, %v1059
  %v1280 = vpack.c.b16 %v1064, %v1060
  %v1281 = vpack.c.b16 %v1065, %v1061
  %v1282 = vpack.c.b16 %v1066, %v1062
  %v1283 = vpack.c.b16 %v1071, %v1067
  %v1284 = vpack.c.b16 %v1072, %v1068
  %v1285 = vpack.c.b16 %v1073, %v1069
  %v1286 = vpack.c.b16 %v1074, %v1070
  %v1287 = vpack.c.b16 %v1079, %v1075
  %v1288 = vpack.c.b16 %v1080, %v1076
  %v1289 = vpack.c.b16 %v1081, %v1077
  %v1290 = vpack.c.b16 %v1082, %v1078
  %v1291 = vpack.c.b16 %v1087, %v1083
  %v1292 = vpack.c.b16 %v1088, %v1084
  %v1293 = vpack.c.b16 %v1089, %v1085
  %v1294 = vpack.c.b16 %v1090, %v1086
  %v1295 = vpack.c.b16 %v1095, %v1091
  %v1296 = vpack.c.b16 %v1096, %v1092
  %v1297 = vpack.c.b16 %v1097, %v1093
  %v1298 = vpack.c.b16 %v1098, %v1094
  %v1299 = vpack.c.b16 %v1103, %v1099
  %v1300 = vpack.c.b16 %v1104, %v1100
  %v1301 = vpack.c.b16 %v1105, %v1101
  %v1302 = vpack.c.b16 %v1106, %v1102
  %v1303 = vpack.c.b16 %v1111, %v1107
  %v1304 = vpack.c.b16 %v1112, %v1108
  %v1305 = vpack.c.b16 %v1113, %v1109
  %v1306 = vpack.c.b16 %v1114, %v1110
  %v1307 = vpack.c.b16 %v1119, %v1115
  %v1308 = vpack.c.b16 %v1120, %v1116
  %v1309 = vpack.c.b16 %v1121, %v1117
  %v1310 = vpack.c.b16 %v1122, %v1118
  %v1311 = vpack.c.b16 %v1127, %v1123
  %v1312 = vpack.c.b16 %v1128, %v1124
  %v1313 = vpack.c.b16 %v1129, %v1125
  %v1314 = vpack.c.b16 %v1130, %v1126
  %v1315 = vpack.c.b16 %v1135, %v1131
  %v1316 = vpack.c.b16 %v1136, %v1132
  %v1317 = vpack.c.b16 %v1137, %v1133
  %v1318 = vpack.c.b16 %v1138, %v1134
  %v1319 = vpack.c.b16 %v1143, %v1139
  %v1320 = vpack.c.b16 %v1144, %v1140
  %v1321 = vpack.c.b16 %v1145, %v1141
  %v1322 = vpack.c.b16 %v1146, %v1142
  %v1323 = vpack.c.b16 %v1151, %v1147
  %v1324 = vpack.c.b16 %v1152, %v1148
  %v1325 = vpack.c.b16 %v1153, %v1149
  %v1326 = vpack.c.b16 %v1154, %v1150
  %v1327 = vpack.c.b16 %v1159, %v1155
  %v1328 = vpack.c.b16 %v1160, %v1156
  %v1329 = vpack.c.b16 %v1161, %v1157
  %v1330 = vpack.c.b16 %v1162, %v1158
  %v1331 = vpack.c.b16 %v1167, %v1163
  %v1332 = vpack.c.b16 %v1168, %v1164
  %v1333 = vpack.c.b16 %v1169, %v1165
  %v1334 = vpack.c.b16 %v1170, %v1166
  %v1335 = vpack.c.b16 %v1175, %v1171
  %v1336 = vpack.c.b16 %v1176, %v1172
  %v1337 = vpack.c.b16 %v1177, %v1173
  %v1338 = vpack.c.b16 %v1178, %v1174
  %v1339 = vpack.c.b16 %v1183, %v1179
  %v1340 = vpack.c.b16 %v1184, %v1180
  %v1341 = vpack.c.b16 %v1185, %v1181
  %v1342 = vpack.c.b16 %v1186, %v1182
  %v1343 = vpack.c.b16 %v1191, %v1187
  %v1344 = vpack.c.b16 %v1192, %v1188
  %v1345 = vpack.c.b16 %v1193, %v1189
  %v1346 = vpack.c.b16 %v1194, %v1190
  %v1347 = vpack.c.b16 %v1199, %v1195
  %v1348 = vpack.c.b16 %v1200, %v1196
  %v1349 = vpack.c.b16 %v1201, %v1197
  %v1350 = vpack.c.b16 %v1202, %v1198
  %v1351 = vpack.c.b16 %v1207, %v1203
  %v1352 = vpack.c.b16 %v1208, %v1204
  %v1353 = vpack.c.b16 %v1209, %v1205
  %v1354 = vpack.c.b16 %v1210, %v1206
  %v1355 = vpack.c.b16 %v1215, %v1211
  %v1356 = vpack.c.b16 %v1216, %v1212
  %v1357 = vpack.c.b16 %v1217, %v1213
  %v1358 = vpack.c.b16 %v1218, %v1214
  %v1359 = vpack.c.b16 %v1223, %v1219
  %v1360 = vpack.c.b16 %v1224, %v1220
  %v1361 = vpack.c.b16 %v1225, %v1221
  %v1362 = vpack.c.b16 %v1226, %v1222
  %v1363 = vpack.c.b16 %v1231, %v1227
  %v1364 = vpack.c.b16 %v1232, %v1228
  %v1365 = vpack.c.b16 %v1233, %v1229
  %v1366 = vpack.c.b16 %v1234, %v1230
  %v1367 = vpack.c.b16 %v1239, %v1235
  %v1368 = vpack.c.b16 %v1240, %v1236
  %v1369 = vpack.c.b16 %v1241, %v1237
  %v1370 = vpack.c.b16 %v1242, %v1238
  %1499 = vmatprep.subr.bf16.mxu0 %v1244
  %1500 = vmatpush1.bf16.msra.mxu0 %v1243
  %1501 = vmatprep.subr.bf16.mxu0 %v1248
  %1502 = vmatpush1.bf16.msra.mxu0 %v1247
  %1503 = vmatprep.subr.bf16.mxu0 %v1252
  %1504 = vmatpush1.bf16.msra.mxu0 %v1251
  %1505 = vmatprep.subr.bf16.mxu0 %v1256
  %1506 = vmatpush1.bf16.msra.mxu0 %v1255
  %1507 = vmatprep.subr.bf16.mxu0 %v1260
  %1508 = vmatpush1.bf16.msra.mxu0 %v1259
  %1509 = vmatprep.subr.bf16.mxu0 %v1264
  %1510 = vmatpush1.bf16.msra.mxu0 %v1263
  %1511 = vmatprep.subr.bf16.mxu0 %v1268
  %1512 = vmatpush1.bf16.msra.mxu0 %v1267
  %1513 = vmatprep.subr.bf16.mxu0 %v1272
  %1514 = vmatpush1.bf16.msra.mxu0 %v1271
  %1515 = vmatprep.subr.bf16.mxu0 %v1276
  %1516 = vmatpush1.bf16.msra.mxu0 %v1275
  %1517 = vmatprep.subr.bf16.mxu0 %v1280
  %1518 = vmatpush1.bf16.msra.mxu0 %v1279
  %1519 = vmatprep.subr.bf16.mxu0 %v1284
  %1520 = vmatpush1.bf16.msra.mxu0 %v1283
  %1521 = vmatprep.subr.bf16.mxu0 %v1288
  %1522 = vmatpush1.bf16.msra.mxu0 %v1287
  %1523 = vmatprep.subr.bf16.mxu0 %v1292
  %1524 = vmatpush1.bf16.msra.mxu0 %v1291
  %1525 = vmatprep.subr.bf16.mxu0 %v1296
  %1526 = vmatpush1.bf16.msra.mxu0 %v1295
  %1527 = vmatprep.subr.bf16.mxu0 %v1300
  %1528 = vmatpush1.bf16.msra.mxu0 %v1299
  %1529 = vmatprep.subr.bf16.mxu0 %v1304
  %1530 = vmatpush1.bf16.msra.mxu0 %v1303
  %1531 = vmatprep.mubr.bf16.mxu0 %v706
  %1532 = vmatmul.mubr.bf16.gmra.mrb[0].mxu0 %v705
  %v1533 = vpop.f32.mrb[0].mxu0
  %v1534 = vadd.f32 %v842, %v1533
  %v1535 = vpop.f32.mrb[0].mxu0
  %v1536 = vadd.f32 %v846, %v1535
  %v1537 = vpop.f32.mrb[0].mxu0
  %v1538 = vpop.f32.mrb[0].mxu0
  %1539 = vdwg.mxu0
  %1540 = vmatprep.subr.bf16.mxu0 %v1308
  %1541 = vmatpush1.bf16.msra.mxu0 %v1307
  %1542 = vmatprep.subr.bf16.mxu0 %v1312
  %1543 = vmatpush1.bf16.msra.mxu0 %v1311
  %1544 = vmatprep.subr.bf16.mxu0 %v1316
  %1545 = vmatpush1.bf16.msra.mxu0 %v1315
  %1546 = vmatprep.subr.bf16.mxu0 %v1320
  %1547 = vmatpush1.bf16.msra.mxu0 %v1319
  %1548 = vmatprep.subr.bf16.mxu0 %v1324
  %1549 = vmatpush1.bf16.msra.mxu0 %v1323
  %1550 = vmatprep.subr.bf16.mxu0 %v1328
  %1551 = vmatpush1.bf16.msra.mxu0 %v1327
  %1552 = vmatprep.subr.bf16.mxu0 %v1332
  %1553 = vmatpush1.bf16.msra.mxu0 %v1331
  %1554 = vmatprep.subr.bf16.mxu0 %v1336
  %1555 = vmatpush1.bf16.msra.mxu0 %v1335
  %1556 = vmatprep.subr.bf16.mxu0 %v1340
  %1557 = vmatpush1.bf16.msra.mxu0 %v1339
  %1558 = vmatprep.subr.bf16.mxu0 %v1344
  %1559 = vmatpush1.bf16.msra.mxu0 %v1343
  %1560 = vmatprep.subr.bf16.mxu0 %v1348
  %1561 = vmatpush1.bf16.msra.mxu0 %v1347
  %1562 = vmatprep.subr.bf16.mxu0 %v1352
  %1563 = vmatpush1.bf16.msra.mxu0 %v1351
  %1564 = vmatprep.subr.bf16.mxu0 %v1356
  %1565 = vmatpush1.bf16.msra.mxu0 %v1355
  %1566 = vmatprep.subr.bf16.mxu0 %v1360
  %1567 = vmatpush1.bf16.msra.mxu0 %v1359
  %1568 = vmatprep.subr.bf16.mxu0 %v1364
  %1569 = vmatpush1.bf16.msra.mxu0 %v1363
  %1570 = vmatprep.subr.bf16.mxu0 %v1368
  %1571 = vmatpush1.bf16.msra.mxu0 %v1367
  %1572 = vmatprep.mubr.bf16.mxu0 %v708
  %1573 = vmatmul.mubr.bf16.gmra.mrb[0].mxu0 %v707
  %v1574 = vpop.f32.mrb[0].mxu0
  %v1575 = vadd.f32 %v1534, %v1574
  %v1576 = vpop.f32.mrb[0].mxu0
  %v1577 = vadd.f32 %v1536, %v1576
  %v1578 = vpop.f32.mrb[0].mxu0
  %v1579 = vpop.f32.mrb[0].mxu0
  %1580 = vdwg.mxu0
  %1581 = vmatprep.subr.bf16.mxu0 %v1246
  %1582 = vmatpush1.bf16.msra.mxu0 %v1245
  %1583 = vmatprep.subr.bf16.mxu0 %v1250
  %1584 = vmatpush1.bf16.msra.mxu0 %v1249
  %1585 = vmatprep.subr.bf16.mxu0 %v1254
  %1586 = vmatpush1.bf16.msra.mxu0 %v1253
  %1587 = vmatprep.subr.bf16.mxu0 %v1258
  %1588 = vmatpush1.bf16.msra.mxu0 %v1257
  %1589 = vmatprep.subr.bf16.mxu0 %v1262
  %1590 = vmatpush1.bf16.msra.mxu0 %v1261
  %1591 = vmatprep.subr.bf16.mxu0 %v1266
  %1592 = vmatpush1.bf16.msra.mxu0 %v1265
  %1593 = vmatprep.subr.bf16.mxu0 %v1270
  %1594 = vmatpush1.bf16.msra.mxu0 %v1269
  %1595 = vmatprep.subr.bf16.mxu0 %v1274
  %1596 = vmatpush1.bf16.msra.mxu0 %v1273
  %1597 = vmatprep.subr.bf16.mxu0 %v1278
  %1598 = vmatpush1.bf16.msra.mxu0 %v1277
  %1599 = vmatprep.subr.bf16.mxu0 %v1282
  %1600 = vmatpush1.bf16.msra.mxu0 %v1281
  %1601 = vmatprep.subr.bf16.mxu0 %v1286
  %1602 = vmatpush1.bf16.msra.mxu0 %v1285
  %1603 = vmatprep.subr.bf16.mxu0 %v1290
  %1604 = vmatpush1.bf16.msra.mxu0 %v1289
  %1605 = vmatprep.subr.bf16.mxu0 %v1294
  %1606 = vmatpush1.bf16.msra.mxu0 %v1293
  %1607 = vmatprep.subr.bf16.mxu0 %v1298
  %1608 = vmatpush1.bf16.msra.mxu0 %v1297
  %1609 = vmatprep.subr.bf16.mxu0 %v1302
  %1610 = vmatpush1.bf16.msra.mxu0 %v1301
  %1611 = vmatprep.subr.bf16.mxu0 %v1306
  %1612 = vmatpush1.bf16.msra.mxu0 %v1305
  %1613 = vmatprep.mubr.bf16.mxu0 %v706
  %1614 = vmatmul.mubr.bf16.gmra.mrb[0].mxu0 %v705
  %v1615 = vpop.f32.mrb[0].mxu0
  %v1616 = vadd.f32 %v850, %v1615
  %v1617 = vpop.f32.mrb[0].mxu0
  %v1618 = vadd.f32 %v854, %v1617
  %v1619 = vpop.f32.mrb[0].mxu0
  %v1620 = vpop.f32.mrb[0].mxu0
  %1621 = vdwg.mxu0
  %1622 = vmatprep.subr.bf16.mxu0 %v1310
  %1623 = vmatpush1.bf16.msra.mxu0 %v1309
  %1624 = vmatprep.subr.bf16.mxu0 %v1314
  %1625 = vmatpush1.bf16.msra.mxu0 %v1313
  %1626 = vmatprep.subr.bf16.mxu0 %v1318
  %1627 = vmatpush1.bf16.msra.mxu0 %v1317
  %1628 = vmatprep.subr.bf16.mxu0 %v1322
  %1629 = vmatpush1.bf16.msra.mxu0 %v1321
  %1630 = vmatprep.subr.bf16.mxu0 %v1326
  %1631 = vmatpush1.bf16.msra.mxu0 %v1325
  %1632 = vmatprep.subr.bf16.mxu0 %v1330
  %1633 = vmatpush1.bf16.msra.mxu0 %v1329
  %1634 = vmatprep.subr.bf16.mxu0 %v1334
  %1635 = vmatpush1.bf16.msra.mxu0 %v1333
  %1636 = vmatprep.subr.bf16.mxu0 %v1338
  %1637 = vmatpush1.bf16.msra.mxu0 %v1337
  %1638 = vmatprep.subr.bf16.mxu0 %v1342
  %1639 = vmatpush1.bf16.msra.mxu0 %v1341
  %1640 = vmatprep.subr.bf16.mxu0 %v1346
  %1641 = vmatpush1.bf16.msra.mxu0 %v1345
  %1642 = vmatprep.subr.bf16.mxu0 %v1350
  %1643 = vmatpush1.bf16.msra.mxu0 %v1349
  %1644 = vmatprep.subr.bf16.mxu0 %v1354
  %1645 = vmatpush1.bf16.msra.mxu0 %v1353
  %1646 = vmatprep.subr.bf16.mxu0 %v1358
  %1647 = vmatpush1.bf16.msra.mxu0 %v1357
  %1648 = vmatprep.subr.bf16.mxu0 %v1362
  %1649 = vmatpush1.bf16.msra.mxu0 %v1361
  %1650 = vmatprep.subr.bf16.mxu0 %v1366
  %1651 = vmatpush1.bf16.msra.mxu0 %v1365
  %1652 = vmatprep.subr.bf16.mxu0 %v1370
  %1653 = vmatpush1.bf16.msra.mxu0 %v1369
  %1654 = vmatprep.mubr.bf16.mxu0 %v708
  %1655 = vmatmul.mubr.bf16.gmra.mrb[0].mxu0 %v707
  %v1656 = vpop.f32.mrb[0].mxu0
  %v1657 = vadd.f32 %v1616, %v1656
  %v1658 = vpop.f32.mrb[0].mxu0
  %v1659 = vadd.f32 %v1618, %v1658
  %v1660 = vpop.f32.mrb[0].mxu0
  %v1661 = vpop.f32.mrb[0].mxu0
  %1662 = vdwg.mxu0
  %v1667 = vcombine.low %v1575, %v1577
  %v1668 = vcombine.low %v1657, %v1659
  %v1670 = vunpack.c.l.s4 1983009808
  %v1671 = vunpack.c.0.s8 %v1670
  %v1672 = vlaneseq
  %v1673 = vshrl.u32 %v1672, 7
  %v1674 = vsub.s32 %v1671, %v1673
  %v1675 = vrot.slane %v1667, %v1674
  %v1677 = vunpack.c.l.s4 1983009808
  %v1678 = vunpack.c.0.s8 %v1677
  %v1679 = vlaneseq
  %v1680 = vshrl.u32 %v1679, 7
  %v1681 = vsub.s32 %v1678, %v1680
  %v1682 = vrot.slane %v1668, %v1681
  %v1683 = vcombine.low %v1675, %v1682
  %1685 = vst [vmem:[%s15] sm:$0xff] %v1683
  // Predicated region
  $region62: #{forward.10} parent=0 // pred_check
    _
  $region63: #{forward.10} parent=0 // pred_check_branch
    %1687 = sbr.rel (0) target = $region65
  $region64: #{forward.10} parent=0 // pred_region
    _
  $region65: #{forward.10} parent=0 // pred_fallthru
    _
  // Predicated region
  $region66: #{forward.10} parent=0 // pred_check
    _
  $region67: #{forward.10} parent=0 // pred_check_branch
    %1689 = sbr.rel (0) target = $region69
  $region68: #{forward.10} parent=0 // pred_region
    _
  $region69: #{forward.10} parent=0 // pred_fallthru
    _
  // Predicated region
  $region70: #{forward.10} parent=0 // pred_check
    _
  $region71: #{forward.10} parent=0 // pred_check_branch
    %1691 = sbr.rel (0) target = $region73
  $region72: #{forward.10} parent=0 // pred_region
    _
  $region73: #{forward.10} parent=0 // pred_fallthru
    _
  // Predicated region
  $region74: #{forward.10} parent=0 // pred_check
    _
  $region75: #{forward.10} parent=0 // pred_check_branch
    %1693 = sbr.rel (0) target = $region77
  $region76: #{forward.10} parent=0 // pred_region
    _
  $region77: #{forward.10} parent=0 // pred_fallthru
    _
  // Predicated region
  $region78: #{forward.10} parent=0 // pred_check
    _
  $region79: #{forward.10} parent=0 // pred_check_branch
    %1695 = sbr.rel (0) target = $region81
  $region80: #{forward.10} parent=0 // pred_region
    _
  $region81: #{forward.10} parent=0 // pred_fallthru
    _
  // Predicated region
  $region82: #{forward.10} parent=0 // pred_check
    _
  $region83: #{forward.10} parent=0 // pred_check_branch
    %1697 = sbr.rel (0) target = $region85
  $region84: #{forward.10} parent=0 // pred_region
    _
  $region85: #{forward.10} parent=0 // pred_fallthru
    _
  // Predicated region
  $region86: #{forward.10} parent=0 // pred_check
    _
  $region87: #{forward.10} parent=0 // pred_check_branch
    %1699 = sbr.rel (0) target = $region89
  $region88: #{forward.10} parent=0 // pred_region
    _
  $region89: #{forward.10} parent=0 // pred_fallthru
    _
  // Predicated region
  $region90: #{forward.10} parent=0 // pred_check
    _
  $region91: #{forward.10} parent=0 // pred_check_branch
    %1701 = sbr.rel (0) target = $region93
  $region92: #{forward.10} parent=0 // pred_region
    _
  $region93: #{forward.10} parent=0 // pred_fallthru
    _

// kernel: forward.11
$region0: #{forward.11}
  #allocation0 [shape = 'u32[]', space=smem, size = 0x4, offset = 0x4, fixed_abs, tag = 'smem constant byte address 0x4 - core index']
  #allocation1 [shape = 'u32[144,128]{1,0:T(1,128)}', space=vmem, size = 0x12000, scoped, tag = 'internal scratch']
  #allocation2 [shape = 'f32[2,64]{1,0:T(2,128)}', space=vmem, size = 0x400, scoped, tag = 'scratch operand']
  %s0 = inlined_call_operand.vmem [shape: bf16[2,64], index: 0, kind: input, shape index: {}]
  %s1 = inlined_call_operand.vmem [shape: f32[2,512], index: 1, kind: input, shape index: {}]
  %s2 = inlined_call_operand.vmem [shape: f32[2,128], index: 2, kind: input, shape index: {}]
  %s3 = inlined_call_operand.vmem [shape: f32[2,32], index: 3, kind: input, shape index: {}]
  %s4 = inlined_call_operand.vmem [shape: f32[2,8], index: 4, kind: input, shape index: {}]
  %s5 = inlined_call_operand.vmem [shape: bf16[64,32], index: 5, kind: input, shape index: {}]
  %s6 = inlined_call_operand.vmem [shape: bf16[512,8], index: 6, kind: input, shape index: {}]
  %s7 = inlined_call_operand.vmem [shape: bf16[128,8], index: 7, kind: input, shape index: {}]
  %s8 = inlined_call_operand.vmem [shape: bf16[32,8], index: 8, kind: input, shape index: {}]
  %s9 = inlined_call_operand.vmem [shape: bf16[8,8], index: 9, kind: input, shape index: {}]
  %s10 = inlined_call_operand.vmem [shape: f32[1,32], index: 10, kind: input, shape index: {}]
  %s11 = inlined_call_operand.vmem [shape: f32[1,8], index: 11, kind: input, shape index: {}]
  %s12 = inlined_call_operand.vmem [shape: f32[1,8], index: 12, kind: input, shape index: {}]
  %s13 = inlined_call_operand.vmem [shape: f32[1,8], index: 13, kind: input, shape index: {}]
  %s14 = inlined_call_operand.vmem [shape: f32[1,8], index: 14, kind: input, shape index: {}]
  %s15 = inlined_call_operand.vmem [shape: f32[1,64], index: 15, kind: input, shape index: {}]
  %s16 = inlined_call_operand.vmem [shape: bf16[64,384], index: 16, kind: input, shape index: {}]
  %s17 = inlined_call_operand.hbm [shape: f32[2,384], index: 17, kind: output, shape index: {}]
  %s18 = sld [smem:[#allocation0]]
  $region142: #{forward.11} parent=0
    _
  %s20 = ssub.s32 1, %s18
  %s21 = scalar_select 0, %s20, %s18
  $region1: #{forward.11} parent=0
    #allocation3 [shape = 'u8[32768]{0}', space=vmem, size = 0x8000, scoped, tag = 'input window, operand 16']
    #allocation4 [shape = 'u8[2048]{0}', space=vmem, size = 0x800, scoped, tag = 'output window, operand 0']
    #allocation5 [shape = 's32[2]{0}', space=sflag, size = 0x8, scoped, tag = 'scoped memory for forward.11']
    %22 = vsyncpa [#allocation5], 0
    %s23 = scalar_lea.sflag [#allocation5], 1
    %24 = vsyncpa %s23, 0
    loop: start=0, step=1, limit=5
    $region2: #{forward.11} parent=1 // loop_pre_header
      _
    $region3: #{forward.11} parent=1 // loop_header
      %s26 = sphi 0, %s30
      %p27 = scmp.ge.s32.totalorder %s26, 5
      %s34 = sphi 0, %s34
      %s36 = sphi 0, %s34
      %s37 = sphi 0, %s36
      %s51 = sphi 0, %s37
      %s55 = sphi 0, %s55
      %s57 = sphi 0, %s55
      %s58 = sphi 0, %s57
      %s72 = sphi 0, %s58
      %s76 = sphi 0, %s76
      %s78 = sphi 0, %s76
      %s79 = sphi 0, %s78
      %s93 = sphi 0, %s79
      %s97 = sphi 0, %s97
      %s99 = sphi 0, %s97
      %s100 = sphi 0, %s99
      %s114 = sphi 0, %s100
      %s118 = sphi 0, %s118
      %s120 = sphi 0, %s118
      %s121 = sphi 0, %s120
      %s135 = sphi 0, %s121
      %s139 = sphi 0, %s139
      %s141 = sphi 0, %s139
      %s142 = sphi 0, %s141
      %s156 = sphi 0, %s142
      %s160 = sphi 0, %s160
      %s162 = sphi 0, %s160
      %s163 = sphi 0, %s162
      %s177 = sphi 0, %s163
      %s181 = sphi 0, %s181
      %s183 = sphi 0, %s181
      %s184 = sphi 0, %s183
      %s198 = sphi 0, %s184
      %s202 = sphi 0, %s202
      %s204 = sphi 0, %s202
      %s205 = sphi 0, %s204
      %s219 = sphi 0, %s205
      %s223 = sphi 0, %s223
      %s225 = sphi 0, %s223
      %s226 = sphi 0, %s225
      %s240 = sphi 0, %s226
      %s244 = sphi 0, %s244
      %s246 = sphi 0, %s244
      %s247 = sphi 0, %s246
      %s261 = sphi 0, %s247
      %s265 = sphi 0, %s265
      %s267 = sphi 0, %s265
      %s268 = sphi 0, %s267
      %s282 = sphi 0, %s268
      %s286 = sphi 0, %s286
      %s288 = sphi 0, %s286
      %s289 = sphi 0, %s288
      %s303 = sphi 0, %s289
      %s307 = sphi 0, %s307
      %s309 = sphi 0, %s307
      %s310 = sphi 0, %s309
      %s324 = sphi 0, %s310
      %s328 = sphi 0, %s328
      %s330 = sphi 0, %s328
      %s331 = sphi 0, %s330
      %s345 = sphi 0, %s331
      %s349 = sphi 0, %s349
      %s351 = sphi 0, %s349
      %s352 = sphi 0, %s351
      %s366 = sphi 0, %s352
      %s372 = sphi 0, %s374
      %s375 = sphi 0, %s372
      %s376 = sphi 0, %s375
      %s392 = sphi 0, %s376
      %s398 = sphi 0, %s400
      %s401 = sphi 0, %s398
      %s402 = sphi 0, %s401
      %s418 = sphi 0, %s402
    $region4: #{forward.11} parent=1 // loop_header_branch
      %29 = sbr.rel (%p27) target = $region8
    $region5: #{forward.11} parent=1 // loop_body
      %s31 = ssub.s32 %s26, 1
      %s32 = ssub.s32 %s26, 2
      %s33 = sadd.s32 %s26, 1
      %s35 = sadd.s32 %s34, 1
      %p38 = scmp.eq.s32.totalorder %s26, 2
      %p39 = scmp.ne.s32.totalorder %s34, %s36
      %p40 = scmp.eq.s32.totalorder %s26, 0
      %p41 = por %p39, %p40
      %p42 = scmp.ne.s32.totalorder %s34, %s36
      %p43 = scmp.eq.s32.totalorder %s31, 2
      %p44 = por %p42, %p43
      %p45 = scmp.ne.s32.totalorder %s36, %s37
      %p46 = scmp.eq.s32.totalorder %s31, 0
      %p47 = por %p45, %p46
      %p48 = scmp.ne.s32.totalorder %s36, %s37
      %p49 = scmp.eq.s32.totalorder %s32, 2
      %p50 = por %p48, %p49
      %p52 = scmp.ne.s32.totalorder %s37, %s51
      %p53 = scmp.eq.s32.totalorder %s32, 0
      %p54 = por %p52, %p53
      %s56 = sadd.s32 %s55, 1
      %p59 = scmp.eq.s32.totalorder %s26, 2
      %p60 = scmp.ne.s32.totalorder %s55, %s57
      %p61 = scmp.eq.s32.totalorder %s26, 0
      %p62 = por %p60, %p61
      %p63 = scmp.ne.s32.totalorder %s55, %s57
      %p64 = scmp.eq.s32.totalorder %s31, 2
      %p65 = por %p63, %p64
      %p66 = scmp.ne.s32.totalorder %s57, %s58
      %p67 = scmp.eq.s32.totalorder %s31, 0
      %p68 = por %p66, %p67
      %p69 = scmp.ne.s32.totalorder %s57, %s58
      %p70 = scmp.eq.s32.totalorder %s32, 2
      %p71 = por %p69, %p70
      %p73 = scmp.ne.s32.totalorder %s58, %s72
      %p74 = scmp.eq.s32.totalorder %s32, 0
      %p75 = por %p73, %p74
      %s77 = sadd.s32 %s76, 1
      %p80 = scmp.eq.s32.totalorder %s26, 2
      %p81 = scmp.ne.s32.totalorder %s76, %s78
      %p82 = scmp.eq.s32.totalorder %s26, 0
      %p83 = por %p81, %p82
      %p84 = scmp.ne.s32.totalorder %s76, %s78
      %p85 = scmp.eq.s32.totalorder %s31, 2
      %p86 = por %p84, %p85
      %p87 = scmp.ne.s32.totalorder %s78, %s79
      %p88 = scmp.eq.s32.totalorder %s31, 0
      %p89 = por %p87, %p88
      %p90 = scmp.ne.s32.totalorder %s78, %s79
      %p91 = scmp.eq.s32.totalorder %s32, 2
      %p92 = por %p90, %p91
      %p94 = scmp.ne.s32.totalorder %s79, %s93
      %p95 = scmp.eq.s32.totalorder %s32, 0
      %p96 = por %p94, %p95
      %s98 = sadd.s32 %s97, 1
      %p101 = scmp.eq.s32.totalorder %s26, 2
      %p102 = scmp.ne.s32.totalorder %s97, %s99
      %p103 = scmp.eq.s32.totalorder %s26, 0
      %p104 = por %p102, %p103
      %p105 = scmp.ne.s32.totalorder %s97, %s99
      %p106 = scmp.eq.s32.totalorder %s31, 2
      %p107 = por %p105, %p106
      %p108 = scmp.ne.s32.totalorder %s99, %s100
      %p109 = scmp.eq.s32.totalorder %s31, 0
      %p110 = por %p108, %p109
      %p111 = scmp.ne.s32.totalorder %s99, %s100
      %p112 = scmp.eq.s32.totalorder %s32, 2
      %p113 = por %p111, %p112
      %p115 = scmp.ne.s32.totalorder %s100, %s114
      %p116 = scmp.eq.s32.totalorder %s32, 0
      %p117 = por %p115, %p116
      %s119 = sadd.s32 %s118, 1
      %p122 = scmp.eq.s32.totalorder %s26, 2
      %p123 = scmp.ne.s32.totalorder %s118, %s120
      %p124 = scmp.eq.s32.totalorder %s26, 0
      %p125 = por %p123, %p124
      %p126 = scmp.ne.s32.totalorder %s118, %s120
      %p127 = scmp.eq.s32.totalorder %s31, 2
      %p128 = por %p126, %p127
      %p129 = scmp.ne.s32.totalorder %s120, %s121
      %p130 = scmp.eq.s32.totalorder %s31, 0
      %p131 = por %p129, %p130
      %p132 = scmp.ne.s32.totalorder %s120, %s121
      %p133 = scmp.eq.s32.totalorder %s32, 2
      %p134 = por %p132, %p133
      %p136 = scmp.ne.s32.totalorder %s121, %s135
      %p137 = scmp.eq.s32.totalorder %s32, 0
      %p138 = por %p136, %p137
      %s140 = sadd.s32 %s139, 1
      %p143 = scmp.eq.s32.totalorder %s26, 2
      %p144 = scmp.ne.s32.totalorder %s139, %s141
      %p145 = scmp.eq.s32.totalorder %s26, 0
      %p146 = por %p144, %p145
      %p147 = scmp.ne.s32.totalorder %s139, %s141
      %p148 = scmp.eq.s32.totalorder %s31, 2
      %p149 = por %p147, %p148
      %p150 = scmp.ne.s32.totalorder %s141, %s142
      %p151 = scmp.eq.s32.totalorder %s31, 0
      %p152 = por %p150, %p151
      %p153 = scmp.ne.s32.totalorder %s141, %s142
      %p154 = scmp.eq.s32.totalorder %s32, 2
      %p155 = por %p153, %p154
      %p157 = scmp.ne.s32.totalorder %s142, %s156
      %p158 = scmp.eq.s32.totalorder %s32, 0
      %p159 = por %p157, %p158
      %s161 = sadd.s32 %s160, 1
      %p164 = scmp.eq.s32.totalorder %s26, 2
      %p165 = scmp.ne.s32.totalorder %s160, %s162
      %p166 = scmp.eq.s32.totalorder %s26, 0
      %p167 = por %p165, %p166
      %p168 = scmp.ne.s32.totalorder %s160, %s162
      %p169 = scmp.eq.s32.totalorder %s31, 2
      %p170 = por %p168, %p169
      %p171 = scmp.ne.s32.totalorder %s162, %s163
      %p172 = scmp.eq.s32.totalorder %s31, 0
      %p173 = por %p171, %p172
      %p174 = scmp.ne.s32.totalorder %s162, %s163
      %p175 = scmp.eq.s32.totalorder %s32, 2
      %p176 = por %p174, %p175
      %p178 = scmp.ne.s32.totalorder %s163, %s177
      %p179 = scmp.eq.s32.totalorder %s32, 0
      %p180 = por %p178, %p179
      %s182 = sadd.s32 %s181, 1
      %p185 = scmp.eq.s32.totalorder %s26, 2
      %p186 = scmp.ne.s32.totalorder %s181, %s183
      %p187 = scmp.eq.s32.totalorder %s26, 0
      %p188 = por %p186, %p187
      %p189 = scmp.ne.s32.totalorder %s181, %s183
      %p190 = scmp.eq.s32.totalorder %s31, 2
      %p191 = por %p189, %p190
      %p192 = scmp.ne.s32.totalorder %s183, %s184
      %p193 = scmp.eq.s32.totalorder %s31, 0
      %p194 = por %p192, %p193
      %p195 = scmp.ne.s32.totalorder %s183, %s184
      %p196 = scmp.eq.s32.totalorder %s32, 2
      %p197 = por %p195, %p196
      %p199 = scmp.ne.s32.totalorder %s184, %s198
      %p200 = scmp.eq.s32.totalorder %s32, 0
      %p201 = por %p199, %p200
      %s203 = sadd.s32 %s202, 1
      %p206 = scmp.eq.s32.totalorder %s26, 2
      %p207 = scmp.ne.s32.totalorder %s202, %s204
      %p208 = scmp.eq.s32.totalorder %s26, 0
      %p209 = por %p207, %p208
      %p210 = scmp.ne.s32.totalorder %s202, %s204
      %p211 = scmp.eq.s32.totalorder %s31, 2
      %p212 = por %p210, %p211
      %p213 = scmp.ne.s32.totalorder %s204, %s205
      %p214 = scmp.eq.s32.totalorder %s31, 0
      %p215 = por %p213, %p214
      %p216 = scmp.ne.s32.totalorder %s204, %s205
      %p217 = scmp.eq.s32.totalorder %s32, 2
      %p218 = por %p216, %p217
      %p220 = scmp.ne.s32.totalorder %s205, %s219
      %p221 = scmp.eq.s32.totalorder %s32, 0
      %p222 = por %p220, %p221
      %s224 = sadd.s32 %s223, 1
      %p227 = scmp.eq.s32.totalorder %s26, 2
      %p228 = scmp.ne.s32.totalorder %s223, %s225
      %p229 = scmp.eq.s32.totalorder %s26, 0
      %p230 = por %p228, %p229
      %p231 = scmp.ne.s32.totalorder %s223, %s225
      %p232 = scmp.eq.s32.totalorder %s31, 2
      %p233 = por %p231, %p232
      %p234 = scmp.ne.s32.totalorder %s225, %s226
      %p235 = scmp.eq.s32.totalorder %s31, 0
      %p236 = por %p234, %p235
      %p237 = scmp.ne.s32.totalorder %s225, %s226
      %p238 = scmp.eq.s32.totalorder %s32, 2
      %p239 = por %p237, %p238
      %p241 = scmp.ne.s32.totalorder %s226, %s240
      %p242 = scmp.eq.s32.totalorder %s32, 0
      %p243 = por %p241, %p242
      %s245 = sadd.s32 %s244, 1
      %p248 = scmp.eq.s32.totalorder %s26, 2
      %p249 = scmp.ne.s32.totalorder %s244, %s246
      %p250 = scmp.eq.s32.totalorder %s26, 0
      %p251 = por %p249, %p250
      %p252 = scmp.ne.s32.totalorder %s244, %s246
      %p253 = scmp.eq.s32.totalorder %s31, 2
      %p254 = por %p252, %p253
      %p255 = scmp.ne.s32.totalorder %s246, %s247
      %p256 = scmp.eq.s32.totalorder %s31, 0
      %p257 = por %p255, %p256
      %p258 = scmp.ne.s32.totalorder %s246, %s247
      %p259 = scmp.eq.s32.totalorder %s32, 2
      %p260 = por %p258, %p259
      %p262 = scmp.ne.s32.totalorder %s247, %s261
      %p263 = scmp.eq.s32.totalorder %s32, 0
      %p264 = por %p262, %p263
      %s266 = sadd.s32 %s265, 1
      %p269 = scmp.eq.s32.totalorder %s26, 2
      %p270 = scmp.ne.s32.totalorder %s265, %s267
      %p271 = scmp.eq.s32.totalorder %s26, 0
      %p272 = por %p270, %p271
      %p273 = scmp.ne.s32.totalorder %s265, %s267
      %p274 = scmp.eq.s32.totalorder %s31, 2
      %p275 = por %p273, %p274
      %p276 = scmp.ne.s32.totalorder %s267, %s268
      %p277 = scmp.eq.s32.totalorder %s31, 0
      %p278 = por %p276, %p277
      %p279 = scmp.ne.s32.totalorder %s267, %s268
      %p280 = scmp.eq.s32.totalorder %s32, 2
      %p281 = por %p279, %p280
      %p283 = scmp.ne.s32.totalorder %s268, %s282
      %p284 = scmp.eq.s32.totalorder %s32, 0
      %p285 = por %p283, %p284
      %s287 = sadd.s32 %s286, 1
      %p290 = scmp.eq.s32.totalorder %s26, 2
      %p291 = scmp.ne.s32.totalorder %s286, %s288
      %p292 = scmp.eq.s32.totalorder %s26, 0
      %p293 = por %p291, %p292
      %p294 = scmp.ne.s32.totalorder %s286, %s288
      %p295 = scmp.eq.s32.totalorder %s31, 2
      %p296 = por %p294, %p295
      %p297 = scmp.ne.s32.totalorder %s288, %s289
      %p298 = scmp.eq.s32.totalorder %s31, 0
      %p299 = por %p297, %p298
      %p300 = scmp.ne.s32.totalorder %s288, %s289
      %p301 = scmp.eq.s32.totalorder %s32, 2
      %p302 = por %p300, %p301
      %p304 = scmp.ne.s32.totalorder %s289, %s303
      %p305 = scmp.eq.s32.totalorder %s32, 0
      %p306 = por %p304, %p305
      %s308 = sadd.s32 %s307, 1
      %p311 = scmp.eq.s32.totalorder %s26, 2
      %p312 = scmp.ne.s32.totalorder %s307, %s309
      %p313 = scmp.eq.s32.totalorder %s26, 0
      %p314 = por %p312, %p313
      %p315 = scmp.ne.s32.totalorder %s307, %s309
      %p316 = scmp.eq.s32.totalorder %s31, 2
      %p317 = por %p315, %p316
      %p318 = scmp.ne.s32.totalorder %s309, %s310
      %p319 = scmp.eq.s32.totalorder %s31, 0
      %p320 = por %p318, %p319
      %p321 = scmp.ne.s32.totalorder %s309, %s310
      %p322 = scmp.eq.s32.totalorder %s32, 2
      %p323 = por %p321, %p322
      %p325 = scmp.ne.s32.totalorder %s310, %s324
      %p326 = scmp.eq.s32.totalorder %s32, 0
      %p327 = por %p325, %p326
      %s329 = sadd.s32 %s328, 1
      %p332 = scmp.eq.s32.totalorder %s26, 2
      %p333 = scmp.ne.s32.totalorder %s328, %s330
      %p334 = scmp.eq.s32.totalorder %s26, 0
      %p335 = por %p333, %p334
      %p336 = scmp.ne.s32.totalorder %s328, %s330
      %p337 = scmp.eq.s32.totalorder %s31, 2
      %p338 = por %p336, %p337
      %p339 = scmp.ne.s32.totalorder %s330, %s331
      %p340 = scmp.eq.s32.totalorder %s31, 0
      %p341 = por %p339, %p340
      %p342 = scmp.ne.s32.totalorder %s330, %s331
      %p343 = scmp.eq.s32.totalorder %s32, 2
      %p344 = por %p342, %p343
      %p346 = scmp.ne.s32.totalorder %s331, %s345
      %p347 = scmp.eq.s32.totalorder %s32, 0
      %p348 = por %p346, %p347
      %s350 = sadd.s32 %s349, 1
      %p353 = scmp.eq.s32.totalorder %s26, 2
      %p354 = scmp.ne.s32.totalorder %s349, %s351
      %p355 = scmp.eq.s32.totalorder %s26, 0
      %p356 = por %p354, %p355
      %p357 = scmp.ne.s32.totalorder %s349, %s351
      %p358 = scmp.eq.s32.totalorder %s31, 2
      %p359 = por %p357, %p358
      %p360 = scmp.ne.s32.totalorder %s351, %s352
      %p361 = scmp.eq.s32.totalorder %s31, 0
      %p362 = por %p360, %p361
      %p363 = scmp.ne.s32.totalorder %s351, %s352
      %p364 = scmp.eq.s32.totalorder %s32, 2
      %p365 = por %p363, %p364
      %p367 = scmp.ne.s32.totalorder %s352, %s366
      %p368 = scmp.eq.s32.totalorder %s32, 0
      %p369 = por %p367, %p368
      %s370 = ssub.s32 %s26, %s33
      %p371 = scmp.eq.s32.totalorder %s370, 0
      %s373 = sadd.s32 %s372, 1
      %s374 = scalar_select %p371, %s372, %s373
      %p377 = pneg %p371
      %p378 = scmp.eq.s32.totalorder %s26, 2
      %p379 = por %p377, %p378
      %p380 = scmp.ne.s32.totalorder %s372, %s375
      %p381 = scmp.eq.s32.totalorder %s26, 0
      %p382 = por %p380, %p381
      %p383 = scmp.ne.s32.totalorder %s372, %s375
      %p384 = scmp.eq.s32.totalorder %s31, 2
      %p385 = por %p383, %p384
      %p386 = scmp.ne.s32.totalorder %s375, %s376
      %p387 = scmp.eq.s32.totalorder %s31, 0
      %p388 = por %p386, %p387
      %p389 = scmp.ne.s32.totalorder %s375, %s376
      %p390 = scmp.eq.s32.totalorder %s32, 2
      %p391 = por %p389, %p390
      %p393 = scmp.ne.s32.totalorder %s376, %s392
      %p394 = scmp.eq.s32.totalorder %s32, 0
      %p395 = por %p393, %p394
      %s396 = ssub.s32 %s26, %s33
      %p397 = scmp.eq.s32.totalorder %s396, 0
      %s399 = sadd.s32 %s398, 1
      %s400 = scalar_select %p397, %s398, %s399
      %p403 = pneg %p397
      %p404 = scmp.eq.s32.totalorder %s26, 2
      %p405 = por %p403, %p404
      %p406 = scmp.ne.s32.totalorder %s398, %s401
      %p407 = scmp.eq.s32.totalorder %s26, 0
      %p408 = por %p406, %p407
      %p409 = scmp.ne.s32.totalorder %s398, %s401
      %p410 = scmp.eq.s32.totalorder %s31, 2
      %p411 = por %p409, %p410
      %p412 = scmp.ne.s32.totalorder %s401, %s402
      %p413 = scmp.eq.s32.totalorder %s31, 0
      %p414 = por %p412, %p413
      %p415 = scmp.ne.s32.totalorder %s401, %s402
      %p416 = scmp.eq.s32.totalorder %s32, 2
      %p417 = por %p415, %p416
      %p419 = scmp.ne.s32.totalorder %s402, %s418
      %p420 = scmp.eq.s32.totalorder %s32, 0
      %p421 = por %p419, %p420
      %p422 = scmp.le.s32.totalorder 1, %s26
      %p423 = scmp.lt.s32.totalorder %s26, 4
      %p424 = pnand %p422, %p423
      %p425 = pneg %p424
      // Predicated region
      $region9: #{forward.11} parent=5 // pred_check
        _
      $region10: #{forward.11} parent=5 // pred_check_branch
        %427 = sbr.rel (%p424) target = $region12
      $region11: #{forward.11} parent=5 // pred_region
        %s428 = ssub.s32 %s26, 1
        // Predicated region
        $region13: #{forward.11} parent=11 // pred_check
          %p429 = pneg %p47
        $region14: #{forward.11} parent=11 // pred_check_branch
          %431 = sbr.rel (%p429) target = $region16
        $region15: #{forward.11} parent=11 // pred_region
          _
        $region16: #{forward.11} parent=11 // pred_fallthru
          _
        // Predicated region
        $region17: #{forward.11} parent=11 // pred_check
          %p432 = pneg %p68
        $region18: #{forward.11} parent=11 // pred_check_branch
          %434 = sbr.rel (%p432) target = $region20
        $region19: #{forward.11} parent=11 // pred_region
          _
        $region20: #{forward.11} parent=11 // pred_fallthru
          _
        // Predicated region
        $region21: #{forward.11} parent=11 // pred_check
          %p435 = pneg %p89
        $region22: #{forward.11} parent=11 // pred_check_branch
          %437 = sbr.rel (%p435) target = $region24
        $region23: #{forward.11} parent=11 // pred_region
          _
        $region24: #{forward.11} parent=11 // pred_fallthru
          _
        // Predicated region
        $region25: #{forward.11} parent=11 // pred_check
          %p438 = pneg %p110
        $region26: #{forward.11} parent=11 // pred_check_branch
          %440 = sbr.rel (%p438) target = $region28
        $region27: #{forward.11} parent=11 // pred_region
          _
        $region28: #{forward.11} parent=11 // pred_fallthru
          _
        // Predicated region
        $region29: #{forward.11} parent=11 // pred_check
          %p441 = pneg %p131
        $region30: #{forward.11} parent=11 // pred_check_branch
          %443 = sbr.rel (%p441) target = $region32
        $region31: #{forward.11} parent=11 // pred_region
          _
        $region32: #{forward.11} parent=11 // pred_fallthru
          _
        // Predicated region
        $region33: #{forward.11} parent=11 // pred_check
          %p444 = pneg %p152
        $region34: #{forward.11} parent=11 // pred_check_branch
          %446 = sbr.rel (%p444) target = $region36
        $region35: #{forward.11} parent=11 // pred_region
          _
        $region36: #{forward.11} parent=11 // pred_fallthru
          _
        // Predicated region
        $region37: #{forward.11} parent=11 // pred_check
          %p447 = pneg %p173
        $region38: #{forward.11} parent=11 // pred_check_branch
          %449 = sbr.rel (%p447) target = $region40
        $region39: #{forward.11} parent=11 // pred_region
          _
        $region40: #{forward.11} parent=11 // pred_fallthru
          _
        // Predicated region
        $region41: #{forward.11} parent=11 // pred_check
          %p450 = pneg %p194
        $region42: #{forward.11} parent=11 // pred_check_branch
          %452 = sbr.rel (%p450) target = $region44
        $region43: #{forward.11} parent=11 // pred_region
          _
        $region44: #{forward.11} parent=11 // pred_fallthru
          _
        // Predicated region
        $region45: #{forward.11} parent=11 // pred_check
          %p453 = pneg %p215
        $region46: #{forward.11} parent=11 // pred_check_branch
          %455 = sbr.rel (%p453) target = $region48
        $region47: #{forward.11} parent=11 // pred_region
          _
        $region48: #{forward.11} parent=11 // pred_fallthru
          _
        // Predicated region
        $region49: #{forward.11} parent=11 // pred_check
          %p456 = pneg %p236
        $region50: #{forward.11} parent=11 // pred_check_branch
          %458 = sbr.rel (%p456) target = $region52
        $region51: #{forward.11} parent=11 // pred_region
          _
        $region52: #{forward.11} parent=11 // pred_fallthru
          _
        // Predicated region
        $region53: #{forward.11} parent=11 // pred_check
          %p459 = pneg %p257
        $region54: #{forward.11} parent=11 // pred_check_branch
          %461 = sbr.rel (%p459) target = $region56
        $region55: #{forward.11} parent=11 // pred_region
          _
        $region56: #{forward.11} parent=11 // pred_fallthru
          _
        // Predicated region
        $region57: #{forward.11} parent=11 // pred_check
          %p462 = pneg %p278
        $region58: #{forward.11} parent=11 // pred_check_branch
          %464 = sbr.rel (%p462) target = $region60
        $region59: #{forward.11} parent=11 // pred_region
          _
        $region60: #{forward.11} parent=11 // pred_fallthru
          _
        // Predicated region
        $region61: #{forward.11} parent=11 // pred_check
          %p465 = pneg %p299
        $region62: #{forward.11} parent=11 // pred_check_branch
          %467 = sbr.rel (%p465) target = $region64
        $region63: #{forward.11} parent=11 // pred_region
          _
        $region64: #{forward.11} parent=11 // pred_fallthru
          _
        // Predicated region
        $region65: #{forward.11} parent=11 // pred_check
          %p468 = pneg %p320
        $region66: #{forward.11} parent=11 // pred_check_branch
          %470 = sbr.rel (%p468) target = $region68
        $region67: #{forward.11} parent=11 // pred_region
          _
        $region68: #{forward.11} parent=11 // pred_fallthru
          _
        // Predicated region
        $region69: #{forward.11} parent=11 // pred_check
          %p471 = pneg %p341
        $region70: #{forward.11} parent=11 // pred_check_branch
          %473 = sbr.rel (%p471) target = $region72
        $region71: #{forward.11} parent=11 // pred_region
          _
        $region72: #{forward.11} parent=11 // pred_fallthru
          _
        // Predicated region
        $region73: #{forward.11} parent=11 // pred_check
          %p474 = pneg %p362
        $region74: #{forward.11} parent=11 // pred_check_branch
          %476 = sbr.rel (%p474) target = $region76
        $region75: #{forward.11} parent=11 // pred_region
          _
        $region76: #{forward.11} parent=11 // pred_fallthru
          _
      $region12: #{forward.11} parent=5 // pred_fallthru
        _
      %p477 = scmp.lt.s32.totalorder %s26, 3
      // Predicated region
      $region77: #{forward.11} parent=5 // pred_check
        %p478 = pneg %p477
      $region78: #{forward.11} parent=5 // pred_check_branch
        %480 = sbr.rel (%p478) target = $region80
      $region79: #{forward.11} parent=5 // pred_region
        // Predicated region
        $region81: #{forward.11} parent=79 // pred_check
          %p481 = pneg %p382
        $region82: #{forward.11} parent=79 // pred_check_branch
          %483 = sbr.rel (%p481) target = $region84
        $region83: #{forward.11} parent=79 // pred_region
          %s484 = sand.u32 %s372, 1
          %s485 = sand.u32 %s372, 1
          %s486 = smul.addr %s485, 32
          %s487 = scalar_lea.vmem [#allocation3], %s486
          %s488 = smul.addr %s26, 4
          %s489 = scalar_lea.vmem %s16, %s488
          // Predicated region
          $region85: #{forward.11} parent=83 // pred_check
            _
          $region86: #{forward.11} parent=83 // pred_check_branch
            %491 = sbr.rel (0) target = $region88
          $region87: #{forward.11} parent=83 // pred_region
            // Predicated region
            $region89: #{forward.11} parent=87 // pred_check
              _
            $region90: #{forward.11} parent=87 // pred_check_branch
              %493 = sbr.rel target = $region92
            $region91: #{forward.11} parent=87 // pred_region
              // Predicated region
              $region104: #{forward.11} parent=91 // pred_check
                _
              $region105: #{forward.11} parent=91 // pred_check_branch
                %522 = sbr.rel (0) target = $region107
              $region106: #{forward.11} parent=91 // pred_region
                loop: start=0, step=1, limit=1
                $region108: #{forward.11} parent=106 // loop_pre_header
                  _
                $region109: #{forward.11} parent=106 // loop_header
                  %s524 = sphi 0, %s528
                  %p525 = scmp.ge.s32.totalorder %s524, 1
                  %s529 = sphi %s489, %s489
                  %s530 = sphi %s487, %s487
                $region110: #{forward.11} parent=106 // loop_header_branch
                  %527 = sbr.rel (%p525) target = $region114
                $region111: #{forward.11} parent=106 // loop_body
                  _
                $region112: #{forward.11} parent=106 // loop_footer
                  %s528 = sadd.s32 1, %s524
                $region113: #{forward.11} parent=106 // loop_footer_branch
                  %523 = sbr.rel target = $region109
                $region114: #{forward.11} parent=106 // loop_exit
                  _
                loop: start=0, step=1, limit=1
                $region115: #{forward.11} parent=106 // loop_pre_header
                  _
                $region116: #{forward.11} parent=106 // loop_header
                  %s533 = sphi 0, %s537
                  %p534 = scmp.ge.s32.totalorder %s533, 1
                  %s538 = sphi %s489, %s489
                  %s539 = sphi %s487, %s487
                $region117: #{forward.11} parent=106 // loop_header_branch
                  %536 = sbr.rel (%p534) target = $region121
                $region118: #{forward.11} parent=106 // loop_body
                  %v540 = vld [vmem:[%s538] sm:$0xf]
                  %541 = vst [vmem:[%s539] sm:$0xf] %v540
                  %v542 = vld [vmem:[%s538 + $0xc] sm:$0xf]
                  %543 = vst [vmem:[%s539 + $0x4] sm:$0xf] %v542
                  %v544 = vld [vmem:[%s538 + $0x18] sm:$0xf]
                  %545 = vst [vmem:[%s539 + $0x8] sm:$0xf] %v544
                  %v546 = vld [vmem:[%s538 + $0x24] sm:$0xf]
                  %547 = vst [vmem:[%s539 + $0xc] sm:$0xf] %v546
                  %v548 = vld [vmem:[%s538 + $0x30] sm:$0xf]
                  %549 = vst [vmem:[%s539 + $0x10] sm:$0xf] %v548
                  %v550 = vld [vmem:[%s538 + $0x3c] sm:$0xf]
                  %551 = vst [vmem:[%s539 + $0x14] sm:$0xf] %v550
                  %v552 = vld [vmem:[%s538 + $0x48] sm:$0xf]
                  %553 = vst [vmem:[%s539 + $0x18] sm:$0xf] %v552
                  %v554 = vld [vmem:[%s538 + $0x54] sm:$0xf]
                  %555 = vst [vmem:[%s539 + $0x1c] sm:$0xf] %v554
                $region119: #{forward.11} parent=106 // loop_footer
                  %s537 = sadd.s32 1, %s533
                $region120: #{forward.11} parent=106 // loop_footer_branch
                  %532 = sbr.rel target = $region116
                $region121: #{forward.11} parent=106 // loop_exit
                  _
              $region107: #{forward.11} parent=91 // pred_fallthru
                _
            $region92: #{forward.11} parent=87 // pred_fallthru
              _
            // Predicated region
            $region93: #{forward.11} parent=87 // pred_check
              _
            $region94: #{forward.11} parent=87 // pred_check_branch
              %495 = sbr.rel (0) target = $region96
            $region95: #{forward.11} parent=87 // pred_region
              loop: start=0, step=1, limit=1
              $region97: #{forward.11} parent=95 // loop_pre_header
                _
              $region98: #{forward.11} parent=95 // loop_header
                %s498 = sphi 0, %s502
                %p499 = scmp.ge.s32.totalorder %s498, 1
                %s503 = sphi %s489, %s489
                %s504 = sphi %s487, %s487
              $region99: #{forward.11} parent=95 // loop_header_branch
                %501 = sbr.rel (%p499) target = $region103
              $region100: #{forward.11} parent=95 // loop_body
                %v505 = vld [vmem:[%s503] sm:$0xf]
                %506 = vst [vmem:[%s504] sm:$0xf] %v505
                %v507 = vld [vmem:[%s503 + $0xc] sm:$0xf]
                %508 = vst [vmem:[%s504 + $0x4] sm:$0xf] %v507
                %v509 = vld [vmem:[%s503 + $0x18] sm:$0xf]
                %510 = vst [vmem:[%s504 + $0x8] sm:$0xf] %v509
                %v511 = vld [vmem:[%s503 + $0x24] sm:$0xf]
                %512 = vst [vmem:[%s504 + $0xc] sm:$0xf] %v511
                %v513 = vld [vmem:[%s503 + $0x30] sm:$0xf]
                %514 = vst [vmem:[%s504 + $0x10] sm:$0xf] %v513
                %v515 = vld [vmem:[%s503 + $0x3c] sm:$0xf]
                %516 = vst [vmem:[%s504 + $0x14] sm:$0xf] %v515
                %v517 = vld [vmem:[%s503 + $0x48] sm:$0xf]
                %518 = vst [vmem:[%s504 + $0x18] sm:$0xf] %v517
                %v519 = vld [vmem:[%s503 + $0x54] sm:$0xf]
                %520 = vst [vmem:[%s504 + $0x1c] sm:$0xf] %v519
              $region101: #{forward.11} parent=95 // loop_footer
                %s502 = sadd.s32 1, %s498
              $region102: #{forward.11} parent=95 // loop_footer_branch
                %497 = sbr.rel target = $region98
              $region103: #{forward.11} parent=95 // loop_exit
                _
            $region96: #{forward.11} parent=87 // pred_fallthru
              _
          $region88: #{forward.11} parent=83 // pred_fallthru
            _
          %556 = vnop
        $region84: #{forward.11} parent=79 // pred_fallthru
          _
      $region80: #{forward.11} parent=5 // pred_fallthru
        _
      %p557 = scmp.le.s32.totalorder 1, %s26
      %p558 = scmp.lt.s32.totalorder %s26, 4
      %p559 = pnand %p557, %p558
      %p560 = pneg %p559
      // Predicated region
      $region122: #{forward.11} parent=5 // pred_check
        _
      $region123: #{forward.11} parent=5 // pred_check_branch
        %562 = sbr.rel (%p559) target = $region125
      $region124: #{forward.11} parent=5 // pred_region
        %s563 = ssub.s32 %s26, 1
        %s564 = sand.u32 %s375, 1
        %s565 = sand.u32 %s375, 1
        %s566 = smul.addr %s565, 32
        %s567 = scalar_lea.vmem [#allocation3], %s566
        // Predicated region
        $region126: #{forward.11} parent=124 // pred_check
          %p568 = pneg %p388
        $region127: #{forward.11} parent=124 // pred_check_branch
          %570 = sbr.rel (%p568) target = $region129
        $region128: #{forward.11} parent=124 // pred_region
          _
        $region129: #{forward.11} parent=124 // pred_fallthru
          _
        %p571 = pneg %p47
        %p572 = pneg %p44
        %p573 = pneg %p68
        %p574 = pneg %p65
        %p575 = pneg %p89
        %p576 = pneg %p86
        %p577 = pneg %p110
        %p578 = pneg %p107
        %p579 = pneg %p131
        %p580 = pneg %p128
        %p581 = pneg %p152
        %p582 = pneg %p149
        %p583 = pneg %p173
        %p584 = pneg %p170
        %p585 = pneg %p194
        %p586 = pneg %p191
        %p587 = pneg %p215
        %p588 = pneg %p212
        %p589 = pneg %p236
        %p590 = pneg %p233
        %p591 = pneg %p257
        %p592 = pneg %p254
        %p593 = pneg %p278
        %p594 = pneg %p275
        %p595 = pneg %p299
        %p596 = pneg %p296
        %p597 = pneg %p320
        %p598 = pneg %p317
        %p599 = pneg %p341
        %p600 = pneg %p338
        %p601 = pneg %p362
        %p602 = pneg %p359
        %s603 = sand.u32 %s375, 1
        %s604 = sand.u32 %s375, 1
        %s605 = smul.addr %s604, 32
        %s606 = scalar_lea.vmem [#allocation3], %s605
        %p607 = pneg %p388
        %p608 = pneg %p385
        %p609 = pneg %p414
        %p610 = pneg %p411
        %s611 = sand.u32 %s401, 1
        %s612 = scalar_lea.sflag [#allocation5], %s611
        %s613 = sand.u32 %s401, 1
        %s614 = smul.addr %s613, 2
        %s615 = scalar_lea.vmem [#allocation4], %s614
        %v617 = vld [vmem:[%s0] sm:$0x1]
        %v618 = vld [vmem:[%s5] sm:$0xf]
        %v619 = vld [vmem:[%s5 + $0x4] sm:$0xf]
        %v620 = vld [vmem:[%s5 + $0x8] sm:$0xf]
        %v621 = vld [vmem:[%s5 + $0xc] sm:$0xf]
        %v622 = vld [vmem:[%s5 + $0x10] sm:$0xf]
        %v623 = vld [vmem:[%s5 + $0x14] sm:$0xf]
        %v624 = vld [vmem:[%s5 + $0x18] sm:$0xf]
        %v625 = vld [vmem:[%s5 + $0x1c] sm:$0xf]
        %v626 = vld [vmem:[%s10] sm:$0x1]
        %v628 = vlaneseq
        %v629 = vshrl.u32 %v628, 7
        %v630 = vsub.s32 0, %v629
        %v631 = vrot.slane %v626, %v630
        %v641 = vunpack.c.l.b16 %v618
        %v642 = vunpack.c.l.b16 %v619
        %v643 = vunpack.c.l.b16 %v620
        %v644 = vunpack.c.l.b16 %v621
        %v645 = vunpack.c.l.b16 %v622
        %v646 = vunpack.c.l.b16 %v623
        %v647 = vunpack.c.l.b16 %v624
        %v648 = vunpack.c.l.b16 %v625
        %v649 = vpack.c.b16 %v642, %v641
        %v650 = vpack.c.b16 %v644, %v643
        %v651 = vpack.c.b16 %v646, %v645
        %v652 = vpack.c.b16 %v648, %v647
        %vm657 = vcmask 523264
        %v659 = vsel %vm657, %v617, 0
        %661 = vmatprep.subr.bf16.mxu0 0
        %662 = vmatpush1.bf16.msra.mxu0 %v649
        %663 = vmatprep.subr.bf16.mxu0 0
        %664 = vmatpush1.bf16.msra.mxu0 %v650
        %665 = vmatprep.subr.bf16.mxu0 0
        %666 = vmatpush1.bf16.msra.mxu0 %v651
        %667 = vmatprep.subr.bf16.mxu0 0
        %668 = vmatpush1.bf16.msra.mxu0 %v652
        %669 = vmatprep.subr.bf16.mxu0 0
        %670 = vmatpush1.bf16.msra.mxu0 0
        %671 = vmatprep.subr.bf16.mxu0 0
        %672 = vmatpush1.bf16.msra.mxu0 0
        %673 = vmatprep.subr.bf16.mxu0 0
        %674 = vmatpush1.bf16.msra.mxu0 0
        %675 = vmatprep.subr.bf16.mxu0 0
        %676 = vmatpush1.bf16.msra.mxu0 0
        %677 = vmatprep.subr.bf16.mxu0 0
        %678 = vmatpush1.bf16.msra.mxu0 0
        %679 = vmatprep.subr.bf16.mxu0 0
        %680 = vmatpush1.bf16.msra.mxu0 0
        %681 = vmatprep.subr.bf16.mxu0 0
        %682 = vmatpush1.bf16.msra.mxu0 0
        %683 = vmatprep.subr.bf16.mxu0 0
        %684 = vmatpush1.bf16.msra.mxu0 0
        %685 = vmatprep.subr.bf16.mxu0 0
        %686 = vmatpush1.bf16.msra.mxu0 0
        %687 = vmatprep.subr.bf16.mxu0 0
        %688 = vmatpush1.bf16.msra.mxu0 0
        %689 = vmatprep.subr.bf16.mxu0 0
        %690 = vmatpush1.bf16.msra.mxu0 0
        %691 = vmatprep.subr.bf16.mxu0 0
        %692 = vmatpush1.bf16.msra.mxu0 0
        %693 = vmatprep.mubr.bf16.mxu0 0
        %694 = vmatmul.mubr.bf16.gmra.mrb[0].mxu0 %v659
        %v695 = vpop.f32.mrb[0].mxu0
        %v696 = vadd.f32 %v631, %v695
        %v697 = vpop.f32.mrb[0].mxu0
        %v698 = vpop.f32.mrb[0].mxu0
        %v699 = vpop.f32.mrb[0].mxu0
        %700 = vdwg.mxu0
        %vm701 = vcmask 254976
        %702 = vst.msk [vmem:[#allocation2] sm:$0x3] %vm701, %v696
        %v703 = vld [vmem:[%s1] sm:$0xff]
        %v705 = vcombine.high %v703, %v703
        %v707 = vunpack.c.l.s4 1983009808
        %v708 = vunpack.c.0.s8 %v707
        %v709 = vlaneseq
        %v710 = vshrl.u32 %v709, 7
        %v711 = vsub.s32 %v708, %v710
        %v712 = vrot.slane %v703, %v711
        %v714 = vunpack.c.l.s4 1983009808
        %v715 = vunpack.c.0.s8 %v714
        %v716 = vlaneseq
        %v717 = vshrl.u32 %v716, 7
        %v718 = vsub.s32 %v715, %v717
        %v719 = vrot.slane %v705, %v718
        %v720 = vcombine.high %v712, %v712
        %v721 = vcombine.high %v719, %v719
        %v726 = vpack.c.bf16 %v712, %v712
        %v727 = vpack.c.bf16 %v720, %v720
        %v728 = vpack.c.bf16 %v719, %v719
        %v729 = vpack.c.bf16 %v721, %v721
        %v730 = vld [vmem:[%s6] sm:$0xf]
        %v731 = vld [vmem:[%s6 + $0x4] sm:$0xf]
        %v732 = vld [vmem:[%s6 + $0x8] sm:$0xf]
        %v733 = vld [vmem:[%s6 + $0xc] sm:$0xf]
        %v734 = vld [vmem:[%s6 + $0x10] sm:$0xf]
        %v735 = vld [vmem:[%s6 + $0x14] sm:$0xf]
        %v736 = vld [vmem:[%s6 + $0x18] sm:$0xf]
        %v737 = vld [vmem:[%s6 + $0x1c] sm:$0xf]
        %v738 = vld [vmem:[%s6 + $0x20] sm:$0xf]
        %v739 = vld [vmem:[%s6 + $0x24] sm:$0xf]
        %v740 = vld [vmem:[%s6 + $0x28] sm:$0xf]
        %v741 = vld [vmem:[%s6 + $0x2c] sm:$0xf]
        %v742 = vld [vmem:[%s6 + $0x30] sm:$0xf]
        %v743 = vld [vmem:[%s6 + $0x34] sm:$0xf]
        %v744 = vld [vmem:[%s6 + $0x38] sm:$0xf]
        %v745 = vld [vmem:[%s6 + $0x3c] sm:$0xf]
        %v746 = vld [vmem:[%s6 + $0x40] sm:$0xf]
        %v747 = vld [vmem:[%s6 + $0x44] sm:$0xf]
        %v748 = vld [vmem:[%s6 + $0x48] sm:$0xf]
        %v749 = vld [vmem:[%s6 + $0x4c] sm:$0xf]
        %v750 = vld [vmem:[%s6 + $0x50] sm:$0xf]
        %v751 = vld [vmem:[%s6 + $0x54] sm:$0xf]
        %v752 = vld [vmem:[%s6 + $0x58] sm:$0xf]
        %v753 = vld [vmem:[%s6 + $0x5c] sm:$0xf]
        %v754 = vld [vmem:[%s6 + $0x60] sm:$0xf]
        %v755 = vld [vmem:[%s6 + $0x64] sm:$0xf]
        %v756 = vld [vmem:[%s6 + $0x68] sm:$0xf]
        %v757 = vld [vmem:[%s6 + $0x6c] sm:$0xf]
        %v758 = vld [vmem:[%s6 + $0x70] sm:$0xf]
        %v759 = vld [vmem:[%s6 + $0x74] sm:$0xf]
        %v760 = vld [vmem:[%s6 + $0x78] sm:$0xf]
        %v761 = vld [vmem:[%s6 + $0x7c] sm:$0xf]
        %v762 = vld [vmem:[%s6 + $0x80] sm:$0xf]
        %v763 = vld [vmem:[%s6 + $0x84] sm:$0xf]
        %v764 = vld [vmem:[%s6 + $0x88] sm:$0xf]
        %v765 = vld [vmem:[%s6 + $0x8c] sm:$0xf]
        %v766 = vld [vmem:[%s6 + $0x90] sm:$0xf]
        %v767 = vld [vmem:[%s6 + $0x94] sm:$0xf]
        %v768 = vld [vmem:[%s6 + $0x98] sm:$0xf]
        %v769 = vld [vmem:[%s6 + $0x9c] sm:$0xf]
        %v770 = vld [vmem:[%s6 + $0xa0] sm:$0xf]
        %v771 = vld [vmem:[%s6 + $0xa4] sm:$0xf]
        %v772 = vld [vmem:[%s6 + $0xa8] sm:$0xf]
        %v773 = vld [vmem:[%s6 + $0xac] sm:$0xf]
        %v774 = vld [vmem:[%s6 + $0xb0] sm:$0xf]
        %v775 = vld [vmem:[%s6 + $0xb4] sm:$0xf]
        %v776 = vld [vmem:[%s6 + $0xb8] sm:$0xf]
        %v777 = vld [vmem:[%s6 + $0xbc] sm:$0xf]
        %v778 = vld [vmem:[%s6 + $0xc0] sm:$0xf]
        %v779 = vld [vmem:[%s6 + $0xc4] sm:$0xf]
        %v780 = vld [vmem:[%s6 + $0xc8] sm:$0xf]
        %v781 = vld [vmem:[%s6 + $0xcc] sm:$0xf]
        %v782 = vld [vmem:[%s6 + $0xd0] sm:$0xf]
        %v783 = vld [vmem:[%s6 + $0xd4] sm:$0xf]
        %v784 = vld [vmem:[%s6 + $0xd8] sm:$0xf]
        %v785 = vld [vmem:[%s6 + $0xdc] sm:$0xf]
        %v786 = vld [vmem:[%s6 + $0xe0] sm:$0xf]
        %v787 = vld [vmem:[%s6 + $0xe4] sm:$0xf]
        %v788 = vld [vmem:[%s6 + $0xe8] sm:$0xf]
        %v789 = vld [vmem:[%s6 + $0xec] sm:$0xf]
        %v790 = vld [vmem:[%s6 + $0xf0] sm:$0xf]
        %v791 = vld [vmem:[%s6 + $0xf4] sm:$0xf]
        %v792 = vld [vmem:[%s6 + $0xf8] sm:$0xf]
        %v793 = vld [vmem:[%s6 + $0xfc] sm:$0xf]
        %v794 = vld [vmem:[%s11] sm:$0x1]
        %v796 = vlaneseq
        %v797 = vshrl.u32 %v796, 7
        %v798 = vsub.s32 0, %v797
        %v799 = vrot.slane %v794, %v798
        %v865 = vunpack.c.l.b16 %v730
        %v866 = vunpack.c.l.b16 %v731
        %v867 = vunpack.c.l.b16 %v732
        %v868 = vunpack.c.l.b16 %v733
        %v869 = vunpack.c.l.b16 %v734
        %v870 = vunpack.c.l.b16 %v735
        %v871 = vunpack.c.l.b16 %v736
        %v872 = vunpack.c.l.b16 %v737
        %v873 = vunpack.c.l.b16 %v738
        %v874 = vunpack.c.l.b16 %v739
        %v875 = vunpack.c.l.b16 %v740
        %v876 = vunpack.c.l.b16 %v741
        %v877 = vunpack.c.l.b16 %v742
        %v878 = vunpack.c.l.b16 %v743
        %v879 = vunpack.c.l.b16 %v744
        %v880 = vunpack.c.l.b16 %v745
        %v881 = vunpack.c.l.b16 %v746
        %v882 = vunpack.c.l.b16 %v747
        %v883 = vunpack.c.l.b16 %v748
        %v884 = vunpack.c.l.b16 %v749
        %v885 = vunpack.c.l.b16 %v750
        %v886 = vunpack.c.l.b16 %v751
        %v887 = vunpack.c.l.b16 %v752
        %v888 = vunpack.c.l.b16 %v753
        %v889 = vunpack.c.l.b16 %v754
        %v890 = vunpack.c.l.b16 %v755
        %v891 = vunpack.c.l.b16 %v756
        %v892 = vunpack.c.l.b16 %v757
        %v893 = vunpack.c.l.b16 %v758
        %v894 = vunpack.c.l.b16 %v759
        %v895 = vunpack.c.l.b16 %v760
        %v896 = vunpack.c.l.b16 %v761
        %v897 = vunpack.c.l.b16 %v762
        %v898 = vunpack.c.l.b16 %v763
        %v899 = vunpack.c.l.b16 %v764
        %v900 = vunpack.c.l.b16 %v765
        %v901 = vunpack.c.l.b16 %v766
        %v902 = vunpack.c.l.b16 %v767
        %v903 = vunpack.c.l.b16 %v768
        %v904 = vunpack.c.l.b16 %v769
        %v905 = vunpack.c.l.b16 %v770
        %v906 = vunpack.c.l.b16 %v771
        %v907 = vunpack.c.l.b16 %v772
        %v908 = vunpack.c.l.b16 %v773
        %v909 = vunpack.c.l.b16 %v774
        %v910 = vunpack.c.l.b16 %v775
        %v911 = vunpack.c.l.b16 %v776
        %v912 = vunpack.c.l.b16 %v777
        %v913 = vunpack.c.l.b16 %v778
        %v914 = vunpack.c.l.b16 %v779
        %v915 = vunpack.c.l.b16 %v780
        %v916 = vunpack.c.l.b16 %v781
        %v917 = vunpack.c.l.b16 %v782
        %v918 = vunpack.c.l.b16 %v783
        %v919 = vunpack.c.l.b16 %v784
        %v920 = vunpack.c.l.b16 %v785
        %v921 = vunpack.c.l.b16 %v786
        %v922 = vunpack.c.l.b16 %v787
        %v923 = vunpack.c.l.b16 %v788
        %v924 = vunpack.c.l.b16 %v789
        %v925 = vunpack.c.l.b16 %v790
        %v926 = vunpack.c.l.b16 %v791
        %v927 = vunpack.c.l.b16 %v792
        %v928 = vunpack.c.l.b16 %v793
        %v929 = vpack.c.b16 %v866, %v865
        %v930 = vpack.c.b16 %v868, %v867
        %v931 = vpack.c.b16 %v870, %v869
        %v932 = vpack.c.b16 %v872, %v871
        %v933 = vpack.c.b16 %v874, %v873
        %v934 = vpack.c.b16 %v876, %v875
        %v935 = vpack.c.b16 %v878, %v877
        %v936 = vpack.c.b16 %v880, %v879
        %v937 = vpack.c.b16 %v882, %v881
        %v938 = vpack.c.b16 %v884, %v883
        %v939 = vpack.c.b16 %v886, %v885
        %v940 = vpack.c.b16 %v888, %v887
        %v941 = vpack.c.b16 %v890, %v889
        %v942 = vpack.c.b16 %v892, %v891
        %v943 = vpack.c.b16 %v894, %v893
        %v944 = vpack.c.b16 %v896, %v895
        %v945 = vpack.c.b16 %v898, %v897
        %v946 = vpack.c.b16 %v900, %v899
        %v947 = vpack.c.b16 %v902, %v901
        %v948 = vpack.c.b16 %v904, %v903
        %v949 = vpack.c.b16 %v906, %v905
        %v950 = vpack.c.b16 %v908, %v907
        %v951 = vpack.c.b16 %v910, %v909
        %v952 = vpack.c.b16 %v912, %v911
        %v953 = vpack.c.b16 %v914, %v913
        %v954 = vpack.c.b16 %v916, %v915
        %v955 = vpack.c.b16 %v918, %v917
        %v956 = vpack.c.b16 %v920, %v919
        %v957 = vpack.c.b16 %v922, %v921
        %v958 = vpack.c.b16 %v924, %v923
        %v959 = vpack.c.b16 %v926, %v925
        %v960 = vpack.c.b16 %v928, %v927
        %993 = vmatprep.subr.bf16.mxu0 0
        %994 = vmatpush1.bf16.msra.mxu0 %v929
        %995 = vmatprep.subr.bf16.mxu0 0
        %996 = vmatpush1.bf16.msra.mxu0 %v930
        %997 = vmatprep.subr.bf16.mxu0 0
        %998 = vmatpush1.bf16.msra.mxu0 %v931
        %999 = vmatprep.subr.bf16.mxu0 0
        %1000 = vmatpush1.bf16.msra.mxu0 %v932
        %1001 = vmatprep.subr.bf16.mxu0 0
        %1002 = vmatpush1.bf16.msra.mxu0 %v933
        %1003 = vmatprep.subr.bf16.mxu0 0
        %1004 = vmatpush1.bf16.msra.mxu0 %v934
        %1005 = vmatprep.subr.bf16.mxu0 0
        %1006 = vmatpush1.bf16.msra.mxu0 %v935
        %1007 = vmatprep.subr.bf16.mxu0 0
        %1008 = vmatpush1.bf16.msra.mxu0 %v936
        %1009 = vmatprep.subr.bf16.mxu0 0
        %1010 = vmatpush1.bf16.msra.mxu0 %v937
        %1011 = vmatprep.subr.bf16.mxu0 0
        %1012 = vmatpush1.bf16.msra.mxu0 %v938
        %1013 = vmatprep.subr.bf16.mxu0 0
        %1014 = vmatpush1.bf16.msra.mxu0 %v939
        %1015 = vmatprep.subr.bf16.mxu0 0
        %1016 = vmatpush1.bf16.msra.mxu0 %v940
        %1017 = vmatprep.subr.bf16.mxu0 0
        %1018 = vmatpush1.bf16.msra.mxu0 %v941
        %1019 = vmatprep.subr.bf16.mxu0 0
        %1020 = vmatpush1.bf16.msra.mxu0 %v942
        %1021 = vmatprep.subr.bf16.mxu0 0
        %1022 = vmatpush1.bf16.msra.mxu0 %v943
        %1023 = vmatprep.subr.bf16.mxu0 0
        %1024 = vmatpush1.bf16.msra.mxu0 %v944
        %1025 = vmatprep.mubr.bf16.mxu0 %v727
        %1026 = vmatmul.mubr.bf16.gmra.mrb[0].mxu0 %v726
        %v1027 = vpop.f32.mrb[0].mxu0
        %v1028 = vadd.f32 %v799, %v1027
        %v1029 = vpop.f32.mrb[0].mxu0
        %v1030 = vpop.f32.mrb[0].mxu0
        %v1031 = vpop.f32.mrb[0].mxu0
        %1032 = vdwg.mxu0
        %1033 = vmatprep.subr.bf16.mxu0 0
        %1034 = vmatpush1.bf16.msra.mxu0 %v945
        %1035 = vmatprep.subr.bf16.mxu0 0
        %1036 = vmatpush1.bf16.msra.mxu0 %v946
        %1037 = vmatprep.subr.bf16.mxu0 0
        %1038 = vmatpush1.bf16.msra.mxu0 %v947
        %1039 = vmatprep.subr.bf16.mxu0 0
        %1040 = vmatpush1.bf16.msra.mxu0 %v948
        %1041 = vmatprep.subr.bf16.mxu0 0
        %1042 = vmatpush1.bf16.msra.mxu0 %v949
        %1043 = vmatprep.subr.bf16.mxu0 0
        %1044 = vmatpush1.bf16.msra.mxu0 %v950
        %1045 = vmatprep.subr.bf16.mxu0 0
        %1046 = vmatpush1.bf16.msra.mxu0 %v951
        %1047 = vmatprep.subr.bf16.mxu0 0
        %1048 = vmatpush1.bf16.msra.mxu0 %v952
        %1049 = vmatprep.subr.bf16.mxu0 0
        %1050 = vmatpush1.bf16.msra.mxu0 %v953
        %1051 = vmatprep.subr.bf16.mxu0 0
        %1052 = vmatpush1.bf16.msra.mxu0 %v954
        %1053 = vmatprep.subr.bf16.mxu0 0
        %1054 = vmatpush1.bf16.msra.mxu0 %v955
        %1055 = vmatprep.subr.bf16.mxu0 0
        %1056 = vmatpush1.bf16.msra.mxu0 %v956
        %1057 = vmatprep.subr.bf16.mxu0 0
        %1058 = vmatpush1.bf16.msra.mxu0 %v957
        %1059 = vmatprep.subr.bf16.mxu0 0
        %1060 = vmatpush1.bf16.msra.mxu0 %v958
        %1061 = vmatprep.subr.bf16.mxu0 0
        %1062 = vmatpush1.bf16.msra.mxu0 %v959
        %1063 = vmatprep.subr.bf16.mxu0 0
        %1064 = vmatpush1.bf16.msra.mxu0 %v960
        %1065 = vmatprep.mubr.bf16.mxu0 %v729
        %1066 = vmatmul.mubr.bf16.gmra.mrb[0].mxu0 %v728
        %v1067 = vpop.f32.mrb[0].mxu0
        %v1068 = vadd.f32 %v1028, %v1067
        %v1069 = vpop.f32.mrb[0].mxu0
        %v1070 = vpop.f32.mrb[0].mxu0
        %v1071 = vpop.f32.mrb[0].mxu0
        %1072 = vdwg.mxu0
        %1074 = vrot.lane.b32.xlu0 %v1068, 32
        %v1075 = vpop.permute.xlu0 %1074
        %vm1077 = vcmask 320768
        %1078 = vst.msk [vmem:[#allocation2] sm:$0x3] %vm1077, %v1075
        %v1079 = vld [vmem:[%s2] sm:$0x3]
        %v1080 = vpack.c.bf16 %v1079, %v1079
        %v1081 = vld [vmem:[%s7] sm:$0xf]
        %v1082 = vld [vmem:[%s7 + $0x4] sm:$0xf]
        %v1083 = vld [vmem:[%s7 + $0x8] sm:$0xf]
        %v1084 = vld [vmem:[%s7 + $0xc] sm:$0xf]
        %v1085 = vld [vmem:[%s7 + $0x10] sm:$0xf]
        %v1086 = vld [vmem:[%s7 + $0x14] sm:$0xf]
        %v1087 = vld [vmem:[%s7 + $0x18] sm:$0xf]
        %v1088 = vld [vmem:[%s7 + $0x1c] sm:$0xf]
        %v1089 = vld [vmem:[%s7 + $0x20] sm:$0xf]
        %v1090 = vld [vmem:[%s7 + $0x24] sm:$0xf]
        %v1091 = vld [vmem:[%s7 + $0x28] sm:$0xf]
        %v1092 = vld [vmem:[%s7 + $0x2c] sm:$0xf]
        %v1093 = vld [vmem:[%s7 + $0x30] sm:$0xf]
        %v1094 = vld [vmem:[%s7 + $0x34] sm:$0xf]
        %v1095 = vld [vmem:[%s7 + $0x38] sm:$0xf]
        %v1096 = vld [vmem:[%s7 + $0x3c] sm:$0xf]
        %v1097 = vld [vmem:[%s12] sm:$0x1]
        %v1099 = vlaneseq
        %v1100 = vshrl.u32 %v1099, 7
        %v1101 = vsub.s32 0, %v1100
        %v1102 = vrot.slane %v1097, %v1101
        %v1120 = vunpack.c.l.b16 %v1081
        %v1121 = vunpack.c.l.b16 %v1082
        %v1122 = vunpack.c.l.b16 %v1083
        %v1123 = vunpack.c.l.b16 %v1084
        %v1124 = vunpack.c.l.b16 %v1085
        %v1125 = vunpack.c.l.b16 %v1086
        %v1126 = vunpack.c.l.b16 %v1087
        %v1127 = vunpack.c.l.b16 %v1088
        %v1128 = vunpack.c.l.b16 %v1089
        %v1129 = vunpack.c.l.b16 %v1090
        %v1130 = vunpack.c.l.b16 %v1091
        %v1131 = vunpack.c.l.b16 %v1092
        %v1132 = vunpack.c.l.b16 %v1093
        %v1133 = vunpack.c.l.b16 %v1094
        %v1134 = vunpack.c.l.b16 %v1095
        %v1135 = vunpack.c.l.b16 %v1096
        %v1136 = vpack.c.b16 %v1121, %v1120
        %v1137 = vpack.c.b16 %v1123, %v1122
        %v1138 = vpack.c.b16 %v1125, %v1124
        %v1139 = vpack.c.b16 %v1127, %v1126
        %v1140 = vpack.c.b16 %v1129, %v1128
        %v1141 = vpack.c.b16 %v1131, %v1130
        %v1142 = vpack.c.b16 %v1133, %v1132
        %v1143 = vpack.c.b16 %v1135, %v1134
        %1152 = vmatprep.subr.bf16.mxu0 0
        %1153 = vmatpush1.bf16.msra.mxu0 %v1136
        %1154 = vmatprep.subr.bf16.mxu0 0
        %1155 = vmatpush1.bf16.msra.mxu0 %v1137
        %1156 = vmatprep.subr.bf16.mxu0 0
        %1157 = vmatpush1.bf16.msra.mxu0 %v1138
        %1158 = vmatprep.subr.bf16.mxu0 0
        %1159 = vmatpush1.bf16.msra.mxu0 %v1139
        %1160 = vmatprep.subr.bf16.mxu0 0
        %1161 = vmatpush1.bf16.msra.mxu0 %v1140
        %1162 = vmatprep.subr.bf16.mxu0 0
        %1163 = vmatpush1.bf16.msra.mxu0 %v1141
        %1164 = vmatprep.subr.bf16.mxu0 0
        %1165 = vmatpush1.bf16.msra.mxu0 %v1142
        %1166 = vmatprep.subr.bf16.mxu0 0
        %1167 = vmatpush1.bf16.msra.mxu0 %v1143
        %1168 = vmatprep.subr.bf16.mxu0 0
        %1169 = vmatpush1.bf16.msra.mxu0 0
        %1170 = vmatprep.subr.bf16.mxu0 0
        %1171 = vmatpush1.bf16.msra.mxu0 0
        %1172 = vmatprep.subr.bf16.mxu0 0
        %1173 = vmatpush1.bf16.msra.mxu0 0
        %1174 = vmatprep.subr.bf16.mxu0 0
        %1175 = vmatpush1.bf16.msra.mxu0 0
        %1176 = vmatprep.subr.bf16.mxu0 0
        %1177 = vmatpush1.bf16.msra.mxu0 0
        %1178 = vmatprep.subr.bf16.mxu0 0
        %1179 = vmatpush1.bf16.msra.mxu0 0
        %1180 = vmatprep.subr.bf16.mxu0 0
        %1181 = vmatpush1.bf16.msra.mxu0 0
        %1182 = vmatprep.subr.bf16.mxu0 0
        %1183 = vmatpush1.bf16.msra.mxu0 0
        %1184 = vmatprep.mubr.bf16.mxu0 0
        %1185 = vmatmul.mubr.bf16.gmra.mrb[0].mxu0 %v1080
        %v1186 = vpop.f32.mrb[0].mxu0
        %v1187 = vadd.f32 %v1102, %v1186
        %v1188 = vpop.f32.mrb[0].mxu0
        %v1189 = vpop.f32.mrb[0].mxu0
        %v1190 = vpop.f32.mrb[0].mxu0
        %1191 = vdwg.mxu0
        %1193 = vrot.lane.b32.xlu0 %v1187, 40
        %v1194 = vpop.permute.xlu0 %1193
        %vm1196 = vcmask 386368
        %1197 = vst.msk [vmem:[#allocation2] sm:$0x3] %vm1196, %v1194
        %v1198 = vld [vmem:[%s3] sm:$0x3]
        %v1199 = vpack.c.bf16 %v1198, %v1198
        %v1200 = vld [vmem:[%s8] sm:$0xf]
        %v1201 = vld [vmem:[%s8 + $0x4] sm:$0xf]
        %v1202 = vld [vmem:[%s8 + $0x8] sm:$0xf]
        %v1203 = vld [vmem:[%s8 + $0xc] sm:$0xf]
        %v1204 = vld [vmem:[%s13] sm:$0x1]
        %v1206 = vlaneseq
        %v1207 = vshrl.u32 %v1206, 7
        %v1208 = vsub.s32 0, %v1207
        %v1209 = vrot.slane %v1204, %v1208
        %v1215 = vunpack.c.l.b16 %v1200
        %v1216 = vunpack.c.l.b16 %v1201
        %v1217 = vunpack.c.l.b16 %v1202
        %v1218 = vunpack.c.l.b16 %v1203
        %v1219 = vpack.c.b16 %v1216, %v1215
        %v1220 = vpack.c.b16 %v1218, %v1217
        %vm1223 = vcmask 261120
        %v1225 = vsel %vm1223, %v1199, 0
        %1227 = vmatprep.subr.bf16.mxu0 0
        %1228 = vmatpush1.bf16.msra.mxu0 %v1219
        %1229 = vmatprep.subr.bf16.mxu0 0
        %1230 = vmatpush1.bf16.msra.mxu0 %v1220
        %1231 = vmatprep.subr.bf16.mxu0 0
        %1232 = vmatpush1.bf16.msra.mxu0 0
        %1233 = vmatprep.subr.bf16.mxu0 0
        %1234 = vmatpush1.bf16.msra.mxu0 0
        %1235 = vmatprep.subr.bf16.mxu0 0
        %1236 = vmatpush1.bf16.msra.mxu0 0
        %1237 = vmatprep.subr.bf16.mxu0 0
        %1238 = vmatpush1.bf16.msra.mxu0 0
        %1239 = vmatprep.subr.bf16.mxu0 0
        %1240 = vmatpush1.bf16.msra.mxu0 0
        %1241 = vmatprep.subr.bf16.mxu0 0
        %1242 = vmatpush1.bf16.msra.mxu0 0
        %1243 = vmatprep.subr.bf16.mxu0 0
        %1244 = vmatpush1.bf16.msra.mxu0 0
        %1245 = vmatprep.subr.bf16.mxu0 0
        %1246 = vmatpush1.bf16.msra.mxu0 0
        %1247 = vmatprep.subr.bf16.mxu0 0
        %1248 = vmatpush1.bf16.msra.mxu0 0
        %1249 = vmatprep.subr.bf16.mxu0 0
        %1250 = vmatpush1.bf16.msra.mxu0 0
        %1251 = vmatprep.subr.bf16.mxu0 0
        %1252 = vmatpush1.bf16.msra.mxu0 0
        %1253 = vmatprep.subr.bf16.mxu0 0
        %1254 = vmatpush1.bf16.msra.mxu0 0
        %1255 = vmatprep.subr.bf16.mxu0 0
        %1256 = vmatpush1.bf16.msra.mxu0 0
        %1257 = vmatprep.subr.bf16.mxu0 0
        %1258 = vmatpush1.bf16.msra.mxu0 0
        %1259 = vmatprep.mubr.bf16.mxu0 0
        %1260 = vmatmul.mubr.bf16.gmra.mrb[0].mxu0 %v1225
        %v1261 = vpop.f32.mrb[0].mxu0
        %v1262 = vadd.f32 %v1209, %v1261
        %v1263 = vpop.f32.mrb[0].mxu0
        %v1264 = vpop.f32.mrb[0].mxu0
        %v1265 = vpop.f32.mrb[0].mxu0
        %1266 = vdwg.mxu0
        %1268 = vrot.lane.b32.xlu0 %v1262, 48
        %v1269 = vpop.permute.xlu0 %1268
        %vm1271 = vcmask 451968
        %1272 = vst.msk [vmem:[#allocation2] sm:$0x3] %vm1271, %v1269
        %v1273 = vld [vmem:[%s4] sm:$0x3]
        %v1274 = vpack.c.bf16 %v1273, %v1273
        %v1275 = vld [vmem:[%s9] sm:$0xf]
        %v1276 = vld [vmem:[%s14] sm:$0x1]
        %v1278 = vlaneseq
        %v1279 = vshrl.u32 %v1278, 7
        %v1280 = vsub.s32 0, %v1279
        %v1281 = vrot.slane %v1276, %v1280
        %vm1283 = vcmask 64512
        %v1285 = vsel %vm1283, %v1274, 0
        %vm1287 = vcmask 1043456
        %v1289 = vsel %vm1287, %v1275, 0
        %1291 = vmatprep.subr.bf16.mxu0 0
        %1292 = vmatpush1.bf16.msra.mxu0 %v1289
        %1293 = vmatprep.subr.bf16.mxu0 0
        %1294 = vmatpush1.bf16.msra.mxu0 0
        %1295 = vmatprep.subr.bf16.mxu0 0
        %1296 = vmatpush1.bf16.msra.mxu0 0
        %1297 = vmatprep.subr.bf16.mxu0 0
        %1298 = vmatpush1.bf16.msra.mxu0 0
        %1299 = vmatprep.subr.bf16.mxu0 0
        %1300 = vmatpush1.bf16.msra.mxu0 0
        %1301 = vmatprep.subr.bf16.mxu0 0
        %1302 = vmatpush1.bf16.msra.mxu0 0
        %1303 = vmatprep.subr.bf16.mxu0 0
        %1304 = vmatpush1.bf16.msra.mxu0 0
        %1305 = vmatprep.subr.bf16.mxu0 0
        %1306 = vmatpush1.bf16.msra.mxu0 0
        %1307 = vmatprep.subr.bf16.mxu0 0
        %1308 = vmatpush1.bf16.msra.mxu0 0
        %1309 = vmatprep.subr.bf16.mxu0 0
        %1310 = vmatpush1.bf16.msra.mxu0 0
        %1311 = vmatprep.subr.bf16.mxu0 0
        %1312 = vmatpush1.bf16.msra.mxu0 0
        %1313 = vmatprep.subr.bf16.mxu0 0
        %1314 = vmatpush1.bf16.msra.mxu0 0
        %1315 = vmatprep.subr.bf16.mxu0 0
        %1316 = vmatpush1.bf16.msra.mxu0 0
        %1317 = vmatprep.subr.bf16.mxu0 0
        %1318 = vmatpush1.bf16.msra.mxu0 0
        %1319 = vmatprep.subr.bf16.mxu0 0
        %1320 = vmatpush1.bf16.msra.mxu0 0
        %1321 = vmatprep.subr.bf16.mxu0 0
        %1322 = vmatpush1.bf16.msra.mxu0 0
        %1323 = vmatprep.mubr.bf16.mxu0 0
        %1324 = vmatmul.mubr.bf16.gmra.mrb[0].mxu0 %v1285
        %v1325 = vpop.f32.mrb[0].mxu0
        %v1326 = vadd.f32 %v1281, %v1325
        %v1327 = vpop.f32.mrb[0].mxu0
        %v1328 = vpop.f32.mrb[0].mxu0
        %v1329 = vpop.f32.mrb[0].mxu0
        %1330 = vdwg.mxu0
        %1332 = vrot.lane.b32.xlu0 %v1326, 56
        %v1333 = vpop.permute.xlu0 %1332
        %vm1335 = vcmask 517568
        %1336 = vst.msk [vmem:[#allocation2] sm:$0x3] %vm1335, %v1333
        %v1337 = vld [vmem:[#allocation2] sm:$0x3]
        %v1338 = vld [vmem:[%s15] sm:$0x1]
        %v1340 = vlaneseq
        %v1341 = vshrl.u32 %v1340, 7
        %v1342 = vsub.s32 0, %v1341
        %v1343 = vrot.slane %v1338, %v1342
        %v1345 = vmul.f32 %v1337, %v1343
        %v1346 = vpack.c.bf16 %v1345, %v1345
        %v1347 = vld [vmem:[%s567] sm:$0xf]
        %v1348 = vld [vmem:[%s567 + $0x4] sm:$0xf]
        %v1349 = vld [vmem:[%s567 + $0x8] sm:$0xf]
        %v1350 = vld [vmem:[%s567 + $0xc] sm:$0xf]
        %v1351 = vld [vmem:[%s567 + $0x10] sm:$0xf]
        %v1352 = vld [vmem:[%s567 + $0x14] sm:$0xf]
        %v1353 = vld [vmem:[%s567 + $0x18] sm:$0xf]
        %v1354 = vld [vmem:[%s567 + $0x1c] sm:$0xf]
        %v1363 = vunpack.c.l.b16 %v1347
        %v1364 = vunpack.c.l.b16 %v1348
        %v1365 = vunpack.c.l.b16 %v1349
        %v1366 = vunpack.c.l.b16 %v1350
        %v1367 = vunpack.c.l.b16 %v1351
        %v1368 = vunpack.c.l.b16 %v1352
        %v1369 = vunpack.c.l.b16 %v1353
        %v1370 = vunpack.c.l.b16 %v1354
        %v1371 = vpack.c.b16 %v1364, %v1363
        %v1372 = vpack.c.b16 %v1366, %v1365
        %v1373 = vpack.c.b16 %v1368, %v1367
        %v1374 = vpack.c.b16 %v1370, %v1369
        %v1380 = vsel %vm657, %v1346, 0
        %1382 = vmatprep.subr.bf16.mxu0 0
        %1383 = vmatpush1.bf16.msra.mxu0 %v1371
        %1384 = vmatprep.subr.bf16.mxu0 0
        %1385 = vmatpush1.bf16.msra.mxu0 %v1372
        %1386 = vmatprep.subr.bf16.mxu0 0
        %1387 = vmatpush1.bf16.msra.mxu0 %v1373
        %1388 = vmatprep.subr.bf16.mxu0 0
        %1389 = vmatpush1.bf16.msra.mxu0 %v1374
        %1390 = vmatprep.subr.bf16.mxu0 0
        %1391 = vmatpush1.bf16.msra.mxu0 0
        %1392 = vmatprep.subr.bf16.mxu0 0
        %1393 = vmatpush1.bf16.msra.mxu0 0
        %1394 = vmatprep.subr.bf16.mxu0 0
        %1395 = vmatpush1.bf16.msra.mxu0 0
        %1396 = vmatprep.subr.bf16.mxu0 0
        %1397 = vmatpush1.bf16.msra.mxu0 0
        %1398 = vmatprep.subr.bf16.mxu0 0
        %1399 = vmatpush1.bf16.msra.mxu0 0
        %1400 = vmatprep.subr.bf16.mxu0 0
        %1401 = vmatpush1.bf16.msra.mxu0 0
        %1402 = vmatprep.subr.bf16.mxu0 0
        %1403 = vmatpush1.bf16.msra.mxu0 0
        %1404 = vmatprep.subr.bf16.mxu0 0
        %1405 = vmatpush1.bf16.msra.mxu0 0
        %1406 = vmatprep.subr.bf16.mxu0 0
        %1407 = vmatpush1.bf16.msra.mxu0 0
        %1408 = vmatprep.subr.bf16.mxu0 0
        %1409 = vmatpush1.bf16.msra.mxu0 0
        %1410 = vmatprep.subr.bf16.mxu0 0
        %1411 = vmatpush1.bf16.msra.mxu0 0
        %1412 = vmatprep.subr.bf16.mxu0 0
        %1413 = vmatpush1.bf16.msra.mxu0 0
        %1414 = vmatprep.mubr.bf16.mxu0 0
        %1415 = vmatmul.mubr.bf16.gmra.mrb[0].mxu0 %v1380
        %v1416 = vpop.f32.mrb[0].mxu0
        %v1417 = vadd.f32 0.0, %v1416
        %v1418 = vpop.f32.mrb[0].mxu0
        %v1419 = vpop.f32.mrb[0].mxu0
        %v1420 = vpop.f32.mrb[0].mxu0
        %1421 = vdwg.mxu0
        %1422 = vst [vmem:[%s615] sm:$0x3] %v1417
        %s1423 = sand.u32 %s401, 1
        %s1424 = scalar_lea.sflag [#allocation5], %s1423
        %s1425 = sand.u32 %s401, 1
        %s1426 = smul.addr %s1425, 2
        %s1427 = scalar_lea.vmem [#allocation4], %s1426
        // Predicated region
        $region130: #{forward.11} parent=124 // pred_check
          %p1428 = pneg %p411
        $region131: #{forward.11} parent=124 // pred_check_branch
          %1430 = sbr.rel (%p1428) target = $region133
        $region132: #{forward.11} parent=124 // pred_region
          %s1432 = ssub.s32 32, 32
          %1433 = vsyncadd %s1424, %s1432
          %s1434 = smul.addr %s31, 32
          %s1435 = scalar_lea.hbm %s17, %s1434
          %s1437 = sshll.u32 %s1427, 4
          %s1438 = int_to_ptr.vmem [resolvable:$true] %s1437
          %1440 = dma.vmem_to_hbm [thread:$0]  %s1438, 32, %s1435, %s1424
        $region133: #{forward.11} parent=124 // pred_fallthru
          _
      $region125: #{forward.11} parent=5 // pred_fallthru
        _
      %p1441 = scmp.le.s32.totalorder 2, %s26
      // Predicated region
      $region134: #{forward.11} parent=5 // pred_check
        %p1442 = pneg %p1441
      $region135: #{forward.11} parent=5 // pred_check_branch
        %1444 = sbr.rel (%p1442) target = $region137
      $region136: #{forward.11} parent=5 // pred_region
        %s1445 = ssub.s32 %s26, 2
        // Predicated region
        $region138: #{forward.11} parent=136 // pred_check
          %p1446 = pneg %p417
        $region139: #{forward.11} parent=136 // pred_check_branch
          %1448 = sbr.rel (%p1446) target = $region141
        $region140: #{forward.11} parent=136 // pred_region
          %s1449 = sand.u32 %s402, 1
          %s1450 = scalar_lea.sflag [#allocation5], %s1449
          %s1451 = sand.u32 %s402, 1
          %s1452 = smul.addr %s1451, 2
          %s1453 = scalar_lea.vmem [#allocation4], %s1452
          %1454 = dma.done %s1450, 32
        $region141: #{forward.11} parent=136 // pred_fallthru
          _
      $region137: #{forward.11} parent=5 // pred_fallthru
        _
    $region6: #{forward.11} parent=1 // loop_footer
      %s30 = sadd.s32 1, %s26
    $region7: #{forward.11} parent=1 // loop_footer_branch
      %25 = sbr.rel target = $region3
    $region8: #{forward.11} parent=1 // loop_exit
      _
    %1455 = vsyncpa [#allocation5], 1
    %s1456 = scalar_lea.sflag [#allocation5], 1
    %1457 = vsyncpa %s1456, 1

</llo_original>
